<compile_context>
chip_gen: v7x
topology: tpu7x:2x2x1
jax: 0.10.0
libtpu: 0.0.40
codegen_flags: <defaults>
</compile_context>

<pallas_src>
import functools

import jax
import jax.numpy as jnp
from jax.experimental import pallas as pl
from jax.experimental.pallas import tpu as pltpu


def _layer_norm(x, gamma, beta, eps=1e-5):
    # Two-pass variance (matches PyTorch LayerNorm; avoids E[x^2]-E[x]^2
    # cancellation on inputs with a large mean).
    m = jnp.mean(x, axis=-1, keepdims=True)
    c = x - m
    var = jnp.mean(c * c, axis=-1, keepdims=True)
    return c * jax.lax.rsqrt(var + eps) * gamma + beta


def cross_attn_kernel(q_ref, k_ref,
                      g1_ref, be1_ref,
                      wq_ref, bq_ref,
                      wkv_ref, bkv_ref,
                      wo_ref, bo_ref,
                      g2_ref, be2_ref,
                      w1_ref, b1_ref,
                      w2_ref, b2_ref,
                      o_ref,
                      *, num_heads, compute_dtype):
    Bt, Lq, D = q_ref.shape
    Lk = k_ref.shape[1]
    H = num_heads
    hd = D // H
    scale = 1.0 / float(hd) ** 0.5
    cd = jnp.dtype(compute_dtype)
    exact_recip = cd == jnp.dtype(jnp.float32)

    # Flatten the batch tile into one slab of rows for all dense matmuls.
    q = q_ref[...].astype(jnp.float32).reshape(Bt * Lq, D)      # (Mq, D)
    kx = k_ref[...].astype(jnp.float32).reshape(Bt * Lk, D)     # (Mk, D)

    # ---- q2 = norm1(q) ----------------------------------------------------
    q2 = _layer_norm(q, g1_ref[...], be1_ref[...])

    # ---- input projections (weights pre-transposed; K/V fused) ------------
    Q = jnp.dot(q2.astype(cd), wq_ref[...],
                preferred_element_type=jnp.float32) + bq_ref[...]
    Q = Q * scale                                               # PyTorch scales q
    KV = jnp.dot(kx.astype(cd), wkv_ref[...],
                 preferred_element_type=jnp.float32) + bkv_ref[...]
    K = KV[:, :D]                                               # (Mk, D)
    V = KV[:, D:]                                               # (Mk, D)

    Qb = Q.reshape(Bt, Lq, D)
    Kb = K.reshape(Bt, Lk, D)
    Vb = V.reshape(Bt, Lk, D)

    # ---- multi-head attention: per-head scores/softmax, then one full-K
    #      output projection over the lane-concatenated context. ------------
    ctx_heads = []
    for h in range(H):                                          # static unroll (H small)
        lo = h * hd
        Qh = Qb[:, :, lo:lo + hd].astype(cd)                    # (Bt, Lq, hd)
        Kh = Kb[:, :, lo:lo + hd].astype(cd)                    # (Bt, Lk, hd)
        Vh = Vb[:, :, lo:lo + hd].astype(cd)                    # (Bt, Lk, hd)

        s = jnp.einsum('bqd,bkd->bqk', Qh, Kh,
                       preferred_element_type=jnp.float32)      # (Bt, Lq, Lk)
        s = s - jnp.max(s, axis=-1, keepdims=True)
        e = jnp.exp(s)
        denom = jnp.sum(e, axis=-1, keepdims=True)
        if exact_recip:
            p = e / denom                                       # exact for f32 path
        else:
            p = e * pl.reciprocal(denom, approx=True)           # EUP slot

        ctx_heads.append(jnp.einsum('bqk,bkd->bqd', p.astype(cd), Vh,
                                    preferred_element_type=jnp.float32))

    ctx = jnp.concatenate(ctx_heads, axis=-1).reshape(Bt * Lq, D)
    attn_out = jnp.dot(ctx.astype(cd), wo_ref[...],
                       preferred_element_type=jnp.float32) + bo_ref[...]

    # ---- residual 1 (dropout1 is identity at p=0.0) ------------------------
    x = q + attn_out

    # ---- FFN branch ---------------------------------------------------------
    x2 = _layer_norm(x, g2_ref[...], be2_ref[...])
    h1 = jnp.dot(x2.astype(cd), w1_ref[...],
                 preferred_element_type=jnp.float32) + b1_ref[...]
    h1 = jnp.maximum(h1, 0.0)
    ff = jnp.dot(h1.astype(cd), w2_ref[...],
                 preferred_element_type=jnp.float32) + b2_ref[...]

    # ---- residual 2 (dropout2 is identity) ----------------------------------
    o_ref[...] = (x + ff).reshape(Bt, Lq, D).astype(o_ref.dtype)


def cross_attn_block(q, k, params, *, num_heads, block_b=None,
                     compute_dtype=jnp.bfloat16):
    B, Lq, D = q.shape
    _, Lk, _ = k.shape
    F = params["w1"].shape[0]
    f32 = jnp.float32
    cd = jnp.dtype(compute_dtype) if compute_dtype is not None else jnp.dtype(q.dtype)

    # Batch tile: aim for many rows per projection matmul, but keep the grid
    # extent >= 2 when B >= 2 so the parallel axis can shard across v7x's two
    # TensorCores.
    if block_b is None:
        block_b = min(B, max(1, 256 // max(Lq, 1)))
        if B >= 2:
            block_b = max(1, min(block_b, B // 2))
    block_b = max(1, min(block_b, B))
    while B % block_b:
        block_b -= 1

    # Pre-transpose (and down-cast) weights once, outside the kernel.
    wq_t = jnp.asarray(params["wq"].T, cd)                       # (D, D)
    wkv_t = jnp.concatenate([jnp.asarray(params["wk"].T, cd),
                             jnp.asarray(params["wv"].T, cd)], axis=1)  # (D, 2D)
    wo_t = jnp.asarray(params["wo"].T, cd)                       # (D, D)
    w1_t = jnp.asarray(params["w1"].T, cd)                       # (D, F)
    w2_t = jnp.asarray(params["w2"].T, cd)                       # (F, D)
    g1 = jnp.asarray(params["gamma1"], f32)
    be1 = jnp.asarray(params["beta1"], f32)
    g2 = jnp.asarray(params["gamma2"], f32)
    be2 = jnp.asarray(params["beta2"], f32)
    bq = jnp.asarray(params["bq"], f32)
    bkv = jnp.concatenate([jnp.asarray(params["bk"], f32),
                           jnp.asarray(params["bv"], f32)], axis=1)     # (1, 2D)
    bo = jnp.asarray(params["bo"], f32)
    b1 = jnp.asarray(params["b1"], f32)
    b2 = jnp.asarray(params["b2"], f32)

    args = (q, k, g1, be1, wq_t, bq, wkv_t, bkv, wo_t, bo,
            g2, be2, w1_t, b1, w2_t, b2)

    # Advisory cost estimate for XLA's scheduler.
    flops = 2 * B * (Lq * D * D + 2 * Lk * D * D + 2 * Lq * Lk * D
                     + Lq * D * D + 2 * Lq * D * F)
    transcendentals = B * num_heads * Lq * Lk + 4 * B * Lq
    bytes_accessed = ((2 * B * Lq * D + B * Lk * D) * q.dtype.itemsize
                      + (4 * D * D + 2 * D * F) * cd.itemsize
                      + (9 * D + 2 * F) * 4)
    cost = pl.CostEstimate(flops=flops, transcendentals=transcendentals,
                           bytes_accessed=bytes_accessed)

    kernel = functools.partial(cross_attn_kernel,
                               num_heads=num_heads, compute_dtype=cd)

    def build(single_buffer_weights):
        if single_buffer_weights:
            def rep(shape):
                # Resident weights/biases: constant index map, one VMEM copy.
                return pl.BlockSpec(shape, lambda b: (0,) * len(shape),
                                    pipeline_mode=pl.Buffered(1))
        else:
            def rep(shape):
                return pl.BlockSpec(shape, lambda b: (0,) * len(shape))

        in_specs = [
            pl.BlockSpec((block_b, Lq, D), lambda b: (b, 0, 0)),   # q
            pl.BlockSpec((block_b, Lk, D), lambda b: (b, 0, 0)),   # k
            rep((1, D)), rep((1, D)),                              # gamma1, beta1
            rep((D, D)), rep((1, D)),                              # Wq^T, bq
            rep((D, 2 * D)), rep((1, 2 * D)),                      # Wkv^T, bkv
            rep((D, D)), rep((1, D)),                              # Wo^T, bo
            rep((1, D)), rep((1, D)),                              # gamma2, beta2
            rep((D, F)), rep((1, F)),                              # W1^T, b1
            rep((F, D)), rep((1, D)),                              # W2^T, b2
        ]

        # VMEM budget from the actual footprint (weights * buffer count +
        # double-buffered activation tiles + live f32 intermediates), clamped
        # to [32 MiB, 48 MiB] (v7x per-TC VMEM is 64 MiB).
        wbuf = 1 if single_buffer_weights else 2
        weight_bytes = wbuf * ((4 * D * D + 2 * D * F) * cd.itemsize
                               + (9 * D + 2 * F) * 4)
        act_bytes = 2 * block_b * (2 * Lq + Lk) * D * q.dtype.itemsize
        inter_bytes = block_b * (Lq * (6 * D + F) + Lk * 4 * D) * 4
        vmem_limit = int(min(max(weight_bytes + act_bytes + inter_bytes
                                 + (8 << 20), 32 << 20), 48 << 20))

        return pl.pallas_call(
            kernel,
            out_shape=jax.ShapeDtypeStruct((B, Lq, D), q.dtype),
            grid_spec=pltpu.PrefetchScalarGridSpec(
                num_scalar_prefetch=0,
                grid=(B // block_b,),
                in_specs=in_specs,
                out_specs=pl.BlockSpec((block_b, Lq, D), lambda b: (b, 0, 0)),
            ),
            compiler_params=pltpu.CompilerParams(
                dimension_semantics=("parallel",),
                vmem_limit_bytes=vmem_limit),
            cost_estimate=cost,
        )

    try:
        return build(single_buffer_weights=True)(*args)
    except Exception:
        # TODO(synk): pl.Buffered(1) single-buffering rejected on this jax
        # build; fall back to default double-buffered weight specs.
        return build(single_buffer_weights=False)(*args)


def cross_attn_block_ref(q, k, params, *, num_heads):
    """Pure-JAX reference mirroring PyTorch semantics (for validation)."""
    D = q.shape[-1]
    hd = D // num_heads

    def ln(x, g, b):
        m = jnp.mean(x, axis=-1, keepdims=True)
        v = jnp.mean((x - m) ** 2, axis=-1, keepdims=True)
        return (x - m) / jnp.sqrt(v + 1e-5) * g + b

    q2 = ln(q, params["gamma1"], params["beta1"])
    Q = q2 @ params["wq"].T + params["bq"]
    K = k @ params["wk"].T + params["bk"]
    V = k @ params["wv"].T + params["bv"]
    B, Lq, _ = Q.shape
    Lk = K.shape[1]
    Qh = Q.reshape(B, Lq, num_heads, hd).transpose(0, 2, 1, 3)
    Kh = K.reshape(B, Lk, num_heads, hd).transpose(0, 2, 1, 3)
    Vh = V.reshape(B, Lk, num_heads, hd).transpose(0, 2, 1, 3)
    s = jnp.einsum("bhqd,bhkd->bhqk", Qh, Kh) / jnp.sqrt(hd)
    a = jax.nn.softmax(s, axis=-1)
    ctx = jnp.einsum("bhqk,bhkd->bhqd", a, Vh).transpose(0, 2, 1, 3).reshape(B, Lq, D)
    attn_out = ctx @ params["wo"].T + params["bo"]
    x = q + attn_out
    x2 = ln(x, params["gamma2"], params["beta2"])
    ff = jax.nn.relu(x2 @ params["w1"].T + params["b1"]) @ params["w2"].T + params["b2"]
    return x + ff


def make_params(key, d_model, dim_ffn):
    ks = jax.random.split(key, 8)
    s = 0.05
    return {
        "gamma1": jnp.ones((1, d_model), jnp.float32),
        "beta1": jnp.zeros((1, d_model), jnp.float32),
        "wq": s * jax.random.normal(ks[0], (d_model, d_model), jnp.float32),
        "wk": s * jax.random.normal(ks[1], (d_model, d_model), jnp.float32),
        "wv": s * jax.random.normal(ks[2], (d_model, d_model), jnp.float32),
        "bq": s * jax.random.normal(ks[3], (1, d_model), jnp.float32),
        "bk": jnp.zeros((1, d_model), jnp.float32),
        "bv": jnp.zeros((1, d_model), jnp.float32),
        "wo": s * jax.random.normal(ks[4], (d_model, d_model), jnp.float32),
        "bo": jnp.zeros((1, d_model), jnp.float32),
        "gamma2": jnp.ones((1, d_model), jnp.float32),
        "beta2": jnp.zeros((1, d_model), jnp.float32),
        "w1": s * jax.random.normal(ks[5], (dim_ffn, d_model), jnp.float32),
        "b1": s * jax.random.normal(ks[6], (1, dim_ffn), jnp.float32),
        "w2": s * jax.random.normal(ks[7], (d_model, dim_ffn), jnp.float32),
        "b2": jnp.zeros((1, d_model), jnp.float32),
    }


if __name__ == "__main__":
    # Small shapes consistent with the module: d_model divisible by num_heads.
    B, Lq, Lk = 2, 8, 16
    d_model, num_heads, dim_ffn = 128, 4, 128

    key = jax.random.PRNGKey(0)
    kq, kk, kp = jax.random.split(key, 3)
    q = jax.random.normal(kq, (B, Lq, d_model), jnp.float32)
    k = jax.random.normal(kk, (B, Lk, d_model), jnp.float32)
    params = make_params(kp, d_model, dim_ffn)

    ref = cross_attn_block_ref(q, k, params, num_heads=num_heads)

    # Default path: bf16 MXU operands, f32 accumulation and f32 VPU/EUP math.
    out = cross_attn_block(q, k, params, num_heads=num_heads)
    out = jax.block_until_ready(out)
    assert out.shape == (B, Lq, d_model)
    err = jnp.max(jnp.abs(out - ref))
    assert jnp.allclose(out, ref, atol=5e-2, rtol=5e-2), f"bf16 max abs err {err}"

    # Full-f32 path (exact softmax reciprocal): tight tolerance.
    out_f32 = cross_attn_block(q, k, params, num_heads=num_heads,
                               compute_dtype=jnp.float32)
    out_f32 = jax.block_until_ready(out_f32)
    err_f32 = jnp.max(jnp.abs(out_f32 - ref))
    assert jnp.allclose(out_f32, ref, atol=2e-3, rtol=2e-3), \
        f"f32 max abs err {err_f32}"

    print("KERNEL_OK")
</pallas_src>

<mosaic_0001>
module attributes {stable_mosaic.version = 11 : i64} {
  func.func @cross_attn_kernel(%arg0: i32, %arg1: memref<1x8x128xf32, #tpu.memory_space<vmem>>, %arg2: memref<1x16x128xf32, #tpu.memory_space<vmem>>, %arg3: memref<1x128xf32, #tpu.memory_space<vmem>>, %arg4: memref<1x128xf32, #tpu.memory_space<vmem>>, %arg5: memref<128x128xbf16, #tpu.memory_space<vmem>>, %arg6: memref<1x128xf32, #tpu.memory_space<vmem>>, %arg7: memref<128x256xbf16, #tpu.memory_space<vmem>>, %arg8: memref<1x256xf32, #tpu.memory_space<vmem>>, %arg9: memref<128x128xbf16, #tpu.memory_space<vmem>>, %arg10: memref<1x128xf32, #tpu.memory_space<vmem>>, %arg11: memref<1x128xf32, #tpu.memory_space<vmem>>, %arg12: memref<1x128xf32, #tpu.memory_space<vmem>>, %arg13: memref<128x128xbf16, #tpu.memory_space<vmem>>, %arg14: memref<1x128xf32, #tpu.memory_space<vmem>>, %arg15: memref<128x128xbf16, #tpu.memory_space<vmem>>, %arg16: memref<1x128xf32, #tpu.memory_space<vmem>>, %arg17: memref<1x8x128xf32, #tpu.memory_space<vmem>>) attributes {dimension_semantics = [#tpu.dimension_semantics<parallel>], iteration_bounds = array<i64: 2>, scalar_prefetch = 0 : i64, scratch_operands = 0 : i64, tpu.core_type = #tpu.core_type<tc>, window_params = [{transform_indices = @transform_0, window_bounds = array<i64: 1, 8, 128>}, {transform_indices = @transform_1, window_bounds = array<i64: 1, 16, 128>}, {pipeline_mode = #tpu.pipeline_mode<synchronous>, transform_indices = @transform_2, window_bounds = array<i64: 1, 128>}, {pipeline_mode = #tpu.pipeline_mode<synchronous>, transform_indices = @transform_3, window_bounds = array<i64: 1, 128>}, {pipeline_mode = #tpu.pipeline_mode<synchronous>, transform_indices = @transform_4, window_bounds = array<i64: 128, 128>}, {pipeline_mode = #tpu.pipeline_mode<synchronous>, transform_indices = @transform_5, window_bounds = array<i64: 1, 128>}, {pipeline_mode = #tpu.pipeline_mode<synchronous>, transform_indices = @transform_6, window_bounds = array<i64: 128, 256>}, {pipeline_mode = #tpu.pipeline_mode<synchronous>, transform_indices = @transform_7, window_bounds = array<i64: 1, 256>}, {pipeline_mode = #tpu.pipeline_mode<synchronous>, transform_indices = @transform_8, window_bounds = array<i64: 128, 128>}, {pipeline_mode = #tpu.pipeline_mode<synchronous>, transform_indices = @transform_9, window_bounds = array<i64: 1, 128>}, {pipeline_mode = #tpu.pipeline_mode<synchronous>, transform_indices = @transform_10, window_bounds = array<i64: 1, 128>}, {pipeline_mode = #tpu.pipeline_mode<synchronous>, transform_indices = @transform_11, window_bounds = array<i64: 1, 128>}, {pipeline_mode = #tpu.pipeline_mode<synchronous>, transform_indices = @transform_12, window_bounds = array<i64: 128, 128>}, {pipeline_mode = #tpu.pipeline_mode<synchronous>, transform_indices = @transform_13, window_bounds = array<i64: 1, 128>}, {pipeline_mode = #tpu.pipeline_mode<synchronous>, transform_indices = @transform_14, window_bounds = array<i64: 128, 128>}, {pipeline_mode = #tpu.pipeline_mode<synchronous>, transform_indices = @transform_15, window_bounds = array<i64: 1, 128>}, {transform_indices = @transform_16, window_bounds = array<i64: 1, 8, 128>}]} {
    %c0 = arith.constant 0 : index
    %c0_0 = arith.constant 0 : index
    %c0_1 = arith.constant 0 : index
    %0 = vector.load %arg1[%c0, %c0_0, %c0_1] : memref<1x8x128xf32, #tpu.memory_space<vmem>>, vector<1x8x128xf32>
    %1 = vector.shape_cast %0 : vector<1x8x128xf32> to vector<8x128xf32>
    %c0_2 = arith.constant 0 : index
    %c0_3 = arith.constant 0 : index
    %c0_4 = arith.constant 0 : index
    %2 = vector.load %arg2[%c0_2, %c0_3, %c0_4] : memref<1x16x128xf32, #tpu.memory_space<vmem>>, vector<1x16x128xf32>
    %3 = vector.shape_cast %2 : vector<1x16x128xf32> to vector<16x128xf32>
    %c0_5 = arith.constant 0 : index
    %c0_6 = arith.constant 0 : index
    %4 = vector.load %arg3[%c0_5, %c0_6] : memref<1x128xf32, #tpu.memory_space<vmem>>, vector<1x128xf32>
    %c0_7 = arith.constant 0 : index
    %c0_8 = arith.constant 0 : index
    %5 = vector.load %arg4[%c0_7, %c0_8] : memref<1x128xf32, #tpu.memory_space<vmem>>, vector<1x128xf32>
    %cst = arith.constant dense<0.000000e+00> : vector<8xf32>
    %6 = vector.multi_reduction <add>, %1, %cst [1] : vector<8x128xf32> to vector<8xf32>
    %7 = vector.shape_cast %6 : vector<8xf32> to vector<8x1xf32>
    %cst_9 = arith.constant 1.280000e+02 : f32
    %8 = vector.broadcast %cst_9 : f32 to vector<8x1xf32>
    %9 = arith.divf %7, %8 : vector<8x1xf32>
    %10 = vector.broadcast %9 : vector<8x1xf32> to vector<8x128xf32>
    %11 = arith.subf %1, %10 : vector<8x128xf32>
    %12 = arith.mulf %11, %11 : vector<8x128xf32>
    %cst_10 = arith.constant dense<0.000000e+00> : vector<8xf32>
    %13 = vector.multi_reduction <add>, %12, %cst_10 [1] : vector<8x128xf32> to vector<8xf32>
    %14 = vector.shape_cast %13 : vector<8xf32> to vector<8x1xf32>
    %cst_11 = arith.constant 1.280000e+02 : f32
    %15 = vector.broadcast %cst_11 : f32 to vector<8x1xf32>
    %16 = arith.divf %14, %15 : vector<8x1xf32>
    %cst_12 = arith.constant 9.99999974E-6 : f32
    %17 = vector.broadcast %cst_12 : f32 to vector<8x1xf32>
    %18 = arith.addf %16, %17 : vector<8x1xf32>
    %19 = math.rsqrt %18 : vector<8x1xf32>
    %20 = vector.broadcast %19 : vector<8x1xf32> to vector<8x128xf32>
    %21 = arith.mulf %11, %20 : vector<8x128xf32>
    %22 = vector.broadcast %4 : vector<1x128xf32> to vector<8x128xf32>
    %23 = arith.mulf %21, %22 : vector<8x128xf32>
    %24 = vector.broadcast %5 : vector<1x128xf32> to vector<8x128xf32>
    %25 = arith.addf %23, %24 : vector<8x128xf32>
    %26 = arith.truncf %25 : vector<8x128xf32> to vector<8x128xbf16>
    %c0_13 = arith.constant 0 : index
    %c0_14 = arith.constant 0 : index
    %27 = vector.load %arg5[%c0_13, %c0_14] : memref<128x128xbf16, #tpu.memory_space<vmem>>, vector<128x128xbf16>
    %cst_15 = arith.constant dense<0.000000e+00> : vector<8x128xf32>
    %28 = tpu.matmul %26, %27, %cst_15 {dimension_numbers = #tpu.dot_dimension_numbers<[1], [0], [0], [1], [0, 0, 1, 1], [], []>} : vector<8x128xbf16>, vector<128x128xbf16>, vector<8x128xf32> -> vector<8x128xf32>
    %c0_16 = arith.constant 0 : index
    %c0_17 = arith.constant 0 : index
    %29 = vector.load %arg6[%c0_16, %c0_17] : memref<1x128xf32, #tpu.memory_space<vmem>>, vector<1x128xf32>
    %30 = vector.broadcast %29 : vector<1x128xf32> to vector<8x128xf32>
    %31 = arith.addf %28, %30 : vector<8x128xf32>
    %cst_18 = arith.constant 0.176776692 : f32
    %32 = vector.broadcast %cst_18 : f32 to vector<8x128xf32>
    %33 = arith.mulf %31, %32 : vector<8x128xf32>
    %34 = arith.truncf %3 : vector<16x128xf32> to vector<16x128xbf16>
    %c0_19 = arith.constant 0 : index
    %c0_20 = arith.constant 0 : index
    %35 = vector.load %arg7[%c0_19, %c0_20] : memref<128x256xbf16, #tpu.memory_space<vmem>>, vector<128x256xbf16>
    %cst_21 = arith.constant dense<0.000000e+00> : vector<16x256xf32>
    %36 = tpu.matmul %34, %35, %cst_21 {dimension_numbers = #tpu.dot_dimension_numbers<[1], [0], [0], [1], [0, 0, 1, 1], [], []>} : vector<16x128xbf16>, vector<128x256xbf16>, vector<16x256xf32> -> vector<16x256xf32>
    %c0_22 = arith.constant 0 : index
    %c0_23 = arith.constant 0 : index
    %37 = vector.load %arg8[%c0_22, %c0_23] : memref<1x256xf32, #tpu.memory_space<vmem>>, vector<1x256xf32>
    %38 = vector.broadcast %37 : vector<1x256xf32> to vector<16x256xf32>
    %39 = arith.addf %36, %38 : vector<16x256xf32>
    %40 = vector.extract_strided_slice %39 {offsets = [0, 0], sizes = [16, 128], strides = [1, 1]} : vector<16x256xf32> to vector<16x128xf32>
    %41 = vector.extract_strided_slice %39 {offsets = [0, 128], sizes = [16, 128], strides = [1, 1]} : vector<16x256xf32> to vector<16x128xf32>
    %42 = vector.shape_cast %33 : vector<8x128xf32> to vector<1x8x128xf32>
    %43 = vector.shape_cast %40 : vector<16x128xf32> to vector<1x16x128xf32>
    %44 = vector.shape_cast %41 : vector<16x128xf32> to vector<1x16x128xf32>
    %45 = vector.extract_strided_slice %42 {offsets = [0, 0, 0], sizes = [1, 8, 32], strides = [1, 1, 1]} : vector<1x8x128xf32> to vector<1x8x32xf32>
    %46 = arith.truncf %45 : vector<1x8x32xf32> to vector<1x8x32xbf16>
    %47 = vector.extract_strided_slice %43 {offsets = [0, 0, 0], sizes = [1, 16, 32], strides = [1, 1, 1]} : vector<1x16x128xf32> to vector<1x16x32xf32>
    %48 = arith.truncf %47 : vector<1x16x32xf32> to vector<1x16x32xbf16>
    %49 = vector.extract_strided_slice %44 {offsets = [0, 0, 0], sizes = [1, 16, 32], strides = [1, 1, 1]} : vector<1x16x128xf32> to vector<1x16x32xf32>
    %50 = arith.truncf %49 : vector<1x16x32xf32> to vector<1x16x32xbf16>
    "tpu.trace_start"() <{level = 10 : i32, message = "bqd,bkd->bqk"}> : () -> ()
    %cst_24 = arith.constant dense<0.000000e+00> : vector<1x8x16xf32>
    %51 = tpu.matmul %46, %48, %cst_24 {dimension_numbers = #tpu.dot_dimension_numbers<[2], [2], [1], [1], [0, 0, 0, 1, 1, 1], [0], [0]>} : vector<1x8x32xbf16>, vector<1x16x32xbf16>, vector<1x8x16xf32> -> vector<1x8x16xf32>
    "tpu.trace_stop"() : () -> ()
    %cst_25 = arith.constant dense<0xFF800000> : vector<1x8xf32>
    %52 = vector.multi_reduction <maximumf>, %51, %cst_25 [2] : vector<1x8x16xf32> to vector<1x8xf32>
    %53 = vector.shape_cast %52 : vector<1x8xf32> to vector<1x8x1xf32>
    %54 = vector.broadcast %53 : vector<1x8x1xf32> to vector<1x8x16xf32>
    %55 = arith.subf %51, %54 : vector<1x8x16xf32>
    %56 = math.exp %55 : vector<1x8x16xf32>
    %cst_26 = arith.constant dense<0.000000e+00> : vector<1x8xf32>
    %57 = vector.multi_reduction <add>, %56, %cst_26 [2] : vector<1x8x16xf32> to vector<1x8xf32>
    %58 = vector.shape_cast %57 : vector<1x8xf32> to vector<1x8x1xf32>
    %59 = tpu.reciprocal %58 {approx = true} : vector<1x8x1xf32> -> vector<1x8x1xf32>
    %60 = vector.broadcast %59 : vector<1x8x1xf32> to vector<1x8x16xf32>
    %61 = arith.mulf %56, %60 : vector<1x8x16xf32>
    %62 = arith.truncf %61 : vector<1x8x16xf32> to vector<1x8x16xbf16>
    "tpu.trace_start"() <{level = 10 : i32, message = "bqk,bkd->bqd"}> : () -> ()
    %cst_27 = arith.constant dense<0.000000e+00> : vector<1x8x32xf32>
    %63 = tpu.matmul %62, %50, %cst_27 {dimension_numbers = #tpu.dot_dimension_numbers<[2], [1], [1], [2], [0, 0, 0, 1, 1, 2], [0], [0]>} : vector<1x8x16xbf16>, vector<1x16x32xbf16>, vector<1x8x32xf32> -> vector<1x8x32xf32>
    "tpu.trace_stop"() : () -> ()
    %64 = vector.extract_strided_slice %42 {offsets = [0, 0, 32], sizes = [1, 8, 32], strides = [1, 1, 1]} : vector<1x8x128xf32> to vector<1x8x32xf32>
    %65 = arith.truncf %64 : vector<1x8x32xf32> to vector<1x8x32xbf16>
    %66 = vector.extract_strided_slice %43 {offsets = [0, 0, 32], sizes = [1, 16, 32], strides = [1, 1, 1]} : vector<1x16x128xf32> to vector<1x16x32xf32>
    %67 = arith.truncf %66 : vector<1x16x32xf32> to vector<1x16x32xbf16>
    %68 = vector.extract_strided_slice %44 {offsets = [0, 0, 32], sizes = [1, 16, 32], strides = [1, 1, 1]} : vector<1x16x128xf32> to vector<1x16x32xf32>
    %69 = arith.truncf %68 : vector<1x16x32xf32> to vector<1x16x32xbf16>
    "tpu.trace_start"() <{level = 10 : i32, message = "bqd,bkd->bqk"}> : () -> ()
    %cst_28 = arith.constant dense<0.000000e+00> : vector<1x8x16xf32>
    %70 = tpu.matmul %65, %67, %cst_28 {dimension_numbers = #tpu.dot_dimension_numbers<[2], [2], [1], [1], [0, 0, 0, 1, 1, 1], [0], [0]>} : vector<1x8x32xbf16>, vector<1x16x32xbf16>, vector<1x8x16xf32> -> vector<1x8x16xf32>
    "tpu.trace_stop"() : () -> ()
    %cst_29 = arith.constant dense<0xFF800000> : vector<1x8xf32>
    %71 = vector.multi_reduction <maximumf>, %70, %cst_29 [2] : vector<1x8x16xf32> to vector<1x8xf32>
    %72 = vector.shape_cast %71 : vector<1x8xf32> to vector<1x8x1xf32>
    %73 = vector.broadcast %72 : vector<1x8x1xf32> to vector<1x8x16xf32>
    %74 = arith.subf %70, %73 : vector<1x8x16xf32>
    %75 = math.exp %74 : vector<1x8x16xf32>
    %cst_30 = arith.constant dense<0.000000e+00> : vector<1x8xf32>
    %76 = vector.multi_reduction <add>, %75, %cst_30 [2] : vector<1x8x16xf32> to vector<1x8xf32>
    %77 = vector.shape_cast %76 : vector<1x8xf32> to vector<1x8x1xf32>
    %78 = tpu.reciprocal %77 {approx = true} : vector<1x8x1xf32> -> vector<1x8x1xf32>
    %79 = vector.broadcast %78 : vector<1x8x1xf32> to vector<1x8x16xf32>
    %80 = arith.mulf %75, %79 : vector<1x8x16xf32>
    %81 = arith.truncf %80 : vector<1x8x16xf32> to vector<1x8x16xbf16>
    "tpu.trace_start"() <{level = 10 : i32, message = "bqk,bkd->bqd"}> : () -> ()
    %cst_31 = arith.constant dense<0.000000e+00> : vector<1x8x32xf32>
    %82 = tpu.matmul %81, %69, %cst_31 {dimension_numbers = #tpu.dot_dimension_numbers<[2], [1], [1], [2], [0, 0, 0, 1, 1, 2], [0], [0]>} : vector<1x8x16xbf16>, vector<1x16x32xbf16>, vector<1x8x32xf32> -> vector<1x8x32xf32>
    "tpu.trace_stop"() : () -> ()
    %83 = vector.extract_strided_slice %42 {offsets = [0, 0, 64], sizes = [1, 8, 32], strides = [1, 1, 1]} : vector<1x8x128xf32> to vector<1x8x32xf32>
    %84 = arith.truncf %83 : vector<1x8x32xf32> to vector<1x8x32xbf16>
    %85 = vector.extract_strided_slice %43 {offsets = [0, 0, 64], sizes = [1, 16, 32], strides = [1, 1, 1]} : vector<1x16x128xf32> to vector<1x16x32xf32>
    %86 = arith.truncf %85 : vector<1x16x32xf32> to vector<1x16x32xbf16>
    %87 = vector.extract_strided_slice %44 {offsets = [0, 0, 64], sizes = [1, 16, 32], strides = [1, 1, 1]} : vector<1x16x128xf32> to vector<1x16x32xf32>
    %88 = arith.truncf %87 : vector<1x16x32xf32> to vector<1x16x32xbf16>
    "tpu.trace_start"() <{level = 10 : i32, message = "bqd,bkd->bqk"}> : () -> ()
    %cst_32 = arith.constant dense<0.000000e+00> : vector<1x8x16xf32>
    %89 = tpu.matmul %84, %86, %cst_32 {dimension_numbers = #tpu.dot_dimension_numbers<[2], [2], [1], [1], [0, 0, 0, 1, 1, 1], [0], [0]>} : vector<1x8x32xbf16>, vector<1x16x32xbf16>, vector<1x8x16xf32> -> vector<1x8x16xf32>
    "tpu.trace_stop"() : () -> ()
    %cst_33 = arith.constant dense<0xFF800000> : vector<1x8xf32>
    %90 = vector.multi_reduction <maximumf>, %89, %cst_33 [2] : vector<1x8x16xf32> to vector<1x8xf32>
    %91 = vector.shape_cast %90 : vector<1x8xf32> to vector<1x8x1xf32>
    %92 = vector.broadcast %91 : vector<1x8x1xf32> to vector<1x8x16xf32>
    %93 = arith.subf %89, %92 : vector<1x8x16xf32>
    %94 = math.exp %93 : vector<1x8x16xf32>
    %cst_34 = arith.constant dense<0.000000e+00> : vector<1x8xf32>
    %95 = vector.multi_reduction <add>, %94, %cst_34 [2] : vector<1x8x16xf32> to vector<1x8xf32>
    %96 = vector.shape_cast %95 : vector<1x8xf32> to vector<1x8x1xf32>
    %97 = tpu.reciprocal %96 {approx = true} : vector<1x8x1xf32> -> vector<1x8x1xf32>
    %98 = vector.broadcast %97 : vector<1x8x1xf32> to vector<1x8x16xf32>
    %99 = arith.mulf %94, %98 : vector<1x8x16xf32>
    %100 = arith.truncf %99 : vector<1x8x16xf32> to vector<1x8x16xbf16>
    "tpu.trace_start"() <{level = 10 : i32, message = "bqk,bkd->bqd"}> : () -> ()
    %cst_35 = arith.constant dense<0.000000e+00> : vector<1x8x32xf32>
    %101 = tpu.matmul %100, %88, %cst_35 {dimension_numbers = #tpu.dot_dimension_numbers<[2], [1], [1], [2], [0, 0, 0, 1, 1, 2], [0], [0]>} : vector<1x8x16xbf16>, vector<1x16x32xbf16>, vector<1x8x32xf32> -> vector<1x8x32xf32>
    "tpu.trace_stop"() : () -> ()
    %102 = vector.extract_strided_slice %42 {offsets = [0, 0, 96], sizes = [1, 8, 32], strides = [1, 1, 1]} : vector<1x8x128xf32> to vector<1x8x32xf32>
    %103 = arith.truncf %102 : vector<1x8x32xf32> to vector<1x8x32xbf16>
    %104 = vector.extract_strided_slice %43 {offsets = [0, 0, 96], sizes = [1, 16, 32], strides = [1, 1, 1]} : vector<1x16x128xf32> to vector<1x16x32xf32>
    %105 = arith.truncf %104 : vector<1x16x32xf32> to vector<1x16x32xbf16>
    %106 = vector.extract_strided_slice %44 {offsets = [0, 0, 96], sizes = [1, 16, 32], strides = [1, 1, 1]} : vector<1x16x128xf32> to vector<1x16x32xf32>
    %107 = arith.truncf %106 : vector<1x16x32xf32> to vector<1x16x32xbf16>
    "tpu.trace_start"() <{level = 10 : i32, message = "bqd,bkd->bqk"}> : () -> ()
    %cst_36 = arith.constant dense<0.000000e+00> : vector<1x8x16xf32>
    %108 = tpu.matmul %103, %105, %cst_36 {dimension_numbers = #tpu.dot_dimension_numbers<[2], [2], [1], [1], [0, 0, 0, 1, 1, 1], [0], [0]>} : vector<1x8x32xbf16>, vector<1x16x32xbf16>, vector<1x8x16xf32> -> vector<1x8x16xf32>
    "tpu.trace_stop"() : () -> ()
    %cst_37 = arith.constant dense<0xFF800000> : vector<1x8xf32>
    %109 = vector.multi_reduction <maximumf>, %108, %cst_37 [2] : vector<1x8x16xf32> to vector<1x8xf32>
    %110 = vector.shape_cast %109 : vector<1x8xf32> to vector<1x8x1xf32>
    %111 = vector.broadcast %110 : vector<1x8x1xf32> to vector<1x8x16xf32>
    %112 = arith.subf %108, %111 : vector<1x8x16xf32>
    %113 = math.exp %112 : vector<1x8x16xf32>
    %cst_38 = arith.constant dense<0.000000e+00> : vector<1x8xf32>
    %114 = vector.multi_reduction <add>, %113, %cst_38 [2] : vector<1x8x16xf32> to vector<1x8xf32>
    %115 = vector.shape_cast %114 : vector<1x8xf32> to vector<1x8x1xf32>
    %116 = tpu.reciprocal %115 {approx = true} : vector<1x8x1xf32> -> vector<1x8x1xf32>
    %117 = vector.broadcast %116 : vector<1x8x1xf32> to vector<1x8x16xf32>
    %118 = arith.mulf %113, %117 : vector<1x8x16xf32>
    %119 = arith.truncf %118 : vector<1x8x16xf32> to vector<1x8x16xbf16>
    "tpu.trace_start"() <{level = 10 : i32, message = "bqk,bkd->bqd"}> : () -> ()
    %cst_39 = arith.constant dense<0.000000e+00> : vector<1x8x32xf32>
    %120 = tpu.matmul %119, %107, %cst_39 {dimension_numbers = #tpu.dot_dimension_numbers<[2], [1], [1], [2], [0, 0, 0, 1, 1, 2], [0], [0]>} : vector<1x8x16xbf16>, vector<1x16x32xbf16>, vector<1x8x32xf32> -> vector<1x8x32xf32>
    "tpu.trace_stop"() : () -> ()
    %121 = tpu.concatenate %63, %82, %101, %120 in 2 : vector<1x8x32xf32>, vector<1x8x32xf32>, vector<1x8x32xf32>, vector<1x8x32xf32> -> vector<1x8x128xf32>
    %122 = vector.shape_cast %121 : vector<1x8x128xf32> to vector<8x128xf32>
    %123 = arith.truncf %122 : vector<8x128xf32> to vector<8x128xbf16>
    %c0_40 = arith.constant 0 : index
    %c0_41 = arith.constant 0 : index
    %124 = vector.load %arg9[%c0_40, %c0_41] : memref<128x128xbf16, #tpu.memory_space<vmem>>, vector<128x128xbf16>
    %cst_42 = arith.constant dense<0.000000e+00> : vector<8x128xf32>
    %125 = tpu.matmul %123, %124, %cst_42 {dimension_numbers = #tpu.dot_dimension_numbers<[1], [0], [0], [1], [0, 0, 1, 1], [], []>} : vector<8x128xbf16>, vector<128x128xbf16>, vector<8x128xf32> -> vector<8x128xf32>
    %c0_43 = arith.constant 0 : index
    %c0_44 = arith.constant 0 : index
    %126 = vector.load %arg10[%c0_43, %c0_44] : memref<1x128xf32, #tpu.memory_space<vmem>>, vector<1x128xf32>
    %127 = vector.broadcast %126 : vector<1x128xf32> to vector<8x128xf32>
    %128 = arith.addf %125, %127 : vector<8x128xf32>
    %129 = arith.addf %1, %128 : vector<8x128xf32>
    %c0_45 = arith.constant 0 : index
    %c0_46 = arith.constant 0 : index
    %130 = vector.load %arg11[%c0_45, %c0_46] : memref<1x128xf32, #tpu.memory_space<vmem>>, vector<1x128xf32>
    %c0_47 = arith.constant 0 : index
    %c0_48 = arith.constant 0 : index
    %131 = vector.load %arg12[%c0_47, %c0_48] : memref<1x128xf32, #tpu.memory_space<vmem>>, vector<1x128xf32>
    %cst_49 = arith.constant dense<0.000000e+00> : vector<8xf32>
    %132 = vector.multi_reduction <add>, %129, %cst_49 [1] : vector<8x128xf32> to vector<8xf32>
    %133 = vector.shape_cast %132 : vector<8xf32> to vector<8x1xf32>
    %cst_50 = arith.constant 1.280000e+02 : f32
    %134 = vector.broadcast %cst_50 : f32 to vector<8x1xf32>
    %135 = arith.divf %133, %134 : vector<8x1xf32>
    %136 = vector.broadcast %135 : vector<8x1xf32> to vector<8x128xf32>
    %137 = arith.subf %129, %136 : vector<8x128xf32>
    %138 = arith.mulf %137, %137 : vector<8x128xf32>
    %cst_51 = arith.constant dense<0.000000e+00> : vector<8xf32>
    %139 = vector.multi_reduction <add>, %138, %cst_51 [1] : vector<8x128xf32> to vector<8xf32>
    %140 = vector.shape_cast %139 : vector<8xf32> to vector<8x1xf32>
    %cst_52 = arith.constant 1.280000e+02 : f32
    %141 = vector.broadcast %cst_52 : f32 to vector<8x1xf32>
    %142 = arith.divf %140, %141 : vector<8x1xf32>
    %cst_53 = arith.constant 9.99999974E-6 : f32
    %143 = vector.broadcast %cst_53 : f32 to vector<8x1xf32>
    %144 = arith.addf %142, %143 : vector<8x1xf32>
    %145 = math.rsqrt %144 : vector<8x1xf32>
    %146 = vector.broadcast %145 : vector<8x1xf32> to vector<8x128xf32>
    %147 = arith.mulf %137, %146 : vector<8x128xf32>
    %148 = vector.broadcast %130 : vector<1x128xf32> to vector<8x128xf32>
    %149 = arith.mulf %147, %148 : vector<8x128xf32>
    %150 = vector.broadcast %131 : vector<1x128xf32> to vector<8x128xf32>
    %151 = arith.addf %149, %150 : vector<8x128xf32>
    %152 = arith.truncf %151 : vector<8x128xf32> to vector<8x128xbf16>
    %c0_54 = arith.constant 0 : index
    %c0_55 = arith.constant 0 : index
    %153 = vector.load %arg13[%c0_54, %c0_55] : memref<128x128xbf16, #tpu.memory_space<vmem>>, vector<128x128xbf16>
    %cst_56 = arith.constant dense<0.000000e+00> : vector<8x128xf32>
    %154 = tpu.matmul %152, %153, %cst_56 {dimension_numbers = #tpu.dot_dimension_numbers<[1], [0], [0], [1], [0, 0, 1, 1], [], []>} : vector<8x128xbf16>, vector<128x128xbf16>, vector<8x128xf32> -> vector<8x128xf32>
    %c0_57 = arith.constant 0 : index
    %c0_58 = arith.constant 0 : index
    %155 = vector.load %arg14[%c0_57, %c0_58] : memref<1x128xf32, #tpu.memory_space<vmem>>, vector<1x128xf32>
    %156 = vector.broadcast %155 : vector<1x128xf32> to vector<8x128xf32>
    %157 = arith.addf %154, %156 : vector<8x128xf32>
    %cst_59 = arith.constant 0.000000e+00 : f32
    %158 = vector.broadcast %cst_59 : f32 to vector<8x128xf32>
    %159 = arith.maximumf %157, %158 : vector<8x128xf32>
    %160 = arith.truncf %159 : vector<8x128xf32> to vector<8x128xbf16>
    %c0_60 = arith.constant 0 : index
    %c0_61 = arith.constant 0 : index
    %161 = vector.load %arg15[%c0_60, %c0_61] : memref<128x128xbf16, #tpu.memory_space<vmem>>, vector<128x128xbf16>
    %cst_62 = arith.constant dense<0.000000e+00> : vector<8x128xf32>
    %162 = tpu.matmul %160, %161, %cst_62 {dimension_numbers = #tpu.dot_dimension_numbers<[1], [0], [0], [1], [0, 0, 1, 1], [], []>} : vector<8x128xbf16>, vector<128x128xbf16>, vector<8x128xf32> -> vector<8x128xf32>
    %c0_63 = arith.constant 0 : index
    %c0_64 = arith.constant 0 : index
    %163 = vector.load %arg16[%c0_63, %c0_64] : memref<1x128xf32, #tpu.memory_space<vmem>>, vector<1x128xf32>
    %164 = vector.broadcast %163 : vector<1x128xf32> to vector<8x128xf32>
    %165 = arith.addf %162, %164 : vector<8x128xf32>
    %166 = arith.addf %129, %165 : vector<8x128xf32>
    %167 = vector.shape_cast %166 : vector<8x128xf32> to vector<1x8x128xf32>
    %c0_65 = arith.constant 0 : index
    %c0_66 = arith.constant 0 : index
    %c0_67 = arith.constant 0 : index
    %168 = vector.load %arg17[%c0_65, %c0_66, %c0_67] : memref<1x8x128xf32, #tpu.memory_space<vmem>>, vector<1x8x128xf32>
    tpu.vector_store %arg17[%c0_65, %c0_66, %c0_67], %167 {strides = array<i32>} : memref<1x8x128xf32, #tpu.memory_space<vmem>>, vector<1x8x128xf32>,
    return
  }
  func.func @transform_0(%arg0: i32) -> (i32, i32, i32) {
    %c0_i32 = arith.constant 0 : i32
    %c0_i32_0 = arith.constant 0 : i32
    %c0_i32_1 = arith.constant 0 : i32
    return %arg0, %c0_i32, %c0_i32_0 : i32, i32, i32
  }
  func.func @transform_1(%arg0: i32) -> (i32, i32, i32) {
    %c0_i32 = arith.constant 0 : i32
    %c0_i32_0 = arith.constant 0 : i32
    %c0_i32_1 = arith.constant 0 : i32
    return %arg0, %c0_i32, %c0_i32_0 : i32, i32, i32
  }
  func.func @transform_2(%arg0: i32) -> (i32, i32) {
    %c0_i32 = arith.constant 0 : i32
    %c0_i32_0 = arith.constant 0 : i32
    %c0_i32_1 = arith.constant 0 : i32
    return %c0_i32, %c0_i32_0 : i32, i32
  }
  func.func @transform_3(%arg0: i32) -> (i32, i32) {
    %c0_i32 = arith.constant 0 : i32
    %c0_i32_0 = arith.constant 0 : i32
    %c0_i32_1 = arith.constant 0 : i32
    return %c0_i32, %c0_i32_0 : i32, i32
  }
  func.func @transform_4(%arg0: i32) -> (i32, i32) {
    %c0_i32 = arith.constant 0 : i32
    %c0_i32_0 = arith.constant 0 : i32
    %c0_i32_1 = arith.constant 0 : i32
    return %c0_i32, %c0_i32_0 : i32, i32
  }
  func.func @transform_5(%arg0: i32) -> (i32, i32) {
    %c0_i32 = arith.constant 0 : i32
    %c0_i32_0 = arith.constant 0 : i32
    %c0_i32_1 = arith.constant 0 : i32
    return %c0_i32, %c0_i32_0 : i32, i32
  }
  func.func @transform_6(%arg0: i32) -> (i32, i32) {
    %c0_i32 = arith.constant 0 : i32
    %c0_i32_0 = arith.constant 0 : i32
    %c0_i32_1 = arith.constant 0 : i32
    return %c0_i32, %c0_i32_0 : i32, i32
  }
  func.func @transform_7(%arg0: i32) -> (i32, i32) {
    %c0_i32 = arith.constant 0 : i32
    %c0_i32_0 = arith.constant 0 : i32
    %c0_i32_1 = arith.constant 0 : i32
    return %c0_i32, %c0_i32_0 : i32, i32
  }
  func.func @transform_8(%arg0: i32) -> (i32, i32) {
    %c0_i32 = arith.constant 0 : i32
    %c0_i32_0 = arith.constant 0 : i32
    %c0_i32_1 = arith.constant 0 : i32
    return %c0_i32, %c0_i32_0 : i32, i32
  }
  func.func @transform_9(%arg0: i32) -> (i32, i32) {
    %c0_i32 = arith.constant 0 : i32
    %c0_i32_0 = arith.constant 0 : i32
    %c0_i32_1 = arith.constant 0 : i32
    return %c0_i32, %c0_i32_0 : i32, i32
  }
  func.func @transform_10(%arg0: i32) -> (i32, i32) {
    %c0_i32 = arith.constant 0 : i32
    %c0_i32_0 = arith.constant 0 : i32
    %c0_i32_1 = arith.constant 0 : i32
    return %c0_i32, %c0_i32_0 : i32, i32
  }
  func.func @transform_11(%arg0: i32) -> (i32, i32) {
    %c0_i32 = arith.constant 0 : i32
    %c0_i32_0 = arith.constant 0 : i32
    %c0_i32_1 = arith.constant 0 : i32
    return %c0_i32, %c0_i32_0 : i32, i32
  }
  func.func @transform_12(%arg0: i32) -> (i32, i32) {
    %c0_i32 = arith.constant 0 : i32
    %c0_i32_0 = arith.constant 0 : i32
    %c0_i32_1 = arith.constant 0 : i32
    return %c0_i32, %c0_i32_0 : i32, i32
  }
  func.func @transform_13(%arg0: i32) -> (i32, i32) {
    %c0_i32 = arith.constant 0 : i32
    %c0_i32_0 = arith.constant 0 : i32
    %c0_i32_1 = arith.constant 0 : i32
    return %c0_i32, %c0_i32_0 : i32, i32
  }
  func.func @transform_14(%arg0: i32) -> (i32, i32) {
    %c0_i32 = arith.constant 0 : i32
    %c0_i32_0 = arith.constant 0 : i32
    %c0_i32_1 = arith.constant 0 : i32
    return %c0_i32, %c0_i32_0 : i32, i32
  }
  func.func @transform_15(%arg0: i32) -> (i32, i32) {
    %c0_i32 = arith.constant 0 : i32
    %c0_i32_0 = arith.constant 0 : i32
    %c0_i32_1 = arith.constant 0 : i32
    return %c0_i32, %c0_i32_0 : i32, i32
  }
  func.func @transform_16(%arg0: i32) -> (i32, i32, i32) {
    %c0_i32 = arith.constant 0 : i32
    %c0_i32_0 = arith.constant 0 : i32
    %c0_i32_1 = arith.constant 0 : i32
    return %arg0, %c0_i32, %c0_i32_0 : i32, i32, i32
  }
}

module attributes {stable_mosaic.version = 11 : i64} {
  func.func @cross_attn_kernel(%arg0: i32, %arg1: memref<1x8x128xf32, #tpu.memory_space<vmem>>, %arg2: memref<1x16x128xf32, #tpu.memory_space<vmem>>, %arg3: memref<1x128xf32, #tpu.memory_space<vmem>>, %arg4: memref<1x128xf32, #tpu.memory_space<vmem>>, %arg5: memref<128x128xbf16, #tpu.memory_space<vmem>>, %arg6: memref<1x128xf32, #tpu.memory_space<vmem>>, %arg7: memref<128x256xbf16, #tpu.memory_space<vmem>>, %arg8: memref<1x256xf32, #tpu.memory_space<vmem>>, %arg9: memref<128x128xbf16, #tpu.memory_space<vmem>>, %arg10: memref<1x128xf32, #tpu.memory_space<vmem>>, %arg11: memref<1x128xf32, #tpu.memory_space<vmem>>, %arg12: memref<1x128xf32, #tpu.memory_space<vmem>>, %arg13: memref<128x128xbf16, #tpu.memory_space<vmem>>, %arg14: memref<1x128xf32, #tpu.memory_space<vmem>>, %arg15: memref<128x128xbf16, #tpu.memory_space<vmem>>, %arg16: memref<1x128xf32, #tpu.memory_space<vmem>>, %arg17: memref<1x8x128xf32, #tpu.memory_space<vmem>>) attributes {dimension_semantics = [#tpu.dimension_semantics<parallel>], iteration_bounds = array<i64: 2>, scalar_prefetch = 0 : i64, scratch_operands = 0 : i64, tpu.core_type = #tpu.core_type<tc>, window_params = [{transform_indices = @transform_0, window_bounds = array<i64: 1, 8, 128>}, {transform_indices = @transform_1, window_bounds = array<i64: 1, 16, 128>}, {pipeline_mode = #tpu.pipeline_mode<synchronous>, transform_indices = @transform_2, window_bounds = array<i64: 1, 128>}, {pipeline_mode = #tpu.pipeline_mode<synchronous>, transform_indices = @transform_3, window_bounds = array<i64: 1, 128>}, {pipeline_mode = #tpu.pipeline_mode<synchronous>, transform_indices = @transform_4, window_bounds = array<i64: 128, 128>}, {pipeline_mode = #tpu.pipeline_mode<synchronous>, transform_indices = @transform_5, window_bounds = array<i64: 1, 128>}, {pipeline_mode = #tpu.pipeline_mode<synchronous>, transform_indices = @transform_6, window_bounds = array<i64: 128, 256>}, {pipeline_mode = #tpu.pipeline_mode<synchronous>, transform_indices = @transform_7, window_bounds = array<i64: 1, 256>}, {pipeline_mode = #tpu.pipeline_mode<synchronous>, transform_indices = @transform_8, window_bounds = array<i64: 128, 128>}, {pipeline_mode = #tpu.pipeline_mode<synchronous>, transform_indices = @transform_9, window_bounds = array<i64: 1, 128>}, {pipeline_mode = #tpu.pipeline_mode<synchronous>, transform_indices = @transform_10, window_bounds = array<i64: 1, 128>}, {pipeline_mode = #tpu.pipeline_mode<synchronous>, transform_indices = @transform_11, window_bounds = array<i64: 1, 128>}, {pipeline_mode = #tpu.pipeline_mode<synchronous>, transform_indices = @transform_12, window_bounds = array<i64: 128, 128>}, {pipeline_mode = #tpu.pipeline_mode<synchronous>, transform_indices = @transform_13, window_bounds = array<i64: 1, 128>}, {pipeline_mode = #tpu.pipeline_mode<synchronous>, transform_indices = @transform_14, window_bounds = array<i64: 128, 128>}, {pipeline_mode = #tpu.pipeline_mode<synchronous>, transform_indices = @transform_15, window_bounds = array<i64: 1, 128>}, {transform_indices = @transform_16, window_bounds = array<i64: 1, 8, 128>}]} {
    %c0 = arith.constant 0 : index
    %c0_0 = arith.constant 0 : index
    %c0_1 = arith.constant 0 : index
    %0 = vector.load %arg1[%c0, %c0_0, %c0_1] : memref<1x8x128xf32, #tpu.memory_space<vmem>>, vector<1x8x128xf32>
    %1 = vector.shape_cast %0 : vector<1x8x128xf32> to vector<8x128xf32>
    %c0_2 = arith.constant 0 : index
    %c0_3 = arith.constant 0 : index
    %c0_4 = arith.constant 0 : index
    %2 = vector.load %arg2[%c0_2, %c0_3, %c0_4] : memref<1x16x128xf32, #tpu.memory_space<vmem>>, vector<1x16x128xf32>
    %3 = vector.shape_cast %2 : vector<1x16x128xf32> to vector<16x128xf32>
    %c0_5 = arith.constant 0 : index
    %c0_6 = arith.constant 0 : index
    %4 = vector.load %arg3[%c0_5, %c0_6] : memref<1x128xf32, #tpu.memory_space<vmem>>, vector<1x128xf32>
    %c0_7 = arith.constant 0 : index
    %c0_8 = arith.constant 0 : index
    %5 = vector.load %arg4[%c0_7, %c0_8] : memref<1x128xf32, #tpu.memory_space<vmem>>, vector<1x128xf32>
    %cst = arith.constant dense<0.000000e+00> : vector<8xf32>
    %6 = vector.multi_reduction <add>, %1, %cst [1] : vector<8x128xf32> to vector<8xf32>
    %7 = vector.shape_cast %6 : vector<8xf32> to vector<8x1xf32>
    %cst_9 = arith.constant 1.280000e+02 : f32
    %8 = vector.broadcast %cst_9 : f32 to vector<8x1xf32>
    %9 = arith.divf %7, %8 : vector<8x1xf32>
    %10 = vector.broadcast %9 : vector<8x1xf32> to vector<8x128xf32>
    %11 = arith.subf %1, %10 : vector<8x128xf32>
    %12 = arith.mulf %11, %11 : vector<8x128xf32>
    %cst_10 = arith.constant dense<0.000000e+00> : vector<8xf32>
    %13 = vector.multi_reduction <add>, %12, %cst_10 [1] : vector<8x128xf32> to vector<8xf32>
    %14 = vector.shape_cast %13 : vector<8xf32> to vector<8x1xf32>
    %cst_11 = arith.constant 1.280000e+02 : f32
    %15 = vector.broadcast %cst_11 : f32 to vector<8x1xf32>
    %16 = arith.divf %14, %15 : vector<8x1xf32>
    %cst_12 = arith.constant 9.99999974E-6 : f32
    %17 = vector.broadcast %cst_12 : f32 to vector<8x1xf32>
    %18 = arith.addf %16, %17 : vector<8x1xf32>
    %19 = math.rsqrt %18 : vector<8x1xf32>
    %20 = vector.broadcast %19 : vector<8x1xf32> to vector<8x128xf32>
    %21 = arith.mulf %11, %20 : vector<8x128xf32>
    %22 = vector.broadcast %4 : vector<1x128xf32> to vector<8x128xf32>
    %23 = arith.mulf %21, %22 : vector<8x128xf32>
    %24 = vector.broadcast %5 : vector<1x128xf32> to vector<8x128xf32>
    %25 = arith.addf %23, %24 : vector<8x128xf32>
    %26 = arith.truncf %25 : vector<8x128xf32> to vector<8x128xbf16>
    %c0_13 = arith.constant 0 : index
    %c0_14 = arith.constant 0 : index
    %27 = vector.load %arg5[%c0_13, %c0_14] : memref<128x128xbf16, #tpu.memory_space<vmem>>, vector<128x128xbf16>
    %cst_15 = arith.constant dense<0.000000e+00> : vector<8x128xf32>
    %28 = tpu.matmul %26, %27, %cst_15 {dimension_numbers = #tpu.dot_dimension_numbers<[1], [0], [0], [1], [0, 0, 1, 1], [], []>} : vector<8x128xbf16>, vector<128x128xbf16>, vector<8x128xf32> -> vector<8x128xf32>
    %c0_16 = arith.constant 0 : index
    %c0_17 = arith.constant 0 : index
    %29 = vector.load %arg6[%c0_16, %c0_17] : memref<1x128xf32, #tpu.memory_space<vmem>>, vector<1x128xf32>
    %30 = vector.broadcast %29 : vector<1x128xf32> to vector<8x128xf32>
    %31 = arith.addf %28, %30 : vector<8x128xf32>
    %cst_18 = arith.constant 0.176776692 : f32
    %32 = vector.broadcast %cst_18 : f32 to vector<8x128xf32>
    %33 = arith.mulf %31, %32 : vector<8x128xf32>
    %34 = arith.truncf %3 : vector<16x128xf32> to vector<16x128xbf16>
    %c0_19 = arith.constant 0 : index
    %c0_20 = arith.constant 0 : index
    %35 = vector.load %arg7[%c0_19, %c0_20] : memref<128x256xbf16, #tpu.memory_space<vmem>>, vector<128x256xbf16>
    %cst_21 = arith.constant dense<0.000000e+00> : vector<16x256xf32>
    %36 = tpu.matmul %34, %35, %cst_21 {dimension_numbers = #tpu.dot_dimension_numbers<[1], [0], [0], [1], [0, 0, 1, 1], [], []>} : vector<16x128xbf16>, vector<128x256xbf16>, vector<16x256xf32> -> vector<16x256xf32>
    %c0_22 = arith.constant 0 : index
    %c0_23 = arith.constant 0 : index
    %37 = vector.load %arg8[%c0_22, %c0_23] : memref<1x256xf32, #tpu.memory_space<vmem>>, vector<1x256xf32>
    %38 = vector.broadcast %37 : vector<1x256xf32> to vector<16x256xf32>
    %39 = arith.addf %36, %38 : vector<16x256xf32>
    %40 = vector.extract_strided_slice %39 {offsets = [0, 0], sizes = [16, 128], strides = [1, 1]} : vector<16x256xf32> to vector<16x128xf32>
    %41 = vector.extract_strided_slice %39 {offsets = [0, 128], sizes = [16, 128], strides = [1, 1]} : vector<16x256xf32> to vector<16x128xf32>
    %42 = vector.shape_cast %33 : vector<8x128xf32> to vector<1x8x128xf32>
    %43 = vector.shape_cast %40 : vector<16x128xf32> to vector<1x16x128xf32>
    %44 = vector.shape_cast %41 : vector<16x128xf32> to vector<1x16x128xf32>
    %45 = vector.extract_strided_slice %42 {offsets = [0, 0, 0], sizes = [1, 8, 32], strides = [1, 1, 1]} : vector<1x8x128xf32> to vector<1x8x32xf32>
    %46 = arith.truncf %45 : vector<1x8x32xf32> to vector<1x8x32xbf16>
    %47 = vector.extract_strided_slice %43 {offsets = [0, 0, 0], sizes = [1, 16, 32], strides = [1, 1, 1]} : vector<1x16x128xf32> to vector<1x16x32xf32>
    %48 = arith.truncf %47 : vector<1x16x32xf32> to vector<1x16x32xbf16>
    %49 = vector.extract_strided_slice %44 {offsets = [0, 0, 0], sizes = [1, 16, 32], strides = [1, 1, 1]} : vector<1x16x128xf32> to vector<1x16x32xf32>
    %50 = arith.truncf %49 : vector<1x16x32xf32> to vector<1x16x32xbf16>
    "tpu.trace_start"() <{level = 10 : i32, message = "bqd,bkd->bqk"}> : () -> ()
    %cst_24 = arith.constant dense<0.000000e+00> : vector<1x8x16xf32>
    %51 = tpu.matmul %46, %48, %cst_24 {dimension_numbers = #tpu.dot_dimension_numbers<[2], [2], [1], [1], [0, 0, 0, 1, 1, 1], [0], [0]>} : vector<1x8x32xbf16>, vector<1x16x32xbf16>, vector<1x8x16xf32> -> vector<1x8x16xf32>
    "tpu.trace_stop"() : () -> ()
    %cst_25 = arith.constant dense<0xFF800000> : vector<1x8xf32>
    %52 = vector.multi_reduction <maximumf>, %51, %cst_25 [2] : vector<1x8x16xf32> to vector<1x8xf32>
    %53 = vector.shape_cast %52 : vector<1x8xf32> to vector<1x8x1xf32>
    %54 = vector.broadcast %53 : vector<1x8x1xf32> to vector<1x8x16xf32>
    %55 = arith.subf %51, %54 : vector<1x8x16xf32>
    %56 = math.exp %55 : vector<1x8x16xf32>
    %cst_26 = arith.constant dense<0.000000e+00> : vector<1x8xf32>
    %57 = vector.multi_reduction <add>, %56, %cst_26 [2] : vector<1x8x16xf32> to vector<1x8xf32>
    %58 = vector.shape_cast %57 : vector<1x8xf32> to vector<1x8x1xf32>
    %59 = tpu.reciprocal %58 {approx = true} : vector<1x8x1xf32> -> vector<1x8x1xf32>
    %60 = vector.broadcast %59 : vector<1x8x1xf32> to vector<1x8x16xf32>
    %61 = arith.mulf %56, %60 : vector<1x8x16xf32>
    %62 = arith.truncf %61 : vector<1x8x16xf32> to vector<1x8x16xbf16>
    "tpu.trace_start"() <{level = 10 : i32, message = "bqk,bkd->bqd"}> : () -> ()
    %cst_27 = arith.constant dense<0.000000e+00> : vector<1x8x32xf32>
    %63 = tpu.matmul %62, %50, %cst_27 {dimension_numbers = #tpu.dot_dimension_numbers<[2], [1], [1], [2], [0, 0, 0, 1, 1, 2], [0], [0]>} : vector<1x8x16xbf16>, vector<1x16x32xbf16>, vector<1x8x32xf32> -> vector<1x8x32xf32>
    "tpu.trace_stop"() : () -> ()
    %64 = vector.extract_strided_slice %42 {offsets = [0, 0, 32], sizes = [1, 8, 32], strides = [1, 1, 1]} : vector<1x8x128xf32> to vector<1x8x32xf32>
    %65 = arith.truncf %64 : vector<1x8x32xf32> to vector<1x8x32xbf16>
    %66 = vector.extract_strided_slice %43 {offsets = [0, 0, 32], sizes = [1, 16, 32], strides = [1, 1, 1]} : vector<1x16x128xf32> to vector<1x16x32xf32>
    %67 = arith.truncf %66 : vector<1x16x32xf32> to vector<1x16x32xbf16>
    %68 = vector.extract_strided_slice %44 {offsets = [0, 0, 32], sizes = [1, 16, 32], strides = [1, 1, 1]} : vector<1x16x128xf32> to vector<1x16x32xf32>
    %69 = arith.truncf %68 : vector<1x16x32xf32> to vector<1x16x32xbf16>
    "tpu.trace_start"() <{level = 10 : i32, message = "bqd,bkd->bqk"}> : () -> ()
    %cst_28 = arith.constant dense<0.000000e+00> : vector<1x8x16xf32>
    %70 = tpu.matmul %65, %67, %cst_28 {dimension_numbers = #tpu.dot_dimension_numbers<[2], [2], [1], [1], [0, 0, 0, 1, 1, 1], [0], [0]>} : vector<1x8x32xbf16>, vector<1x16x32xbf16>, vector<1x8x16xf32> -> vector<1x8x16xf32>
    "tpu.trace_stop"() : () -> ()
    %cst_29 = arith.constant dense<0xFF800000> : vector<1x8xf32>
    %71 = vector.multi_reduction <maximumf>, %70, %cst_29 [2] : vector<1x8x16xf32> to vector<1x8xf32>
    %72 = vector.shape_cast %71 : vector<1x8xf32> to vector<1x8x1xf32>
    %73 = vector.broadcast %72 : vector<1x8x1xf32> to vector<1x8x16xf32>
    %74 = arith.subf %70, %73 : vector<1x8x16xf32>
    %75 = math.exp %74 : vector<1x8x16xf32>
    %cst_30 = arith.constant dense<0.000000e+00> : vector<1x8xf32>
    %76 = vector.multi_reduction <add>, %75, %cst_30 [2] : vector<1x8x16xf32> to vector<1x8xf32>
    %77 = vector.shape_cast %76 : vector<1x8xf32> to vector<1x8x1xf32>
    %78 = tpu.reciprocal %77 {approx = true} : vector<1x8x1xf32> -> vector<1x8x1xf32>
    %79 = vector.broadcast %78 : vector<1x8x1xf32> to vector<1x8x16xf32>
    %80 = arith.mulf %75, %79 : vector<1x8x16xf32>
    %81 = arith.truncf %80 : vector<1x8x16xf32> to vector<1x8x16xbf16>
    "tpu.trace_start"() <{level = 10 : i32, message = "bqk,bkd->bqd"}> : () -> ()
    %cst_31 = arith.constant dense<0.000000e+00> : vector<1x8x32xf32>
    %82 = tpu.matmul %81, %69, %cst_31 {dimension_numbers = #tpu.dot_dimension_numbers<[2], [1], [1], [2], [0, 0, 0, 1, 1, 2], [0], [0]>} : vector<1x8x16xbf16>, vector<1x16x32xbf16>, vector<1x8x32xf32> -> vector<1x8x32xf32>
    "tpu.trace_stop"() : () -> ()
    %83 = vector.extract_strided_slice %42 {offsets = [0, 0, 64], sizes = [1, 8, 32], strides = [1, 1, 1]} : vector<1x8x128xf32> to vector<1x8x32xf32>
    %84 = arith.truncf %83 : vector<1x8x32xf32> to vector<1x8x32xbf16>
    %85 = vector.extract_strided_slice %43 {offsets = [0, 0, 64], sizes = [1, 16, 32], strides = [1, 1, 1]} : vector<1x16x128xf32> to vector<1x16x32xf32>
    %86 = arith.truncf %85 : vector<1x16x32xf32> to vector<1x16x32xbf16>
    %87 = vector.extract_strided_slice %44 {offsets = [0, 0, 64], sizes = [1, 16, 32], strides = [1, 1, 1]} : vector<1x16x128xf32> to vector<1x16x32xf32>
    %88 = arith.truncf %87 : vector<1x16x32xf32> to vector<1x16x32xbf16>
    "tpu.trace_start"() <{level = 10 : i32, message = "bqd,bkd->bqk"}> : () -> ()
    %cst_32 = arith.constant dense<0.000000e+00> : vector<1x8x16xf32>
    %89 = tpu.matmul %84, %86, %cst_32 {dimension_numbers = #tpu.dot_dimension_numbers<[2], [2], [1], [1], [0, 0, 0, 1, 1, 1], [0], [0]>} : vector<1x8x32xbf16>, vector<1x16x32xbf16>, vector<1x8x16xf32> -> vector<1x8x16xf32>
    "tpu.trace_stop"() : () -> ()
    %cst_33 = arith.constant dense<0xFF800000> : vector<1x8xf32>
    %90 = vector.multi_reduction <maximumf>, %89, %cst_33 [2] : vector<1x8x16xf32> to vector<1x8xf32>
    %91 = vector.shape_cast %90 : vector<1x8xf32> to vector<1x8x1xf32>
    %92 = vector.broadcast %91 : vector<1x8x1xf32> to vector<1x8x16xf32>
    %93 = arith.subf %89, %92 : vector<1x8x16xf32>
    %94 = math.exp %93 : vector<1x8x16xf32>
    %cst_34 = arith.constant dense<0.000000e+00> : vector<1x8xf32>
    %95 = vector.multi_reduction <add>, %94, %cst_34 [2] : vector<1x8x16xf32> to vector<1x8xf32>
    %96 = vector.shape_cast %95 : vector<1x8xf32> to vector<1x8x1xf32>
    %97 = tpu.reciprocal %96 {approx = true} : vector<1x8x1xf32> -> vector<1x8x1xf32>
    %98 = vector.broadcast %97 : vector<1x8x1xf32> to vector<1x8x16xf32>
    %99 = arith.mulf %94, %98 : vector<1x8x16xf32>
    %100 = arith.truncf %99 : vector<1x8x16xf32> to vector<1x8x16xbf16>
    "tpu.trace_start"() <{level = 10 : i32, message = "bqk,bkd->bqd"}> : () -> ()
    %cst_35 = arith.constant dense<0.000000e+00> : vector<1x8x32xf32>
    %101 = tpu.matmul %100, %88, %cst_35 {dimension_numbers = #tpu.dot_dimension_numbers<[2], [1], [1], [2], [0, 0, 0, 1, 1, 2], [0], [0]>} : vector<1x8x16xbf16>, vector<1x16x32xbf16>, vector<1x8x32xf32> -> vector<1x8x32xf32>
    "tpu.trace_stop"() : () -> ()
    %102 = vector.extract_strided_slice %42 {offsets = [0, 0, 96], sizes = [1, 8, 32], strides = [1, 1, 1]} : vector<1x8x128xf32> to vector<1x8x32xf32>
    %103 = arith.truncf %102 : vector<1x8x32xf32> to vector<1x8x32xbf16>
    %104 = vector.extract_strided_slice %43 {offsets = [0, 0, 96], sizes = [1, 16, 32], strides = [1, 1, 1]} : vector<1x16x128xf32> to vector<1x16x32xf32>
    %105 = arith.truncf %104 : vector<1x16x32xf32> to vector<1x16x32xbf16>
    %106 = vector.extract_strided_slice %44 {offsets = [0, 0, 96], sizes = [1, 16, 32], strides = [1, 1, 1]} : vector<1x16x128xf32> to vector<1x16x32xf32>
    %107 = arith.truncf %106 : vector<1x16x32xf32> to vector<1x16x32xbf16>
    "tpu.trace_start"() <{level = 10 : i32, message = "bqd,bkd->bqk"}> : () -> ()
    %cst_36 = arith.constant dense<0.000000e+00> : vector<1x8x16xf32>
    %108 = tpu.matmul %103, %105, %cst_36 {dimension_numbers = #tpu.dot_dimension_numbers<[2], [2], [1], [1], [0, 0, 0, 1, 1, 1], [0], [0]>} : vector<1x8x32xbf16>, vector<1x16x32xbf16>, vector<1x8x16xf32> -> vector<1x8x16xf32>
    "tpu.trace_stop"() : () -> ()
    %cst_37 = arith.constant dense<0xFF800000> : vector<1x8xf32>
    %109 = vector.multi_reduction <maximumf>, %108, %cst_37 [2] : vector<1x8x16xf32> to vector<1x8xf32>
    %110 = vector.shape_cast %109 : vector<1x8xf32> to vector<1x8x1xf32>
    %111 = vector.broadcast %110 : vector<1x8x1xf32> to vector<1x8x16xf32>
    %112 = arith.subf %108, %111 : vector<1x8x16xf32>
    %113 = math.exp %112 : vector<1x8x16xf32>
    %cst_38 = arith.constant dense<0.000000e+00> : vector<1x8xf32>
    %114 = vector.multi_reduction <add>, %113, %cst_38 [2] : vector<1x8x16xf32> to vector<1x8xf32>
    %115 = vector.shape_cast %114 : vector<1x8xf32> to vector<1x8x1xf32>
    %116 = tpu.reciprocal %115 {approx = true} : vector<1x8x1xf32> -> vector<1x8x1xf32>
    %117 = vector.broadcast %116 : vector<1x8x1xf32> to vector<1x8x16xf32>
    %118 = arith.mulf %113, %117 : vector<1x8x16xf32>
    %119 = arith.truncf %118 : vector<1x8x16xf32> to vector<1x8x16xbf16>
    "tpu.trace_start"() <{level = 10 : i32, message = "bqk,bkd->bqd"}> : () -> ()
    %cst_39 = arith.constant dense<0.000000e+00> : vector<1x8x32xf32>
    %120 = tpu.matmul %119, %107, %cst_39 {dimension_numbers = #tpu.dot_dimension_numbers<[2], [1], [1], [2], [0, 0, 0, 1, 1, 2], [0], [0]>} : vector<1x8x16xbf16>, vector<1x16x32xbf16>, vector<1x8x32xf32> -> vector<1x8x32xf32>
    "tpu.trace_stop"() : () -> ()
    %121 = tpu.concatenate %63, %82, %101, %120 in 2 : vector<1x8x32xf32>, vector<1x8x32xf32>, vector<1x8x32xf32>, vector<1x8x32xf32> -> vector<1x8x128xf32>
    %122 = vector.shape_cast %121 : vector<1x8x128xf32> to vector<8x128xf32>
    %123 = arith.truncf %122 : vector<8x128xf32> to vector<8x128xbf16>
    %c0_40 = arith.constant 0 : index
    %c0_41 = arith.constant 0 : index
    %124 = vector.load %arg9[%c0_40, %c0_41] : memref<128x128xbf16, #tpu.memory_space<vmem>>, vector<128x128xbf16>
    %cst_42 = arith.constant dense<0.000000e+00> : vector<8x128xf32>
    %125 = tpu.matmul %123, %124, %cst_42 {dimension_numbers = #tpu.dot_dimension_numbers<[1], [0], [0], [1], [0, 0, 1, 1], [], []>} : vector<8x128xbf16>, vector<128x128xbf16>, vector<8x128xf32> -> vector<8x128xf32>
    %c0_43 = arith.constant 0 : index
    %c0_44 = arith.constant 0 : index
    %126 = vector.load %arg10[%c0_43, %c0_44] : memref<1x128xf32, #tpu.memory_space<vmem>>, vector<1x128xf32>
    %127 = vector.broadcast %126 : vector<1x128xf32> to vector<8x128xf32>
    %128 = arith.addf %125, %127 : vector<8x128xf32>
    %129 = arith.addf %1, %128 : vector<8x128xf32>
    %c0_45 = arith.constant 0 : index
    %c0_46 = arith.constant 0 : index
    %130 = vector.load %arg11[%c0_45, %c0_46] : memref<1x128xf32, #tpu.memory_space<vmem>>, vector<1x128xf32>
    %c0_47 = arith.constant 0 : index
    %c0_48 = arith.constant 0 : index
    %131 = vector.load %arg12[%c0_47, %c0_48] : memref<1x128xf32, #tpu.memory_space<vmem>>, vector<1x128xf32>
    %cst_49 = arith.constant dense<0.000000e+00> : vector<8xf32>
    %132 = vector.multi_reduction <add>, %129, %cst_49 [1] : vector<8x128xf32> to vector<8xf32>
    %133 = vector.shape_cast %132 : vector<8xf32> to vector<8x1xf32>
    %cst_50 = arith.constant 1.280000e+02 : f32
    %134 = vector.broadcast %cst_50 : f32 to vector<8x1xf32>
    %135 = arith.divf %133, %134 : vector<8x1xf32>
    %136 = vector.broadcast %135 : vector<8x1xf32> to vector<8x128xf32>
    %137 = arith.subf %129, %136 : vector<8x128xf32>
    %138 = arith.mulf %137, %137 : vector<8x128xf32>
    %cst_51 = arith.constant dense<0.000000e+00> : vector<8xf32>
    %139 = vector.multi_reduction <add>, %138, %cst_51 [1] : vector<8x128xf32> to vector<8xf32>
    %140 = vector.shape_cast %139 : vector<8xf32> to vector<8x1xf32>
    %cst_52 = arith.constant 1.280000e+02 : f32
    %141 = vector.broadcast %cst_52 : f32 to vector<8x1xf32>
    %142 = arith.divf %140, %141 : vector<8x1xf32>
    %cst_53 = arith.constant 9.99999974E-6 : f32
    %143 = vector.broadcast %cst_53 : f32 to vector<8x1xf32>
    %144 = arith.addf %142, %143 : vector<8x1xf32>
    %145 = math.rsqrt %144 : vector<8x1xf32>
    %146 = vector.broadcast %145 : vector<8x1xf32> to vector<8x128xf32>
    %147 = arith.mulf %137, %146 : vector<8x128xf32>
    %148 = vector.broadcast %130 : vector<1x128xf32> to vector<8x128xf32>
    %149 = arith.mulf %147, %148 : vector<8x128xf32>
    %150 = vector.broadcast %131 : vector<1x128xf32> to vector<8x128xf32>
    %151 = arith.addf %149, %150 : vector<8x128xf32>
    %152 = arith.truncf %151 : vector<8x128xf32> to vector<8x128xbf16>
    %c0_54 = arith.constant 0 : index
    %c0_55 = arith.constant 0 : index
    %153 = vector.load %arg13[%c0_54, %c0_55] : memref<128x128xbf16, #tpu.memory_space<vmem>>, vector<128x128xbf16>
    %cst_56 = arith.constant dense<0.000000e+00> : vector<8x128xf32>
    %154 = tpu.matmul %152, %153, %cst_56 {dimension_numbers = #tpu.dot_dimension_numbers<[1], [0], [0], [1], [0, 0, 1, 1], [], []>} : vector<8x128xbf16>, vector<128x128xbf16>, vector<8x128xf32> -> vector<8x128xf32>
    %c0_57 = arith.constant 0 : index
    %c0_58 = arith.constant 0 : index
    %155 = vector.load %arg14[%c0_57, %c0_58] : memref<1x128xf32, #tpu.memory_space<vmem>>, vector<1x128xf32>
    %156 = vector.broadcast %155 : vector<1x128xf32> to vector<8x128xf32>
    %157 = arith.addf %154, %156 : vector<8x128xf32>
    %cst_59 = arith.constant 0.000000e+00 : f32
    %158 = vector.broadcast %cst_59 : f32 to vector<8x128xf32>
    %159 = arith.maximumf %157, %158 : vector<8x128xf32>
    %160 = arith.truncf %159 : vector<8x128xf32> to vector<8x128xbf16>
    %c0_60 = arith.constant 0 : index
    %c0_61 = arith.constant 0 : index
    %161 = vector.load %arg15[%c0_60, %c0_61] : memref<128x128xbf16, #tpu.memory_space<vmem>>, vector<128x128xbf16>
    %cst_62 = arith.constant dense<0.000000e+00> : vector<8x128xf32>
    %162 = tpu.matmul %160, %161, %cst_62 {dimension_numbers = #tpu.dot_dimension_numbers<[1], [0], [0], [1], [0, 0, 1, 1], [], []>} : vector<8x128xbf16>, vector<128x128xbf16>, vector<8x128xf32> -> vector<8x128xf32>
    %c0_63 = arith.constant 0 : index
    %c0_64 = arith.constant 0 : index
    %163 = vector.load %arg16[%c0_63, %c0_64] : memref<1x128xf32, #tpu.memory_space<vmem>>, vector<1x128xf32>
    %164 = vector.broadcast %163 : vector<1x128xf32> to vector<8x128xf32>
    %165 = arith.addf %162, %164 : vector<8x128xf32>
    %166 = arith.addf %129, %165 : vector<8x128xf32>
    %167 = vector.shape_cast %166 : vector<8x128xf32> to vector<1x8x128xf32>
    %c0_65 = arith.constant 0 : index
    %c0_66 = arith.constant 0 : index
    %c0_67 = arith.constant 0 : index
    %168 = vector.load %arg17[%c0_65, %c0_66, %c0_67] : memref<1x8x128xf32, #tpu.memory_space<vmem>>, vector<1x8x128xf32>
    tpu.vector_store %arg17[%c0_65, %c0_66, %c0_67], %167 {strides = array<i32>} : memref<1x8x128xf32, #tpu.memory_space<vmem>>, vector<1x8x128xf32>,
    return
  }
  func.func @transform_0(%arg0: i32) -> (i32, i32, i32) {
    %c0_i32 = arith.constant 0 : i32
    %c0_i32_0 = arith.constant 0 : i32
    %c0_i32_1 = arith.constant 0 : i32
    return %arg0, %c0_i32, %c0_i32_0 : i32, i32, i32
  }
  func.func @transform_1(%arg0: i32) -> (i32, i32, i32) {
    %c0_i32 = arith.constant 0 : i32
    %c0_i32_0 = arith.constant 0 : i32
    %c0_i32_1 = arith.constant 0 : i32
    return %arg0, %c0_i32, %c0_i32_0 : i32, i32, i32
  }
  func.func @transform_2(%arg0: i32) -> (i32, i32) {
    %c0_i32 = arith.constant 0 : i32
    %c0_i32_0 = arith.constant 0 : i32
    %c0_i32_1 = arith.constant 0 : i32
    return %c0_i32, %c0_i32_0 : i32, i32
  }
  func.func @transform_3(%arg0: i32) -> (i32, i32) {
    %c0_i32 = arith.constant 0 : i32
    %c0_i32_0 = arith.constant 0 : i32
    %c0_i32_1 = arith.constant 0 : i32
    return %c0_i32, %c0_i32_0 : i32, i32
  }
  func.func @transform_4(%arg0: i32) -> (i32, i32) {
    %c0_i32 = arith.constant 0 : i32
    %c0_i32_0 = arith.constant 0 : i32
    %c0_i32_1 = arith.constant 0 : i32
    return %c0_i32, %c0_i32_0 : i32, i32
  }
  func.func @transform_5(%arg0: i32) -> (i32, i32) {
    %c0_i32 = arith.constant 0 : i32
    %c0_i32_0 = arith.constant 0 : i32
    %c0_i32_1 = arith.constant 0 : i32
    return %c0_i32, %c0_i32_0 : i32, i32
  }
  func.func @transform_6(%arg0: i32) -> (i32, i32) {
    %c0_i32 = arith.constant 0 : i32
    %c0_i32_0 = arith.constant 0 : i32
    %c0_i32_1 = arith.constant 0 : i32
    return %c0_i32, %c0_i32_0 : i32, i32
  }
  func.func @transform_7(%arg0: i32) -> (i32, i32) {
    %c0_i32 = arith.constant 0 : i32
    %c0_i32_0 = arith.constant 0 : i32
    %c0_i32_1 = arith.constant 0 : i32
    return %c0_i32, %c0_i32_0 : i32, i32
  }
  func.func @transform_8(%arg0: i32) -> (i32, i32) {
    %c0_i32 = arith.constant 0 : i32
    %c0_i32_0 = arith.constant 0 : i32
    %c0_i32_1 = arith.constant 0 : i32
    return %c0_i32, %c0_i32_0 : i32, i32
  }
  func.func @transform_9(%arg0: i32) -> (i32, i32) {
    %c0_i32 = arith.constant 0 : i32
    %c0_i32_0 = arith.constant 0 : i32
    %c0_i32_1 = arith.constant 0 : i32
    return %c0_i32, %c0_i32_0 : i32, i32
  }
  func.func @transform_10(%arg0: i32) -> (i32, i32) {
    %c0_i32 = arith.constant 0 : i32
    %c0_i32_0 = arith.constant 0 : i32
    %c0_i32_1 = arith.constant 0 : i32
    return %c0_i32, %c0_i32_0 : i32, i32
  }
  func.func @transform_11(%arg0: i32) -> (i32, i32) {
    %c0_i32 = arith.constant 0 : i32
    %c0_i32_0 = arith.constant 0 : i32
    %c0_i32_1 = arith.constant 0 : i32
    return %c0_i32, %c0_i32_0 : i32, i32
  }
  func.func @transform_12(%arg0: i32) -> (i32, i32) {
    %c0_i32 = arith.constant 0 : i32
    %c0_i32_0 = arith.constant 0 : i32
    %c0_i32_1 = arith.constant 0 : i32
    return %c0_i32, %c0_i32_0 : i32, i32
  }
  func.func @transform_13(%arg0: i32) -> (i32, i32) {
    %c0_i32 = arith.constant 0 : i32
    %c0_i32_0 = arith.constant 0 : i32
    %c0_i32_1 = arith.constant 0 : i32
    return %c0_i32, %c0_i32_0 : i32, i32
  }
  func.func @transform_14(%arg0: i32) -> (i32, i32) {
    %c0_i32 = arith.constant 0 : i32
    %c0_i32_0 = arith.constant 0 : i32
    %c0_i32_1 = arith.constant 0 : i32
    return %c0_i32, %c0_i32_0 : i32, i32
  }
  func.func @transform_15(%arg0: i32) -> (i32, i32) {
    %c0_i32 = arith.constant 0 : i32
    %c0_i32_0 = arith.constant 0 : i32
    %c0_i32_1 = arith.constant 0 : i32
    return %c0_i32, %c0_i32_0 : i32, i32
  }
  func.func @transform_16(%arg0: i32) -> (i32, i32, i32) {
    %c0_i32 = arith.constant 0 : i32
    %c0_i32_0 = arith.constant 0 : i32
    %c0_i32_1 = arith.constant 0 : i32
    return %arg0, %c0_i32, %c0_i32_0 : i32, i32, i32
  }
}

</mosaic_0001>

<llo_original>
// kernel: tpu_custom_call.1
$region0: #{tpu_custom_call.1}
  #allocation0 [shape = 'u32[]', space=smem, size = 0x4, offset = 0x4, fixed_abs, tag = 'smem constant byte address 0x4 - core index']
  #allocation1 [shape = 'u32[144,128]{1,0:T(1,128)}', space=vmem, size = 0x12000, scoped, tag = 'internal scratch']
  %s0 = inlined_call_operand.hbm [shape: f32[2,8,128], index: 0, kind: input, shape index: {}]
  %s1 = inlined_call_operand.hbm [shape: f32[2,16,128], index: 1, kind: input, shape index: {}]
  %s2 = inlined_call_operand.vmem [shape: f32[1,128], index: 2, kind: input, shape index: {}]
  %s3 = inlined_call_operand.vmem [shape: f32[1,128], index: 3, kind: input, shape index: {}]
  %s4 = inlined_call_operand.hbm [shape: bf16[128,128], index: 4, kind: input, shape index: {}]
  %s5 = inlined_call_operand.vmem [shape: f32[1,128], index: 5, kind: input, shape index: {}]
  %s6 = inlined_call_operand.hbm [shape: bf16[128,256], index: 6, kind: input, shape index: {}]
  %s7 = inlined_call_operand.vmem [shape: f32[1,256], index: 7, kind: input, shape index: {}]
  %s8 = inlined_call_operand.hbm [shape: bf16[128,128], index: 8, kind: input, shape index: {}]
  %s9 = inlined_call_operand.vmem [shape: f32[1,128], index: 9, kind: input, shape index: {}]
  %s10 = inlined_call_operand.vmem [shape: f32[1,128], index: 10, kind: input, shape index: {}]
  %s11 = inlined_call_operand.vmem [shape: f32[1,128], index: 11, kind: input, shape index: {}]
  %s12 = inlined_call_operand.hbm [shape: bf16[128,128], index: 12, kind: input, shape index: {}]
  %s13 = inlined_call_operand.vmem [shape: f32[1,128], index: 13, kind: input, shape index: {}]
  %s14 = inlined_call_operand.hbm [shape: bf16[128,128], index: 14, kind: input, shape index: {}]
  %s15 = inlined_call_operand.vmem [shape: f32[1,128], index: 15, kind: input, shape index: {}]
  %s16 = inlined_call_operand.hbm [shape: f32[2,8,128], index: 16, kind: output, shape index: {}]
  %s17 = sld [smem:[#allocation0]]
  $region125: #{tpu_custom_call.1} parent=0
    _
  %s19 = ssub.s32 1, %s17
  %s20 = scalar_select 0, %s19, %s17
  $region1: #{tpu_custom_call.1} parent=0
    #allocation2 [shape = 'u8[8192]{0}', space=vmem, size = 0x2000, scoped, tag = 'input window, operand 0']
    #allocation3 [shape = 's32[2]{0}', space=sflag, size = 0x8, scoped, tag = 'scoped memory for tpu_custom_call.1']
    #allocation4 [shape = 's32[2]{0}', space=sflag, size = 0x8, scoped, tag = 'scoped memory for tpu_custom_call.1']
    #allocation5 [shape = 'u8[16384]{0}', space=vmem, size = 0x4000, scoped, tag = 'input window, operand 1']
    #allocation6 [shape = 's32[2]{0}', space=sflag, size = 0x8, scoped, tag = 'scoped memory for tpu_custom_call.1']
    #allocation7 [shape = 'u8[32768]{0}', space=vmem, size = 0x8000, scoped, tag = 'input window, operand 4, single buffered']
    #allocation8 [shape = 'u8[65536]{0}', space=vmem, size = 0x10000, scoped, tag = 'input window, operand 6, single buffered']
    #allocation9 [shape = 's32[1]{0}', space=sflag, size = 0x4, scoped, tag = 'scoped memory for tpu_custom_call.1']
    #allocation10 [shape = 'u8[32768]{0}', space=vmem, size = 0x8000, scoped, tag = 'input window, operand 8, single buffered']
    #allocation11 [shape = 'u8[32768]{0}', space=vmem, size = 0x8000, scoped, tag = 'input window, operand 12, single buffered']
    #allocation12 [shape = 's32[1]{0}', space=sflag, size = 0x4, scoped, tag = 'scoped memory for tpu_custom_call.1']
    #allocation13 [shape = 'u8[32768]{0}', space=vmem, size = 0x8000, scoped, tag = 'input window, operand 14, single buffered']
    #allocation14 [shape = 'u8[8192]{0}', space=vmem, size = 0x2000, scoped, tag = 'output window, operand 0']
    %21 = vsyncpa [#allocation3], 0
    %s22 = scalar_lea.sflag [#allocation3], 1
    %23 = vsyncpa %s22, 0
    %24 = vsyncpa [#allocation6], 0
    %s25 = scalar_lea.sflag [#allocation6], 1
    %26 = vsyncpa %s25, 0
    %27 = vsyncpa [#allocation9], 0
    %28 = vsyncpa [#allocation12], 0
    %29 = vsyncpa [#allocation4], 0
    %s30 = scalar_lea.sflag [#allocation4], 1
    %31 = vsyncpa %s30, 0
    loop: start=0, step=1, limit=4
    $region2: #{tpu_custom_call.1} parent=1 // loop_pre_header
      _
    $region3: #{tpu_custom_call.1} parent=1 // loop_header
      %s33 = sphi 0, %s37
      %p34 = scmp.ge.s32.totalorder %s33, 4
      %s43 = sphi 0, %s45
      %s46 = sphi 0, %s43
      %s47 = sphi 0, %s46
      %s63 = sphi 0, %s47
      %s69 = sphi 0, %s71
      %s72 = sphi 0, %s69
      %s73 = sphi 0, %s72
      %s89 = sphi 0, %s73
      %s93 = sphi 0, %s93
      %s95 = sphi 0, %s93
      %s96 = sphi 0, %s95
      %s110 = sphi 0, %s96
      %s114 = sphi 0, %s114
      %s116 = sphi 0, %s114
      %s117 = sphi 0, %s116
      %s131 = sphi 0, %s117
      %s135 = sphi 0, %s135
      %s137 = sphi 0, %s135
      %s138 = sphi 0, %s137
      %s152 = sphi 0, %s138
      %s156 = sphi 0, %s156
      %s158 = sphi 0, %s156
      %s159 = sphi 0, %s158
      %s173 = sphi 0, %s159
      %s177 = sphi 0, %s177
      %s179 = sphi 0, %s177
      %s180 = sphi 0, %s179
      %s194 = sphi 0, %s180
      %s198 = sphi 0, %s198
      %s200 = sphi 0, %s198
      %s201 = sphi 0, %s200
      %s215 = sphi 0, %s201
      %s219 = sphi 0, %s219
      %s221 = sphi 0, %s219
      %s222 = sphi 0, %s221
      %s236 = sphi 0, %s222
      %s240 = sphi 0, %s240
      %s242 = sphi 0, %s240
      %s243 = sphi 0, %s242
      %s257 = sphi 0, %s243
      %s261 = sphi 0, %s261
      %s263 = sphi 0, %s261
      %s264 = sphi 0, %s263
      %s278 = sphi 0, %s264
      %s282 = sphi 0, %s282
      %s284 = sphi 0, %s282
      %s285 = sphi 0, %s284
      %s299 = sphi 0, %s285
      %s303 = sphi 0, %s303
      %s305 = sphi 0, %s303
      %s306 = sphi 0, %s305
      %s320 = sphi 0, %s306
      %s324 = sphi 0, %s324
      %s326 = sphi 0, %s324
      %s327 = sphi 0, %s326
      %s341 = sphi 0, %s327
      %s345 = sphi 0, %s345
      %s347 = sphi 0, %s345
      %s348 = sphi 0, %s347
      %s362 = sphi 0, %s348
      %s366 = sphi 0, %s366
      %s368 = sphi 0, %s366
      %s369 = sphi 0, %s368
      %s383 = sphi 0, %s369
      %s389 = sphi 0, %s391
      %s392 = sphi 0, %s389
      %s393 = sphi 0, %s392
      %s409 = sphi 0, %s393
    $region4: #{tpu_custom_call.1} parent=1 // loop_header_branch
      %36 = sbr.rel (%p34) target = $region8
    $region5: #{tpu_custom_call.1} parent=1 // loop_body
      %s38 = ssub.s32 %s33, 1
      %s39 = ssub.s32 %s33, 2
      %s40 = sadd.s32 %s33, 1
      %s41 = ssub.s32 %s33, %s40
      %p42 = scmp.eq.s32.totalorder %s41, 0
      %s44 = sadd.s32 %s43, 1
      %s45 = scalar_select %p42, %s43, %s44
      %p48 = pneg %p42
      %p49 = scmp.eq.s32.totalorder %s33, 1
      %p50 = por %p48, %p49
      %p51 = scmp.ne.s32.totalorder %s43, %s46
      %p52 = scmp.eq.s32.totalorder %s33, 0
      %p53 = por %p51, %p52
      %p54 = scmp.ne.s32.totalorder %s43, %s46
      %p55 = scmp.eq.s32.totalorder %s38, 1
      %p56 = por %p54, %p55
      %p57 = scmp.ne.s32.totalorder %s46, %s47
      %p58 = scmp.eq.s32.totalorder %s38, 0
      %p59 = por %p57, %p58
      %p60 = scmp.ne.s32.totalorder %s46, %s47
      %p61 = scmp.eq.s32.totalorder %s39, 1
      %p62 = por %p60, %p61
      %p64 = scmp.ne.s32.totalorder %s47, %s63
      %p65 = scmp.eq.s32.totalorder %s39, 0
      %p66 = por %p64, %p65
      %s67 = ssub.s32 %s33, %s40
      %p68 = scmp.eq.s32.totalorder %s67, 0
      %s70 = sadd.s32 %s69, 1
      %s71 = scalar_select %p68, %s69, %s70
      %p74 = pneg %p68
      %p75 = scmp.eq.s32.totalorder %s33, 1
      %p76 = por %p74, %p75
      %p77 = scmp.ne.s32.totalorder %s69, %s72
      %p78 = scmp.eq.s32.totalorder %s33, 0
      %p79 = por %p77, %p78
      %p80 = scmp.ne.s32.totalorder %s69, %s72
      %p81 = scmp.eq.s32.totalorder %s38, 1
      %p82 = por %p80, %p81
      %p83 = scmp.ne.s32.totalorder %s72, %s73
      %p84 = scmp.eq.s32.totalorder %s38, 0
      %p85 = por %p83, %p84
      %p86 = scmp.ne.s32.totalorder %s72, %s73
      %p87 = scmp.eq.s32.totalorder %s39, 1
      %p88 = por %p86, %p87
      %p90 = scmp.ne.s32.totalorder %s73, %s89
      %p91 = scmp.eq.s32.totalorder %s39, 0
      %p92 = por %p90, %p91
      %s94 = sadd.s32 %s93, 1
      %p97 = scmp.eq.s32.totalorder %s33, 1
      %p98 = scmp.ne.s32.totalorder %s93, %s95
      %p99 = scmp.eq.s32.totalorder %s33, 0
      %p100 = por %p98, %p99
      %p101 = scmp.ne.s32.totalorder %s93, %s95
      %p102 = scmp.eq.s32.totalorder %s38, 1
      %p103 = por %p101, %p102
      %p104 = scmp.ne.s32.totalorder %s95, %s96
      %p105 = scmp.eq.s32.totalorder %s38, 0
      %p106 = por %p104, %p105
      %p107 = scmp.ne.s32.totalorder %s95, %s96
      %p108 = scmp.eq.s32.totalorder %s39, 1
      %p109 = por %p107, %p108
      %p111 = scmp.ne.s32.totalorder %s96, %s110
      %p112 = scmp.eq.s32.totalorder %s39, 0
      %p113 = por %p111, %p112
      %s115 = sadd.s32 %s114, 1
      %p118 = scmp.eq.s32.totalorder %s33, 1
      %p119 = scmp.ne.s32.totalorder %s114, %s116
      %p120 = scmp.eq.s32.totalorder %s33, 0
      %p121 = por %p119, %p120
      %p122 = scmp.ne.s32.totalorder %s114, %s116
      %p123 = scmp.eq.s32.totalorder %s38, 1
      %p124 = por %p122, %p123
      %p125 = scmp.ne.s32.totalorder %s116, %s117
      %p126 = scmp.eq.s32.totalorder %s38, 0
      %p127 = por %p125, %p126
      %p128 = scmp.ne.s32.totalorder %s116, %s117
      %p129 = scmp.eq.s32.totalorder %s39, 1
      %p130 = por %p128, %p129
      %p132 = scmp.ne.s32.totalorder %s117, %s131
      %p133 = scmp.eq.s32.totalorder %s39, 0
      %p134 = por %p132, %p133
      %s136 = sadd.s32 %s135, 1
      %p139 = scmp.eq.s32.totalorder %s33, 1
      %p140 = scmp.ne.s32.totalorder %s135, %s137
      %p141 = scmp.eq.s32.totalorder %s33, 0
      %p142 = por %p140, %p141
      %p143 = scmp.ne.s32.totalorder %s135, %s137
      %p144 = scmp.eq.s32.totalorder %s38, 1
      %p145 = por %p143, %p144
      %p146 = scmp.ne.s32.totalorder %s137, %s138
      %p147 = scmp.eq.s32.totalorder %s38, 0
      %p148 = por %p146, %p147
      %p149 = scmp.ne.s32.totalorder %s137, %s138
      %p150 = scmp.eq.s32.totalorder %s39, 1
      %p151 = por %p149, %p150
      %p153 = scmp.ne.s32.totalorder %s138, %s152
      %p154 = scmp.eq.s32.totalorder %s39, 0
      %p155 = por %p153, %p154
      %s157 = sadd.s32 %s156, 1
      %p160 = scmp.eq.s32.totalorder %s33, 1
      %p161 = scmp.ne.s32.totalorder %s156, %s158
      %p162 = scmp.eq.s32.totalorder %s33, 0
      %p163 = por %p161, %p162
      %p164 = scmp.ne.s32.totalorder %s156, %s158
      %p165 = scmp.eq.s32.totalorder %s38, 1
      %p166 = por %p164, %p165
      %p167 = scmp.ne.s32.totalorder %s158, %s159
      %p168 = scmp.eq.s32.totalorder %s38, 0
      %p169 = por %p167, %p168
      %p170 = scmp.ne.s32.totalorder %s158, %s159
      %p171 = scmp.eq.s32.totalorder %s39, 1
      %p172 = por %p170, %p171
      %p174 = scmp.ne.s32.totalorder %s159, %s173
      %p175 = scmp.eq.s32.totalorder %s39, 0
      %p176 = por %p174, %p175
      %s178 = sadd.s32 %s177, 1
      %p181 = scmp.eq.s32.totalorder %s33, 1
      %p182 = scmp.ne.s32.totalorder %s177, %s179
      %p183 = scmp.eq.s32.totalorder %s33, 0
      %p184 = por %p182, %p183
      %p185 = scmp.ne.s32.totalorder %s177, %s179
      %p186 = scmp.eq.s32.totalorder %s38, 1
      %p187 = por %p185, %p186
      %p188 = scmp.ne.s32.totalorder %s179, %s180
      %p189 = scmp.eq.s32.totalorder %s38, 0
      %p190 = por %p188, %p189
      %p191 = scmp.ne.s32.totalorder %s179, %s180
      %p192 = scmp.eq.s32.totalorder %s39, 1
      %p193 = por %p191, %p192
      %p195 = scmp.ne.s32.totalorder %s180, %s194
      %p196 = scmp.eq.s32.totalorder %s39, 0
      %p197 = por %p195, %p196
      %s199 = sadd.s32 %s198, 1
      %p202 = scmp.eq.s32.totalorder %s33, 1
      %p203 = scmp.ne.s32.totalorder %s198, %s200
      %p204 = scmp.eq.s32.totalorder %s33, 0
      %p205 = por %p203, %p204
      %p206 = scmp.ne.s32.totalorder %s198, %s200
      %p207 = scmp.eq.s32.totalorder %s38, 1
      %p208 = por %p206, %p207
      %p209 = scmp.ne.s32.totalorder %s200, %s201
      %p210 = scmp.eq.s32.totalorder %s38, 0
      %p211 = por %p209, %p210
      %p212 = scmp.ne.s32.totalorder %s200, %s201
      %p213 = scmp.eq.s32.totalorder %s39, 1
      %p214 = por %p212, %p213
      %p216 = scmp.ne.s32.totalorder %s201, %s215
      %p217 = scmp.eq.s32.totalorder %s39, 0
      %p218 = por %p216, %p217
      %s220 = sadd.s32 %s219, 1
      %p223 = scmp.eq.s32.totalorder %s33, 1
      %p224 = scmp.ne.s32.totalorder %s219, %s221
      %p225 = scmp.eq.s32.totalorder %s33, 0
      %p226 = por %p224, %p225
      %p227 = scmp.ne.s32.totalorder %s219, %s221
      %p228 = scmp.eq.s32.totalorder %s38, 1
      %p229 = por %p227, %p228
      %p230 = scmp.ne.s32.totalorder %s221, %s222
      %p231 = scmp.eq.s32.totalorder %s38, 0
      %p232 = por %p230, %p231
      %p233 = scmp.ne.s32.totalorder %s221, %s222
      %p234 = scmp.eq.s32.totalorder %s39, 1
      %p235 = por %p233, %p234
      %p237 = scmp.ne.s32.totalorder %s222, %s236
      %p238 = scmp.eq.s32.totalorder %s39, 0
      %p239 = por %p237, %p238
      %s241 = sadd.s32 %s240, 1
      %p244 = scmp.eq.s32.totalorder %s33, 1
      %p245 = scmp.ne.s32.totalorder %s240, %s242
      %p246 = scmp.eq.s32.totalorder %s33, 0
      %p247 = por %p245, %p246
      %p248 = scmp.ne.s32.totalorder %s240, %s242
      %p249 = scmp.eq.s32.totalorder %s38, 1
      %p250 = por %p248, %p249
      %p251 = scmp.ne.s32.totalorder %s242, %s243
      %p252 = scmp.eq.s32.totalorder %s38, 0
      %p253 = por %p251, %p252
      %p254 = scmp.ne.s32.totalorder %s242, %s243
      %p255 = scmp.eq.s32.totalorder %s39, 1
      %p256 = por %p254, %p255
      %p258 = scmp.ne.s32.totalorder %s243, %s257
      %p259 = scmp.eq.s32.totalorder %s39, 0
      %p260 = por %p258, %p259
      %s262 = sadd.s32 %s261, 1
      %p265 = scmp.eq.s32.totalorder %s33, 1
      %p266 = scmp.ne.s32.totalorder %s261, %s263
      %p267 = scmp.eq.s32.totalorder %s33, 0
      %p268 = por %p266, %p267
      %p269 = scmp.ne.s32.totalorder %s261, %s263
      %p270 = scmp.eq.s32.totalorder %s38, 1
      %p271 = por %p269, %p270
      %p272 = scmp.ne.s32.totalorder %s263, %s264
      %p273 = scmp.eq.s32.totalorder %s38, 0
      %p274 = por %p272, %p273
      %p275 = scmp.ne.s32.totalorder %s263, %s264
      %p276 = scmp.eq.s32.totalorder %s39, 1
      %p277 = por %p275, %p276
      %p279 = scmp.ne.s32.totalorder %s264, %s278
      %p280 = scmp.eq.s32.totalorder %s39, 0
      %p281 = por %p279, %p280
      %s283 = sadd.s32 %s282, 1
      %p286 = scmp.eq.s32.totalorder %s33, 1
      %p287 = scmp.ne.s32.totalorder %s282, %s284
      %p288 = scmp.eq.s32.totalorder %s33, 0
      %p289 = por %p287, %p288
      %p290 = scmp.ne.s32.totalorder %s282, %s284
      %p291 = scmp.eq.s32.totalorder %s38, 1
      %p292 = por %p290, %p291
      %p293 = scmp.ne.s32.totalorder %s284, %s285
      %p294 = scmp.eq.s32.totalorder %s38, 0
      %p295 = por %p293, %p294
      %p296 = scmp.ne.s32.totalorder %s284, %s285
      %p297 = scmp.eq.s32.totalorder %s39, 1
      %p298 = por %p296, %p297
      %p300 = scmp.ne.s32.totalorder %s285, %s299
      %p301 = scmp.eq.s32.totalorder %s39, 0
      %p302 = por %p300, %p301
      %s304 = sadd.s32 %s303, 1
      %p307 = scmp.eq.s32.totalorder %s33, 1
      %p308 = scmp.ne.s32.totalorder %s303, %s305
      %p309 = scmp.eq.s32.totalorder %s33, 0
      %p310 = por %p308, %p309
      %p311 = scmp.ne.s32.totalorder %s303, %s305
      %p312 = scmp.eq.s32.totalorder %s38, 1
      %p313 = por %p311, %p312
      %p314 = scmp.ne.s32.totalorder %s305, %s306
      %p315 = scmp.eq.s32.totalorder %s38, 0
      %p316 = por %p314, %p315
      %p317 = scmp.ne.s32.totalorder %s305, %s306
      %p318 = scmp.eq.s32.totalorder %s39, 1
      %p319 = por %p317, %p318
      %p321 = scmp.ne.s32.totalorder %s306, %s320
      %p322 = scmp.eq.s32.totalorder %s39, 0
      %p323 = por %p321, %p322
      %s325 = sadd.s32 %s324, 1
      %p328 = scmp.eq.s32.totalorder %s33, 1
      %p329 = scmp.ne.s32.totalorder %s324, %s326
      %p330 = scmp.eq.s32.totalorder %s33, 0
      %p331 = por %p329, %p330
      %p332 = scmp.ne.s32.totalorder %s324, %s326
      %p333 = scmp.eq.s32.totalorder %s38, 1
      %p334 = por %p332, %p333
      %p335 = scmp.ne.s32.totalorder %s326, %s327
      %p336 = scmp.eq.s32.totalorder %s38, 0
      %p337 = por %p335, %p336
      %p338 = scmp.ne.s32.totalorder %s326, %s327
      %p339 = scmp.eq.s32.totalorder %s39, 1
      %p340 = por %p338, %p339
      %p342 = scmp.ne.s32.totalorder %s327, %s341
      %p343 = scmp.eq.s32.totalorder %s39, 0
      %p344 = por %p342, %p343
      %s346 = sadd.s32 %s345, 1
      %p349 = scmp.eq.s32.totalorder %s33, 1
      %p350 = scmp.ne.s32.totalorder %s345, %s347
      %p351 = scmp.eq.s32.totalorder %s33, 0
      %p352 = por %p350, %p351
      %p353 = scmp.ne.s32.totalorder %s345, %s347
      %p354 = scmp.eq.s32.totalorder %s38, 1
      %p355 = por %p353, %p354
      %p356 = scmp.ne.s32.totalorder %s347, %s348
      %p357 = scmp.eq.s32.totalorder %s38, 0
      %p358 = por %p356, %p357
      %p359 = scmp.ne.s32.totalorder %s347, %s348
      %p360 = scmp.eq.s32.totalorder %s39, 1
      %p361 = por %p359, %p360
      %p363 = scmp.ne.s32.totalorder %s348, %s362
      %p364 = scmp.eq.s32.totalorder %s39, 0
      %p365 = por %p363, %p364
      %s367 = sadd.s32 %s366, 1
      %p370 = scmp.eq.s32.totalorder %s33, 1
      %p371 = scmp.ne.s32.totalorder %s366, %s368
      %p372 = scmp.eq.s32.totalorder %s33, 0
      %p373 = por %p371, %p372
      %p374 = scmp.ne.s32.totalorder %s366, %s368
      %p375 = scmp.eq.s32.totalorder %s38, 1
      %p376 = por %p374, %p375
      %p377 = scmp.ne.s32.totalorder %s368, %s369
      %p378 = scmp.eq.s32.totalorder %s38, 0
      %p379 = por %p377, %p378
      %p380 = scmp.ne.s32.totalorder %s368, %s369
      %p381 = scmp.eq.s32.totalorder %s39, 1
      %p382 = por %p380, %p381
      %p384 = scmp.ne.s32.totalorder %s369, %s383
      %p385 = scmp.eq.s32.totalorder %s39, 0
      %p386 = por %p384, %p385
      %s387 = ssub.s32 %s33, %s40
      %p388 = scmp.eq.s32.totalorder %s387, 0
      %s390 = sadd.s32 %s389, 1
      %s391 = scalar_select %p388, %s389, %s390
      %p394 = pneg %p388
      %p395 = scmp.eq.s32.totalorder %s33, 1
      %p396 = por %p394, %p395
      %p397 = scmp.ne.s32.totalorder %s389, %s392
      %p398 = scmp.eq.s32.totalorder %s33, 0
      %p399 = por %p397, %p398
      %p400 = scmp.ne.s32.totalorder %s389, %s392
      %p401 = scmp.eq.s32.totalorder %s38, 1
      %p402 = por %p400, %p401
      %p403 = scmp.ne.s32.totalorder %s392, %s393
      %p404 = scmp.eq.s32.totalorder %s38, 0
      %p405 = por %p403, %p404
      %p406 = scmp.ne.s32.totalorder %s392, %s393
      %p407 = scmp.eq.s32.totalorder %s39, 1
      %p408 = por %p406, %p407
      %p410 = scmp.ne.s32.totalorder %s393, %s409
      %p411 = scmp.eq.s32.totalorder %s39, 0
      %p412 = por %p410, %p411
      %p413 = scmp.le.s32.totalorder 1, %s33
      %p414 = scmp.lt.s32.totalorder %s33, 3
      %p415 = pnand %p413, %p414
      %p416 = pneg %p415
      // Predicated region
      $region9: #{tpu_custom_call.1} parent=5 // pred_check
        _
      $region10: #{tpu_custom_call.1} parent=5 // pred_check_branch
        %418 = sbr.rel (%p415) target = $region12
      $region11: #{tpu_custom_call.1} parent=5 // pred_region
        %s419 = ssub.s32 %s33, 1
        // Predicated region
        $region13: #{tpu_custom_call.1} parent=11 // pred_check
          %p420 = pneg %p106
        $region14: #{tpu_custom_call.1} parent=11 // pred_check_branch
          %422 = sbr.rel (%p420) target = $region16
        $region15: #{tpu_custom_call.1} parent=11 // pred_region
          _
        $region16: #{tpu_custom_call.1} parent=11 // pred_fallthru
          _
        // Predicated region
        $region17: #{tpu_custom_call.1} parent=11 // pred_check
          %p423 = pneg %p127
        $region18: #{tpu_custom_call.1} parent=11 // pred_check_branch
          %425 = sbr.rel (%p423) target = $region20
        $region19: #{tpu_custom_call.1} parent=11 // pred_region
          _
        $region20: #{tpu_custom_call.1} parent=11 // pred_fallthru
          _
        // Predicated region
        $region21: #{tpu_custom_call.1} parent=11 // pred_check
          %p426 = pneg %p148
        $region22: #{tpu_custom_call.1} parent=11 // pred_check_branch
          %428 = sbr.rel (%p426) target = $region24
        $region23: #{tpu_custom_call.1} parent=11 // pred_region
          %s430 = ssub.s32 1024, 1024
          %431 = vsyncadd [#allocation6], %s430
          %s432 = sshll.u32 [#allocation7], 4
          %s433 = int_to_ptr.vmem [resolvable:$true] %s432
          %438 = dma.hbm_to_vmem [thread:$0]  %s4, 1024, %s433, [#allocation6], 64, 64, 4
        $region24: #{tpu_custom_call.1} parent=11 // pred_fallthru
          _
        // Predicated region
        $region25: #{tpu_custom_call.1} parent=11 // pred_check
          %p439 = pneg %p169
        $region26: #{tpu_custom_call.1} parent=11 // pred_check_branch
          %441 = sbr.rel (%p439) target = $region28
        $region27: #{tpu_custom_call.1} parent=11 // pred_region
          _
        $region28: #{tpu_custom_call.1} parent=11 // pred_fallthru
          _
        // Predicated region
        $region29: #{tpu_custom_call.1} parent=11 // pred_check
          %p442 = pneg %p190
        $region30: #{tpu_custom_call.1} parent=11 // pred_check_branch
          %444 = sbr.rel (%p442) target = $region32
        $region31: #{tpu_custom_call.1} parent=11 // pred_region
          %s446 = ssub.s32 2048, 2048
          %447 = vsyncadd [#allocation9], %s446
          %s448 = sshll.u32 [#allocation8], 4
          %s449 = int_to_ptr.vmem [resolvable:$true] %s448
          %454 = dma.hbm_to_vmem [thread:$0]  %s6, 2048, %s449, [#allocation9], 128, 128, 8
        $region32: #{tpu_custom_call.1} parent=11 // pred_fallthru
          _
        // Predicated region
        $region33: #{tpu_custom_call.1} parent=11 // pred_check
          %p455 = pneg %p211
        $region34: #{tpu_custom_call.1} parent=11 // pred_check_branch
          %457 = sbr.rel (%p455) target = $region36
        $region35: #{tpu_custom_call.1} parent=11 // pred_region
          _
        $region36: #{tpu_custom_call.1} parent=11 // pred_fallthru
          _
        // Predicated region
        $region37: #{tpu_custom_call.1} parent=11 // pred_check
          %p458 = pneg %p232
        $region38: #{tpu_custom_call.1} parent=11 // pred_check_branch
          %460 = sbr.rel (%p458) target = $region40
        $region39: #{tpu_custom_call.1} parent=11 // pred_region
          %s462 = ssub.s32 1024, 1024
          %463 = vsyncadd [#allocation9], %s462
          %s464 = sshll.u32 [#allocation10], 4
          %s465 = int_to_ptr.vmem [resolvable:$true] %s464
          %470 = dma.hbm_to_vmem [thread:$0]  %s8, 1024, %s465, [#allocation9], 64, 64, 4
        $region40: #{tpu_custom_call.1} parent=11 // pred_fallthru
          _
        // Predicated region
        $region41: #{tpu_custom_call.1} parent=11 // pred_check
          %p471 = pneg %p253
        $region42: #{tpu_custom_call.1} parent=11 // pred_check_branch
          %473 = sbr.rel (%p471) target = $region44
        $region43: #{tpu_custom_call.1} parent=11 // pred_region
          _
        $region44: #{tpu_custom_call.1} parent=11 // pred_fallthru
          _
        // Predicated region
        $region45: #{tpu_custom_call.1} parent=11 // pred_check
          %p474 = pneg %p274
        $region46: #{tpu_custom_call.1} parent=11 // pred_check_branch
          %476 = sbr.rel (%p474) target = $region48
        $region47: #{tpu_custom_call.1} parent=11 // pred_region
          _
        $region48: #{tpu_custom_call.1} parent=11 // pred_fallthru
          _
        // Predicated region
        $region49: #{tpu_custom_call.1} parent=11 // pred_check
          %p477 = pneg %p295
        $region50: #{tpu_custom_call.1} parent=11 // pred_check_branch
          %479 = sbr.rel (%p477) target = $region52
        $region51: #{tpu_custom_call.1} parent=11 // pred_region
          _
        $region52: #{tpu_custom_call.1} parent=11 // pred_fallthru
          _
        // Predicated region
        $region53: #{tpu_custom_call.1} parent=11 // pred_check
          %p480 = pneg %p316
        $region54: #{tpu_custom_call.1} parent=11 // pred_check_branch
          %482 = sbr.rel (%p480) target = $region56
        $region55: #{tpu_custom_call.1} parent=11 // pred_region
          %s484 = ssub.s32 1024, 1024
          %485 = vsyncadd [#allocation12], %s484
          %s486 = sshll.u32 [#allocation11], 4
          %s487 = int_to_ptr.vmem [resolvable:$true] %s486
          %492 = dma.hbm_to_vmem [thread:$0]  %s12, 1024, %s487, [#allocation12], 64, 64, 4
        $region56: #{tpu_custom_call.1} parent=11 // pred_fallthru
          _
        // Predicated region
        $region57: #{tpu_custom_call.1} parent=11 // pred_check
          %p493 = pneg %p337
        $region58: #{tpu_custom_call.1} parent=11 // pred_check_branch
          %495 = sbr.rel (%p493) target = $region60
        $region59: #{tpu_custom_call.1} parent=11 // pred_region
          _
        $region60: #{tpu_custom_call.1} parent=11 // pred_fallthru
          _
        // Predicated region
        $region61: #{tpu_custom_call.1} parent=11 // pred_check
          %p496 = pneg %p358
        $region62: #{tpu_custom_call.1} parent=11 // pred_check_branch
          %498 = sbr.rel (%p496) target = $region64
        $region63: #{tpu_custom_call.1} parent=11 // pred_region
          %s500 = ssub.s32 1024, 1024
          %501 = vsyncadd [#allocation12], %s500
          %s502 = sshll.u32 [#allocation13], 4
          %s503 = int_to_ptr.vmem [resolvable:$true] %s502
          %508 = dma.hbm_to_vmem [thread:$0]  %s14, 1024, %s503, [#allocation12], 64, 64, 4
        $region64: #{tpu_custom_call.1} parent=11 // pred_fallthru
          _
        // Predicated region
        $region65: #{tpu_custom_call.1} parent=11 // pred_check
          %p509 = pneg %p379
        $region66: #{tpu_custom_call.1} parent=11 // pred_check_branch
          %511 = sbr.rel (%p509) target = $region68
        $region67: #{tpu_custom_call.1} parent=11 // pred_region
          _
        $region68: #{tpu_custom_call.1} parent=11 // pred_fallthru
          _
      $region12: #{tpu_custom_call.1} parent=5 // pred_fallthru
        _
      %p512 = scmp.lt.s32.totalorder %s33, 2
      // Predicated region
      $region69: #{tpu_custom_call.1} parent=5 // pred_check
        %p513 = pneg %p512
      $region70: #{tpu_custom_call.1} parent=5 // pred_check_branch
        %515 = sbr.rel (%p513) target = $region72
      $region71: #{tpu_custom_call.1} parent=5 // pred_region
        // Predicated region
        $region73: #{tpu_custom_call.1} parent=71 // pred_check
          %p516 = pneg %p53
        $region74: #{tpu_custom_call.1} parent=71 // pred_check_branch
          %518 = sbr.rel (%p516) target = $region76
        $region75: #{tpu_custom_call.1} parent=71 // pred_region
          %s519 = sand.u32 %s43, 1
          %s520 = scalar_lea.sflag [#allocation3], %s519
          %s521 = sand.u32 %s43, 1
          %s522 = smul.addr %s521, 8
          %s523 = scalar_lea.vmem [#allocation2], %s522
          %s525 = ssub.s32 128, 128
          %526 = vsyncadd %s520, %s525
          %s527 = smul.addr %s33, 128
          %s528 = scalar_lea.hbm %s0, %s527
          %s530 = sshll.u32 %s523, 4
          %s531 = int_to_ptr.vmem [resolvable:$true] %s530
          %533 = dma.hbm_to_vmem [thread:$0]  %s528, 128, %s531, %s520
        $region76: #{tpu_custom_call.1} parent=71 // pred_fallthru
          _
        // Predicated region
        $region77: #{tpu_custom_call.1} parent=71 // pred_check
          %p534 = pneg %p79
        $region78: #{tpu_custom_call.1} parent=71 // pred_check_branch
          %536 = sbr.rel (%p534) target = $region80
        $region79: #{tpu_custom_call.1} parent=71 // pred_region
          %s537 = sand.u32 %s33, 1
          %s538 = scalar_lea.sflag [#allocation6], %s537
          %s539 = sand.u32 %s69, 1
          %s540 = smul.addr %s539, 16
          %s541 = scalar_lea.vmem [#allocation5], %s540
          %s543 = ssub.s32 256, 256
          %544 = vsyncadd %s538, %s543
          %s545 = smul.addr %s33, 2
          %s546 = smul.addr %s545, 128
          %s547 = scalar_lea.hbm %s1, %s546
          %s548 = sshll.u32 %s541, 4
          %s549 = int_to_ptr.vmem [resolvable:$true] %s548
          %554 = dma.hbm_to_vmem [thread:$0]  %s547, 256, %s549, %s538, 128, 128, 8
        $region80: #{tpu_custom_call.1} parent=71 // pred_fallthru
          _
      $region72: #{tpu_custom_call.1} parent=5 // pred_fallthru
        _
      %p555 = scmp.le.s32.totalorder 1, %s33
      %p556 = scmp.lt.s32.totalorder %s33, 3
      %p557 = pnand %p555, %p556
      %p558 = pneg %p557
      // Predicated region
      $region81: #{tpu_custom_call.1} parent=5 // pred_check
        _
      $region82: #{tpu_custom_call.1} parent=5 // pred_check_branch
        %560 = sbr.rel (%p557) target = $region84
      $region83: #{tpu_custom_call.1} parent=5 // pred_region
        %s561 = ssub.s32 %s33, 1
        %s562 = sand.u32 %s46, 1
        %s563 = scalar_lea.sflag [#allocation3], %s562
        %s564 = sand.u32 %s46, 1
        %s565 = smul.addr %s564, 8
        %s566 = scalar_lea.vmem [#allocation2], %s565
        // Predicated region
        $region85: #{tpu_custom_call.1} parent=83 // pred_check
          %p567 = pneg %p59
        $region86: #{tpu_custom_call.1} parent=83 // pred_check_branch
          %569 = sbr.rel (%p567) target = $region88
        $region87: #{tpu_custom_call.1} parent=83 // pred_region
          %570 = dma.done %s563, 128
        $region88: #{tpu_custom_call.1} parent=83 // pred_fallthru
          _
        %s571 = sand.u32 %s38, 1
        %s572 = scalar_lea.sflag [#allocation6], %s571
        %s573 = sand.u32 %s72, 1
        %s574 = smul.addr %s573, 16
        %s575 = scalar_lea.vmem [#allocation5], %s574
        // Predicated region
        $region89: #{tpu_custom_call.1} parent=83 // pred_check
          %p576 = pneg %p85
        $region90: #{tpu_custom_call.1} parent=83 // pred_check_branch
          %578 = sbr.rel (%p576) target = $region92
        $region91: #{tpu_custom_call.1} parent=83 // pred_region
          %579 = dma.done %s572, 256
        $region92: #{tpu_custom_call.1} parent=83 // pred_fallthru
          _
        // Predicated region
        $region93: #{tpu_custom_call.1} parent=83 // pred_check
          %p580 = pneg %p148
        $region94: #{tpu_custom_call.1} parent=83 // pred_check_branch
          %582 = sbr.rel (%p580) target = $region96
        $region95: #{tpu_custom_call.1} parent=83 // pred_region
          %583 = dma.done [#allocation6], 1024
        $region96: #{tpu_custom_call.1} parent=83 // pred_fallthru
          _
        // Predicated region
        $region97: #{tpu_custom_call.1} parent=83 // pred_check
          %p584 = pneg %p190
        $region98: #{tpu_custom_call.1} parent=83 // pred_check_branch
          %586 = sbr.rel (%p584) target = $region100
        $region99: #{tpu_custom_call.1} parent=83 // pred_region
          %587 = dma.done [#allocation9], 2048
        $region100: #{tpu_custom_call.1} parent=83 // pred_fallthru
          _
        // Predicated region
        $region101: #{tpu_custom_call.1} parent=83 // pred_check
          %p588 = pneg %p232
        $region102: #{tpu_custom_call.1} parent=83 // pred_check_branch
          %590 = sbr.rel (%p588) target = $region104
        $region103: #{tpu_custom_call.1} parent=83 // pred_region
          %591 = dma.done [#allocation9], 1024
        $region104: #{tpu_custom_call.1} parent=83 // pred_fallthru
          _
        // Predicated region
        $region105: #{tpu_custom_call.1} parent=83 // pred_check
          %p592 = pneg %p316
        $region106: #{tpu_custom_call.1} parent=83 // pred_check_branch
          %594 = sbr.rel (%p592) target = $region108
        $region107: #{tpu_custom_call.1} parent=83 // pred_region
          %595 = dma.done [#allocation12], 1024
        $region108: #{tpu_custom_call.1} parent=83 // pred_fallthru
          _
        // Predicated region
        $region109: #{tpu_custom_call.1} parent=83 // pred_check
          %p596 = pneg %p358
        $region110: #{tpu_custom_call.1} parent=83 // pred_check_branch
          %598 = sbr.rel (%p596) target = $region112
        $region111: #{tpu_custom_call.1} parent=83 // pred_region
          %599 = dma.done [#allocation12], 1024
        $region112: #{tpu_custom_call.1} parent=83 // pred_fallthru
          _
        %s600 = sand.u32 %s46, 1
        %s601 = scalar_lea.sflag [#allocation3], %s600
        %s602 = sand.u32 %s46, 1
        %s603 = smul.addr %s602, 8
        %s604 = scalar_lea.vmem [#allocation2], %s603
        %p605 = pneg %p59
        %p606 = pneg %p56
        %s607 = sand.u32 %s38, 1
        %s608 = scalar_lea.sflag [#allocation6], %s607
        %s609 = sand.u32 %s72, 1
        %s610 = smul.addr %s609, 16
        %s611 = scalar_lea.vmem [#allocation5], %s610
        %p612 = pneg %p85
        %p613 = pneg %p82
        %p614 = pneg %p106
        %p615 = pneg %p103
        %p616 = pneg %p127
        %p617 = pneg %p124
        %p618 = pneg %p148
        %p619 = pneg %p145
        %p620 = pneg %p169
        %p621 = pneg %p166
        %p622 = pneg %p190
        %p623 = pneg %p187
        %p624 = pneg %p211
        %p625 = pneg %p208
        %p626 = pneg %p232
        %p627 = pneg %p229
        %p628 = pneg %p253
        %p629 = pneg %p250
        %p630 = pneg %p274
        %p631 = pneg %p271
        %p632 = pneg %p295
        %p633 = pneg %p292
        %p634 = pneg %p316
        %p635 = pneg %p313
        %p636 = pneg %p337
        %p637 = pneg %p334
        %p638 = pneg %p358
        %p639 = pneg %p355
        %p640 = pneg %p379
        %p641 = pneg %p376
        %p642 = pneg %p405
        %p643 = pneg %p402
        %s644 = sand.u32 %s392, 1
        %s645 = scalar_lea.sflag [#allocation4], %s644
        %s646 = sand.u32 %s392, 1
        %s647 = smul.addr %s646, 8
        %s648 = scalar_lea.vmem [#allocation14], %s647
        %v650 = vld [vmem:[%s566] sm:$0xff]
        %v651 = vld [vmem:[%s575] sm:$0xff]
        %v652 = vld [vmem:[%s575 + $0x8] sm:$0xff]
        %v653 = vld [vmem:[%s2] sm:$0x1]
        %v654 = vld [vmem:[%s3] sm:$0x1]
        %655 = vadd.xlane.f32.xlu0 %v650
        %v656 = vpop.xlane.xlu0 %655
        %v657 = vrcp.pop 128.0
        %v658 = vmul.f32 %v656, %v657
        %v659 = vsub.f32 %v650, %v658
        %v660 = vmul.f32 %v659, %v659
        %661 = vadd.xlane.f32.xlu0 %v660
        %v662 = vpop.xlane.xlu0 %661
        %v663 = vmul.f32 %v662, %v657
        %v664 = vadd.f32 %v663, 1e-05
        %v665 = vrsqrt.pop %v664
        %v666 = vmul.f32 %v659, %v665
        %v668 = vlaneseq
        %v669 = vshrl.u32 %v668, 7
        %v670 = vsub.s32 0, %v669
        %v671 = vrot.slane %v653, %v670
        %v673 = vmul.f32 %v666, %v671
        %v675 = vlaneseq
        %v676 = vshrl.u32 %v675, 7
        %v677 = vsub.s32 0, %v676
        %v678 = vrot.slane %v654, %v677
        %v680 = vadd.f32 %v673, %v678
        %v681 = vpack.c.bf16 %v680, %v680
        %v682 = vld [vmem:[#allocation7] sm:$0xf]
        %v683 = vld [vmem:[#allocation7 + $0x4] sm:$0xf]
        %v684 = vld [vmem:[#allocation7 + $0x8] sm:$0xf]
        %v685 = vld [vmem:[#allocation7 + $0xc] sm:$0xf]
        %v686 = vld [vmem:[#allocation7 + $0x10] sm:$0xf]
        %v687 = vld [vmem:[#allocation7 + $0x14] sm:$0xf]
        %v688 = vld [vmem:[#allocation7 + $0x18] sm:$0xf]
        %v689 = vld [vmem:[#allocation7 + $0x1c] sm:$0xf]
        %v690 = vld [vmem:[#allocation7 + $0x20] sm:$0xf]
        %v691 = vld [vmem:[#allocation7 + $0x24] sm:$0xf]
        %v692 = vld [vmem:[#allocation7 + $0x28] sm:$0xf]
        %v693 = vld [vmem:[#allocation7 + $0x2c] sm:$0xf]
        %v694 = vld [vmem:[#allocation7 + $0x30] sm:$0xf]
        %v695 = vld [vmem:[#allocation7 + $0x34] sm:$0xf]
        %v696 = vld [vmem:[#allocation7 + $0x38] sm:$0xf]
        %v697 = vld [vmem:[#allocation7 + $0x3c] sm:$0xf]
        %v698 = vld [vmem:[%s5] sm:$0x1]
        %v700 = vlaneseq
        %v701 = vshrl.u32 %v700, 7
        %v702 = vsub.s32 0, %v701
        %v703 = vrot.slane %v698, %v702
        %v721 = vunpack.c.l.b16 %v682
        %v722 = vunpack.c.l.b16 %v683
        %v723 = vunpack.c.l.b16 %v684
        %v724 = vunpack.c.l.b16 %v685
        %v725 = vunpack.c.l.b16 %v686
        %v726 = vunpack.c.l.b16 %v687
        %v727 = vunpack.c.l.b16 %v688
        %v728 = vunpack.c.l.b16 %v689
        %v729 = vunpack.c.l.b16 %v690
        %v730 = vunpack.c.l.b16 %v691
        %v731 = vunpack.c.l.b16 %v692
        %v732 = vunpack.c.l.b16 %v693
        %v733 = vunpack.c.l.b16 %v694
        %v734 = vunpack.c.l.b16 %v695
        %v735 = vunpack.c.l.b16 %v696
        %v736 = vunpack.c.l.b16 %v697
        %v737 = vpack.c.b16 %v722, %v721
        %v738 = vpack.c.b16 %v724, %v723
        %v739 = vpack.c.b16 %v726, %v725
        %v740 = vpack.c.b16 %v728, %v727
        %v741 = vpack.c.b16 %v730, %v729
        %v742 = vpack.c.b16 %v732, %v731
        %v743 = vpack.c.b16 %v734, %v733
        %v744 = vpack.c.b16 %v736, %v735
        %753 = vmatprep.subr.bf16.mxu0 0
        %754 = vmatpush1.bf16.msra.mxu0 %v737
        %755 = vmatprep.subr.bf16.mxu0 0
        %756 = vmatpush1.bf16.msra.mxu0 %v738
        %757 = vmatprep.subr.bf16.mxu0 0
        %758 = vmatpush1.bf16.msra.mxu0 %v739
        %759 = vmatprep.subr.bf16.mxu0 0
        %760 = vmatpush1.bf16.msra.mxu0 %v740
        %761 = vmatprep.subr.bf16.mxu0 0
        %762 = vmatpush1.bf16.msra.mxu0 %v741
        %763 = vmatprep.subr.bf16.mxu0 0
        %764 = vmatpush1.bf16.msra.mxu0 %v742
        %765 = vmatprep.subr.bf16.mxu0 0
        %766 = vmatpush1.bf16.msra.mxu0 %v743
        %767 = vmatprep.subr.bf16.mxu0 0
        %768 = vmatpush1.bf16.msra.mxu0 %v744
        %769 = vmatprep.subr.bf16.mxu0 0
        %770 = vmatpush1.bf16.msra.mxu0 0
        %771 = vmatprep.subr.bf16.mxu0 0
        %772 = vmatpush1.bf16.msra.mxu0 0
        %773 = vmatprep.subr.bf16.mxu0 0
        %774 = vmatpush1.bf16.msra.mxu0 0
        %775 = vmatprep.subr.bf16.mxu0 0
        %776 = vmatpush1.bf16.msra.mxu0 0
        %777 = vmatprep.subr.bf16.mxu0 0
        %778 = vmatpush1.bf16.msra.mxu0 0
        %779 = vmatprep.subr.bf16.mxu0 0
        %780 = vmatpush1.bf16.msra.mxu0 0
        %781 = vmatprep.subr.bf16.mxu0 0
        %782 = vmatpush1.bf16.msra.mxu0 0
        %783 = vmatprep.subr.bf16.mxu0 0
        %784 = vmatpush1.bf16.msra.mxu0 0
        %785 = vmatprep.mubr.bf16.mxu0 0
        %786 = vmatmul.mubr.bf16.gmra.mrb[0].mxu0 %v681
        %v787 = vpop.f32.mrb[0].mxu0
        %v788 = vadd.f32 %v703, %v787
        %v789 = vpop.f32.mrb[0].mxu0
        %v790 = vpop.f32.mrb[0].mxu0
        %v791 = vpop.f32.mrb[0].mxu0
        %792 = vdwg.mxu0
        %v793 = vmul.f32 %v788, 0.17677669
        %v794 = vpack.c.bf16 %v652, %v651
        %v795 = vld [vmem:[#allocation8] sm:$0xff]
        %v796 = vld [vmem:[#allocation8 + $0x8] sm:$0xff]
        %v797 = vld [vmem:[#allocation8 + $0x10] sm:$0xff]
        %v798 = vld [vmem:[#allocation8 + $0x18] sm:$0xff]
        %v799 = vld [vmem:[#allocation8 + $0x20] sm:$0xff]
        %v800 = vld [vmem:[#allocation8 + $0x28] sm:$0xff]
        %v801 = vld [vmem:[#allocation8 + $0x30] sm:$0xff]
        %v802 = vld [vmem:[#allocation8 + $0x38] sm:$0xff]
        %v803 = vld [vmem:[#allocation8 + $0x40] sm:$0xff]
        %v804 = vld [vmem:[#allocation8 + $0x48] sm:$0xff]
        %v805 = vld [vmem:[#allocation8 + $0x50] sm:$0xff]
        %v806 = vld [vmem:[#allocation8 + $0x58] sm:$0xff]
        %v807 = vld [vmem:[#allocation8 + $0x60] sm:$0xff]
        %v808 = vld [vmem:[#allocation8 + $0x68] sm:$0xff]
        %v809 = vld [vmem:[#allocation8 + $0x70] sm:$0xff]
        %v810 = vld [vmem:[#allocation8 + $0x78] sm:$0xff]
        %v811 = vld [vmem:[%s7] sm:$0x3]
        %v813 = vlaneseq
        %v814 = vshrl.u32 %v813, 7
        %v815 = vsub.s32 0, %v814
        %v816 = vrot.slane %v811, %v815
        %v817 = vlaneseq
        %v818 = vshrl.u32 %v817, 7
        %v819 = vsub.s32 1, %v818
        %v820 = vrot.slane %v811, %v819
        %v839 = vunpack.c.l.b16 %v795
        %v840 = vunpack.c.h.b16 %v795
        %v841 = vunpack.c.l.b16 %v796
        %v842 = vunpack.c.h.b16 %v796
        %v843 = vunpack.c.l.b16 %v797
        %v844 = vunpack.c.h.b16 %v797
        %v845 = vunpack.c.l.b16 %v798
        %v846 = vunpack.c.h.b16 %v798
        %v847 = vunpack.c.l.b16 %v799
        %v848 = vunpack.c.h.b16 %v799
        %v849 = vunpack.c.l.b16 %v800
        %v850 = vunpack.c.h.b16 %v800
        %v851 = vunpack.c.l.b16 %v801
        %v852 = vunpack.c.h.b16 %v801
        %v853 = vunpack.c.l.b16 %v802
        %v854 = vunpack.c.h.b16 %v802
        %v855 = vunpack.c.l.b16 %v803
        %v856 = vunpack.c.h.b16 %v803
        %v857 = vunpack.c.l.b16 %v804
        %v858 = vunpack.c.h.b16 %v804
        %v859 = vunpack.c.l.b16 %v805
        %v860 = vunpack.c.h.b16 %v805
        %v861 = vunpack.c.l.b16 %v806
        %v862 = vunpack.c.h.b16 %v806
        %v863 = vunpack.c.l.b16 %v807
        %v864 = vunpack.c.h.b16 %v807
        %v865 = vunpack.c.l.b16 %v808
        %v866 = vunpack.c.h.b16 %v808
        %v867 = vunpack.c.l.b16 %v809
        %v868 = vunpack.c.h.b16 %v809
        %v869 = vunpack.c.l.b16 %v810
        %v870 = vunpack.c.h.b16 %v810
        %v871 = vpack.c.b16 %v841, %v839
        %v872 = vpack.c.b16 %v842, %v840
        %v873 = vpack.c.b16 %v845, %v843
        %v874 = vpack.c.b16 %v846, %v844
        %v875 = vpack.c.b16 %v849, %v847
        %v876 = vpack.c.b16 %v850, %v848
        %v877 = vpack.c.b16 %v853, %v851
        %v878 = vpack.c.b16 %v854, %v852
        %v879 = vpack.c.b16 %v857, %v855
        %v880 = vpack.c.b16 %v858, %v856
        %v881 = vpack.c.b16 %v861, %v859
        %v882 = vpack.c.b16 %v862, %v860
        %v883 = vpack.c.b16 %v865, %v863
        %v884 = vpack.c.b16 %v866, %v864
        %v885 = vpack.c.b16 %v869, %v867
        %v886 = vpack.c.b16 %v870, %v868
        %903 = vmatprep.subr.bf16.mxu0 %v872
        %904 = vmatpush1.bf16.msra.mxu0 %v871
        %905 = vmatprep.subr.bf16.mxu0 %v874
        %906 = vmatpush1.bf16.msra.mxu0 %v873
        %907 = vmatprep.subr.bf16.mxu0 %v876
        %908 = vmatpush1.bf16.msra.mxu0 %v875
        %909 = vmatprep.subr.bf16.mxu0 %v878
        %910 = vmatpush1.bf16.msra.mxu0 %v877
        %911 = vmatprep.subr.bf16.mxu0 %v880
        %912 = vmatpush1.bf16.msra.mxu0 %v879
        %913 = vmatprep.subr.bf16.mxu0 %v882
        %914 = vmatpush1.bf16.msra.mxu0 %v881
        %915 = vmatprep.subr.bf16.mxu0 %v884
        %916 = vmatpush1.bf16.msra.mxu0 %v883
        %917 = vmatprep.subr.bf16.mxu0 %v886
        %918 = vmatpush1.bf16.msra.mxu0 %v885
        %919 = vmatprep.subr.bf16.mxu0 0
        %920 = vmatpush1.bf16.msra.mxu0 0
        %921 = vmatprep.subr.bf16.mxu0 0
        %922 = vmatpush1.bf16.msra.mxu0 0
        %923 = vmatprep.subr.bf16.mxu0 0
        %924 = vmatpush1.bf16.msra.mxu0 0
        %925 = vmatprep.subr.bf16.mxu0 0
        %926 = vmatpush1.bf16.msra.mxu0 0
        %927 = vmatprep.subr.bf16.mxu0 0
        %928 = vmatpush1.bf16.msra.mxu0 0
        %929 = vmatprep.subr.bf16.mxu0 0
        %930 = vmatpush1.bf16.msra.mxu0 0
        %931 = vmatprep.subr.bf16.mxu0 0
        %932 = vmatpush1.bf16.msra.mxu0 0
        %933 = vmatprep.subr.bf16.mxu0 0
        %934 = vmatpush1.bf16.msra.mxu0 0
        %935 = vmatprep.mubr.bf16.mxu0 0
        %936 = vmatmul.mubr.bf16.gmra.mrb[0].mxu0 %v794
        %v937 = vpop.f32.mrb[0].mxu0
        %v938 = vadd.f32 %v816, %v937
        %v939 = vpop.f32.mrb[0].mxu0
        %v940 = vadd.f32 %v820, %v939
        %v941 = vpop.f32.mrb[0].mxu0
        %v942 = vadd.f32 %v816, %v941
        %v943 = vpop.f32.mrb[0].mxu0
        %v944 = vadd.f32 %v820, %v943
        %945 = vdwg.mxu0
        %v946 = vpack.c.bf16 %v793, %v793
        %v947 = vpack.c.bf16 %v942, %v938
        %v948 = vpack.c.bf16 %v944, %v940
        %vm949 = vcmask 261120
        %v951 = vsel %vm949, %v946, 0
        %v954 = vsel %vm949, %v947, 0
        %956 = vmatprep.subr.bf16.mxu0 0
        %957 = vmatpush1.bf16.xpose.msra.mxu0 %v954
        %958 = vmatprep.subr.bf16.mxu0 0
        %959 = vmatpush1.bf16.xpose.msra.mxu0 0
        %960 = vmatprep.subr.bf16.mxu0 0
        %961 = vmatpush1.bf16.xpose.msra.mxu0 0
        %962 = vmatprep.subr.bf16.mxu0 0
        %963 = vmatpush1.bf16.xpose.msra.mxu0 0
        %964 = vmatprep.subr.bf16.mxu0 0
        %965 = vmatpush1.bf16.xpose.msra.mxu0 0
        %966 = vmatprep.subr.bf16.mxu0 0
        %967 = vmatpush1.bf16.xpose.msra.mxu0 0
        %968 = vmatprep.subr.bf16.mxu0 0
        %969 = vmatpush1.bf16.xpose.msra.mxu0 0
        %970 = vmatprep.subr.bf16.mxu0 0
        %971 = vmatpush1.bf16.xpose.msra.mxu0 0
        %972 = vmatprep.subr.bf16.mxu0 0
        %973 = vmatpush1.bf16.xpose.msra.mxu0 0
        %974 = vmatprep.subr.bf16.mxu0 0
        %975 = vmatpush1.bf16.xpose.msra.mxu0 0
        %976 = vmatprep.subr.bf16.mxu0 0
        %977 = vmatpush1.bf16.xpose.msra.mxu0 0
        %978 = vmatprep.subr.bf16.mxu0 0
        %979 = vmatpush1.bf16.xpose.msra.mxu0 0
        %980 = vmatprep.subr.bf16.mxu0 0
        %981 = vmatpush1.bf16.xpose.msra.mxu0 0
        %982 = vmatprep.subr.bf16.mxu0 0
        %983 = vmatpush1.bf16.xpose.msra.mxu0 0
        %984 = vmatprep.subr.bf16.mxu0 0
        %985 = vmatpush1.bf16.xpose.msra.mxu0 0
        %986 = vmatprep.subr.bf16.mxu0 0
        %987 = vmatpush1.bf16.xpose.msra.mxu0 0
        %988 = vmatprep.mubr.bf16.mxu0 0
        %989 = vmatmul.mubr.bf16.gmra.mrb[0].mxu0 %v951
        %v990 = vpop.f32.mrb[0].mxu0
        %v991 = vadd.f32 0.0, %v990
        %v992 = vpop.f32.mrb[0].mxu0
        %v993 = vpop.f32.mrb[0].mxu0
        %v994 = vpop.f32.mrb[0].mxu0
        %995 = vdwg.mxu0
        %vm996 = vcmask 130048
        %v997 = vsel %vm996, %v991, -inf
        %998 = vmax.xlane.f32.xlu0 %v997
        %v999 = vpop.xlane.xlu0 %998
        %v1000 = vsub.f32 %v991, %v999
        %v1001 = vmul.f32 %v1000, 1.442695
        %v1002 = vpow.pop %v1001
        %v1003 = vsel %vm996, %v1002, 0.0
        %1004 = vadd.xlane.f32.xlu0 %v1003
        %v1005 = vpop.xlane.xlu0 %1004
        %v1006 = vrcp.pop %v1005
        %v1007 = vmul.f32 %v1002, %v1006
        %v1008 = vpack.c.bf16 %v1007, %v1007
        %v1010 = vsel %vm996, %v1008, 0
        %1012 = vmatprep.subr.bf16.mxu0 0
        %1013 = vmatpush1.bf16.msra.mxu0 %v948
        %1014 = vmatprep.subr.bf16.mxu0 0
        %1015 = vmatpush1.bf16.msra.mxu0 0
        %1016 = vmatprep.subr.bf16.mxu0 0
        %1017 = vmatpush1.bf16.msra.mxu0 0
        %1018 = vmatprep.subr.bf16.mxu0 0
        %1019 = vmatpush1.bf16.msra.mxu0 0
        %1020 = vmatprep.subr.bf16.mxu0 0
        %1021 = vmatpush1.bf16.msra.mxu0 0
        %1022 = vmatprep.subr.bf16.mxu0 0
        %1023 = vmatpush1.bf16.msra.mxu0 0
        %1024 = vmatprep.subr.bf16.mxu0 0
        %1025 = vmatpush1.bf16.msra.mxu0 0
        %1026 = vmatprep.subr.bf16.mxu0 0
        %1027 = vmatpush1.bf16.msra.mxu0 0
        %1028 = vmatprep.subr.bf16.mxu0 0
        %1029 = vmatpush1.bf16.msra.mxu0 0
        %1030 = vmatprep.subr.bf16.mxu0 0
        %1031 = vmatpush1.bf16.msra.mxu0 0
        %1032 = vmatprep.subr.bf16.mxu0 0
        %1033 = vmatpush1.bf16.msra.mxu0 0
        %1034 = vmatprep.subr.bf16.mxu0 0
        %1035 = vmatpush1.bf16.msra.mxu0 0
        %1036 = vmatprep.subr.bf16.mxu0 0
        %1037 = vmatpush1.bf16.msra.mxu0 0
        %1038 = vmatprep.subr.bf16.mxu0 0
        %1039 = vmatpush1.bf16.msra.mxu0 0
        %1040 = vmatprep.subr.bf16.mxu0 0
        %1041 = vmatpush1.bf16.msra.mxu0 0
        %1042 = vmatprep.subr.bf16.mxu0 0
        %1043 = vmatpush1.bf16.msra.mxu0 0
        %1044 = vmatprep.mubr.bf16.mxu0 0
        %1045 = vmatmul.mubr.bf16.gmra.mrb[0].mxu0 %v1010
        %v1046 = vpop.f32.mrb[0].mxu0
        %v1047 = vadd.f32 0.0, %v1046
        %v1048 = vpop.f32.mrb[0].mxu0
        %v1049 = vpop.f32.mrb[0].mxu0
        %v1050 = vpop.f32.mrb[0].mxu0
        %1051 = vdwg.mxu0
        %1053 = vrot.lane.b32.xlu0 %v946, 96
        %v1054 = vpop.permute.xlu0 %1053
        %1056 = vrot.lane.b32.xlu0 %v947, 96
        %v1057 = vpop.permute.xlu0 %1056
        %v1059 = vsel %vm949, %v1054, 0
        %v1062 = vsel %vm949, %v1057, 0
        %1064 = vmatprep.subr.bf16.mxu0 0
        %1065 = vmatpush1.bf16.xpose.msra.mxu0 %v1062
        %1066 = vmatprep.subr.bf16.mxu0 0
        %1067 = vmatpush1.bf16.xpose.msra.mxu0 0
        %1068 = vmatprep.subr.bf16.mxu0 0
        %1069 = vmatpush1.bf16.xpose.msra.mxu0 0
        %1070 = vmatprep.subr.bf16.mxu0 0
        %1071 = vmatpush1.bf16.xpose.msra.mxu0 0
        %1072 = vmatprep.subr.bf16.mxu0 0
        %1073 = vmatpush1.bf16.xpose.msra.mxu0 0
        %1074 = vmatprep.subr.bf16.mxu0 0
        %1075 = vmatpush1.bf16.xpose.msra.mxu0 0
        %1076 = vmatprep.subr.bf16.mxu0 0
        %1077 = vmatpush1.bf16.xpose.msra.mxu0 0
        %1078 = vmatprep.subr.bf16.mxu0 0
        %1079 = vmatpush1.bf16.xpose.msra.mxu0 0
        %1080 = vmatprep.subr.bf16.mxu0 0
        %1081 = vmatpush1.bf16.xpose.msra.mxu0 0
        %1082 = vmatprep.subr.bf16.mxu0 0
        %1083 = vmatpush1.bf16.xpose.msra.mxu0 0
        %1084 = vmatprep.subr.bf16.mxu0 0
        %1085 = vmatpush1.bf16.xpose.msra.mxu0 0
        %1086 = vmatprep.subr.bf16.mxu0 0
        %1087 = vmatpush1.bf16.xpose.msra.mxu0 0
        %1088 = vmatprep.subr.bf16.mxu0 0
        %1089 = vmatpush1.bf16.xpose.msra.mxu0 0
        %1090 = vmatprep.subr.bf16.mxu0 0
        %1091 = vmatpush1.bf16.xpose.msra.mxu0 0
        %1092 = vmatprep.subr.bf16.mxu0 0
        %1093 = vmatpush1.bf16.xpose.msra.mxu0 0
        %1094 = vmatprep.subr.bf16.mxu0 0
        %1095 = vmatpush1.bf16.xpose.msra.mxu0 0
        %1096 = vmatprep.mubr.bf16.mxu0 0
        %1097 = vmatmul.mubr.bf16.gmra.mrb[0].mxu0 %v1059
        %v1098 = vpop.f32.mrb[0].mxu0
        %v1099 = vadd.f32 0.0, %v1098
        %v1100 = vpop.f32.mrb[0].mxu0
        %v1101 = vpop.f32.mrb[0].mxu0
        %v1102 = vpop.f32.mrb[0].mxu0
        %1103 = vdwg.mxu0
        %v1104 = vsel %vm996, %v1099, -inf
        %1105 = vmax.xlane.f32.xlu0 %v1104
        %v1106 = vpop.xlane.xlu0 %1105
        %v1107 = vsub.f32 %v1099, %v1106
        %v1108 = vmul.f32 %v1107, 1.442695
        %v1109 = vpow.pop %v1108
        %v1110 = vsel %vm996, %v1109, 0.0
        %1111 = vadd.xlane.f32.xlu0 %v1110
        %v1112 = vpop.xlane.xlu0 %1111
        %v1113 = vrcp.pop %v1112
        %v1114 = vmul.f32 %v1109, %v1113
        %v1115 = vpack.c.bf16 %v1114, %v1114
        %1117 = vrot.lane.b32.xlu0 %v948, 96
        %v1118 = vpop.permute.xlu0 %1117
        %v1121 = vsel %vm996, %v1115, 0
        %1123 = vmatprep.subr.bf16.mxu0 0
        %1124 = vmatpush1.bf16.msra.mxu0 %v1118
        %1125 = vmatprep.subr.bf16.mxu0 0
        %1126 = vmatpush1.bf16.msra.mxu0 0
        %1127 = vmatprep.subr.bf16.mxu0 0
        %1128 = vmatpush1.bf16.msra.mxu0 0
        %1129 = vmatprep.subr.bf16.mxu0 0
        %1130 = vmatpush1.bf16.msra.mxu0 0
        %1131 = vmatprep.subr.bf16.mxu0 0
        %1132 = vmatpush1.bf16.msra.mxu0 0
        %1133 = vmatprep.subr.bf16.mxu0 0
        %1134 = vmatpush1.bf16.msra.mxu0 0
        %1135 = vmatprep.subr.bf16.mxu0 0
        %1136 = vmatpush1.bf16.msra.mxu0 0
        %1137 = vmatprep.subr.bf16.mxu0 0
        %1138 = vmatpush1.bf16.msra.mxu0 0
        %1139 = vmatprep.subr.bf16.mxu0 0
        %1140 = vmatpush1.bf16.msra.mxu0 0
        %1141 = vmatprep.subr.bf16.mxu0 0
        %1142 = vmatpush1.bf16.msra.mxu0 0
        %1143 = vmatprep.subr.bf16.mxu0 0
        %1144 = vmatpush1.bf16.msra.mxu0 0
        %1145 = vmatprep.subr.bf16.mxu0 0
        %1146 = vmatpush1.bf16.msra.mxu0 0
        %1147 = vmatprep.subr.bf16.mxu0 0
        %1148 = vmatpush1.bf16.msra.mxu0 0
        %1149 = vmatprep.subr.bf16.mxu0 0
        %1150 = vmatpush1.bf16.msra.mxu0 0
        %1151 = vmatprep.subr.bf16.mxu0 0
        %1152 = vmatpush1.bf16.msra.mxu0 0
        %1153 = vmatprep.subr.bf16.mxu0 0
        %1154 = vmatpush1.bf16.msra.mxu0 0
        %1155 = vmatprep.mubr.bf16.mxu0 0
        %1156 = vmatmul.mubr.bf16.gmra.mrb[0].mxu0 %v1121
        %v1157 = vpop.f32.mrb[0].mxu0
        %v1158 = vadd.f32 0.0, %v1157
        %v1159 = vpop.f32.mrb[0].mxu0
        %v1160 = vpop.f32.mrb[0].mxu0
        %v1161 = vpop.f32.mrb[0].mxu0
        %1162 = vdwg.mxu0
        %1163 = vrot.lane.b32.xlu0 %v946, 64
        %v1164 = vpop.permute.xlu0 %1163
        %1165 = vrot.lane.b32.xlu0 %v947, 64
        %v1166 = vpop.permute.xlu0 %1165
        %v1168 = vsel %vm949, %v1164, 0
        %v1171 = vsel %vm949, %v1166, 0
        %1173 = vmatprep.subr.bf16.mxu0 0
        %1174 = vmatpush1.bf16.xpose.msra.mxu0 %v1171
        %1175 = vmatprep.subr.bf16.mxu0 0
        %1176 = vmatpush1.bf16.xpose.msra.mxu0 0
        %1177 = vmatprep.subr.bf16.mxu0 0
        %1178 = vmatpush1.bf16.xpose.msra.mxu0 0
        %1179 = vmatprep.subr.bf16.mxu0 0
        %1180 = vmatpush1.bf16.xpose.msra.mxu0 0
        %1181 = vmatprep.subr.bf16.mxu0 0
        %1182 = vmatpush1.bf16.xpose.msra.mxu0 0
        %1183 = vmatprep.subr.bf16.mxu0 0
        %1184 = vmatpush1.bf16.xpose.msra.mxu0 0
        %1185 = vmatprep.subr.bf16.mxu0 0
        %1186 = vmatpush1.bf16.xpose.msra.mxu0 0
        %1187 = vmatprep.subr.bf16.mxu0 0
        %1188 = vmatpush1.bf16.xpose.msra.mxu0 0
        %1189 = vmatprep.subr.bf16.mxu0 0
        %1190 = vmatpush1.bf16.xpose.msra.mxu0 0
        %1191 = vmatprep.subr.bf16.mxu0 0
        %1192 = vmatpush1.bf16.xpose.msra.mxu0 0
        %1193 = vmatprep.subr.bf16.mxu0 0
        %1194 = vmatpush1.bf16.xpose.msra.mxu0 0
        %1195 = vmatprep.subr.bf16.mxu0 0
        %1196 = vmatpush1.bf16.xpose.msra.mxu0 0
        %1197 = vmatprep.subr.bf16.mxu0 0
        %1198 = vmatpush1.bf16.xpose.msra.mxu0 0
        %1199 = vmatprep.subr.bf16.mxu0 0
        %1200 = vmatpush1.bf16.xpose.msra.mxu0 0
        %1201 = vmatprep.subr.bf16.mxu0 0
        %1202 = vmatpush1.bf16.xpose.msra.mxu0 0
        %1203 = vmatprep.subr.bf16.mxu0 0
        %1204 = vmatpush1.bf16.xpose.msra.mxu0 0
        %1205 = vmatprep.mubr.bf16.mxu0 0
        %1206 = vmatmul.mubr.bf16.gmra.mrb[0].mxu0 %v1168
        %v1207 = vpop.f32.mrb[0].mxu0
        %v1208 = vadd.f32 0.0, %v1207
        %v1209 = vpop.f32.mrb[0].mxu0
        %v1210 = vpop.f32.mrb[0].mxu0
        %v1211 = vpop.f32.mrb[0].mxu0
        %1212 = vdwg.mxu0
        %v1213 = vsel %vm996, %v1208, -inf
        %1214 = vmax.xlane.f32.xlu0 %v1213
        %v1215 = vpop.xlane.xlu0 %1214
        %v1216 = vsub.f32 %v1208, %v1215
        %v1217 = vmul.f32 %v1216, 1.442695
        %v1218 = vpow.pop %v1217
        %v1219 = vsel %vm996, %v1218, 0.0
        %1220 = vadd.xlane.f32.xlu0 %v1219
        %v1221 = vpop.xlane.xlu0 %1220
        %v1222 = vrcp.pop %v1221
        %v1223 = vmul.f32 %v1218, %v1222
        %v1224 = vpack.c.bf16 %v1223, %v1223
        %1225 = vrot.lane.b32.xlu0 %v948, 64
        %v1226 = vpop.permute.xlu0 %1225
        %v1229 = vsel %vm996, %v1224, 0
        %1231 = vmatprep.subr.bf16.mxu0 0
        %1232 = vmatpush1.bf16.msra.mxu0 %v1226
        %1233 = vmatprep.subr.bf16.mxu0 0
        %1234 = vmatpush1.bf16.msra.mxu0 0
        %1235 = vmatprep.subr.bf16.mxu0 0
        %1236 = vmatpush1.bf16.msra.mxu0 0
        %1237 = vmatprep.subr.bf16.mxu0 0
        %1238 = vmatpush1.bf16.msra.mxu0 0
        %1239 = vmatprep.subr.bf16.mxu0 0
        %1240 = vmatpush1.bf16.msra.mxu0 0
        %1241 = vmatprep.subr.bf16.mxu0 0
        %1242 = vmatpush1.bf16.msra.mxu0 0
        %1243 = vmatprep.subr.bf16.mxu0 0
        %1244 = vmatpush1.bf16.msra.mxu0 0
        %1245 = vmatprep.subr.bf16.mxu0 0
        %1246 = vmatpush1.bf16.msra.mxu0 0
        %1247 = vmatprep.subr.bf16.mxu0 0
        %1248 = vmatpush1.bf16.msra.mxu0 0
        %1249 = vmatprep.subr.bf16.mxu0 0
        %1250 = vmatpush1.bf16.msra.mxu0 0
        %1251 = vmatprep.subr.bf16.mxu0 0
        %1252 = vmatpush1.bf16.msra.mxu0 0
        %1253 = vmatprep.subr.bf16.mxu0 0
        %1254 = vmatpush1.bf16.msra.mxu0 0
        %1255 = vmatprep.subr.bf16.mxu0 0
        %1256 = vmatpush1.bf16.msra.mxu0 0
        %1257 = vmatprep.subr.bf16.mxu0 0
        %1258 = vmatpush1.bf16.msra.mxu0 0
        %1259 = vmatprep.subr.bf16.mxu0 0
        %1260 = vmatpush1.bf16.msra.mxu0 0
        %1261 = vmatprep.subr.bf16.mxu0 0
        %1262 = vmatpush1.bf16.msra.mxu0 0
        %1263 = vmatprep.mubr.bf16.mxu0 0
        %1264 = vmatmul.mubr.bf16.gmra.mrb[0].mxu0 %v1229
        %v1265 = vpop.f32.mrb[0].mxu0
        %v1266 = vadd.f32 0.0, %v1265
        %v1267 = vpop.f32.mrb[0].mxu0
        %v1268 = vpop.f32.mrb[0].mxu0
        %v1269 = vpop.f32.mrb[0].mxu0
        %1270 = vdwg.mxu0
        %1271 = vrot.lane.b32.xlu0 %v946, 32
        %v1272 = vpop.permute.xlu0 %1271
        %1273 = vrot.lane.b32.xlu0 %v947, 32
        %v1274 = vpop.permute.xlu0 %1273
        %v1276 = vsel %vm949, %v1272, 0
        %v1279 = vsel %vm949, %v1274, 0
        %1281 = vmatprep.subr.bf16.mxu0 0
        %1282 = vmatpush1.bf16.xpose.msra.mxu0 %v1279
        %1283 = vmatprep.subr.bf16.mxu0 0
        %1284 = vmatpush1.bf16.xpose.msra.mxu0 0
        %1285 = vmatprep.subr.bf16.mxu0 0
        %1286 = vmatpush1.bf16.xpose.msra.mxu0 0
        %1287 = vmatprep.subr.bf16.mxu0 0
        %1288 = vmatpush1.bf16.xpose.msra.mxu0 0
        %1289 = vmatprep.subr.bf16.mxu0 0
        %1290 = vmatpush1.bf16.xpose.msra.mxu0 0
        %1291 = vmatprep.subr.bf16.mxu0 0
        %1292 = vmatpush1.bf16.xpose.msra.mxu0 0
        %1293 = vmatprep.subr.bf16.mxu0 0
        %1294 = vmatpush1.bf16.xpose.msra.mxu0 0
        %1295 = vmatprep.subr.bf16.mxu0 0
        %1296 = vmatpush1.bf16.xpose.msra.mxu0 0
        %1297 = vmatprep.subr.bf16.mxu0 0
        %1298 = vmatpush1.bf16.xpose.msra.mxu0 0
        %1299 = vmatprep.subr.bf16.mxu0 0
        %1300 = vmatpush1.bf16.xpose.msra.mxu0 0
        %1301 = vmatprep.subr.bf16.mxu0 0
        %1302 = vmatpush1.bf16.xpose.msra.mxu0 0
        %1303 = vmatprep.subr.bf16.mxu0 0
        %1304 = vmatpush1.bf16.xpose.msra.mxu0 0
        %1305 = vmatprep.subr.bf16.mxu0 0
        %1306 = vmatpush1.bf16.xpose.msra.mxu0 0
        %1307 = vmatprep.subr.bf16.mxu0 0
        %1308 = vmatpush1.bf16.xpose.msra.mxu0 0
        %1309 = vmatprep.subr.bf16.mxu0 0
        %1310 = vmatpush1.bf16.xpose.msra.mxu0 0
        %1311 = vmatprep.subr.bf16.mxu0 0
        %1312 = vmatpush1.bf16.xpose.msra.mxu0 0
        %1313 = vmatprep.mubr.bf16.mxu0 0
        %1314 = vmatmul.mubr.bf16.gmra.mrb[0].mxu0 %v1276
        %v1315 = vpop.f32.mrb[0].mxu0
        %v1316 = vadd.f32 0.0, %v1315
        %v1317 = vpop.f32.mrb[0].mxu0
        %v1318 = vpop.f32.mrb[0].mxu0
        %v1319 = vpop.f32.mrb[0].mxu0
        %1320 = vdwg.mxu0
        %v1321 = vsel %vm996, %v1316, -inf
        %1322 = vmax.xlane.f32.xlu0 %v1321
        %v1323 = vpop.xlane.xlu0 %1322
        %v1324 = vsub.f32 %v1316, %v1323
        %v1325 = vmul.f32 %v1324, 1.442695
        %v1326 = vpow.pop %v1325
        %v1327 = vsel %vm996, %v1326, 0.0
        %1328 = vadd.xlane.f32.xlu0 %v1327
        %v1329 = vpop.xlane.xlu0 %1328
        %v1330 = vrcp.pop %v1329
        %v1331 = vmul.f32 %v1326, %v1330
        %v1332 = vpack.c.bf16 %v1331, %v1331
        %1333 = vrot.lane.b32.xlu0 %v948, 32
        %v1334 = vpop.permute.xlu0 %1333
        %v1337 = vsel %vm996, %v1332, 0
        %1339 = vmatprep.subr.bf16.mxu0 0
        %1340 = vmatpush1.bf16.msra.mxu0 %v1334
        %1341 = vmatprep.subr.bf16.mxu0 0
        %1342 = vmatpush1.bf16.msra.mxu0 0
        %1343 = vmatprep.subr.bf16.mxu0 0
        %1344 = vmatpush1.bf16.msra.mxu0 0
        %1345 = vmatprep.subr.bf16.mxu0 0
        %1346 = vmatpush1.bf16.msra.mxu0 0
        %1347 = vmatprep.subr.bf16.mxu0 0
        %1348 = vmatpush1.bf16.msra.mxu0 0
        %1349 = vmatprep.subr.bf16.mxu0 0
        %1350 = vmatpush1.bf16.msra.mxu0 0
        %1351 = vmatprep.subr.bf16.mxu0 0
        %1352 = vmatpush1.bf16.msra.mxu0 0
        %1353 = vmatprep.subr.bf16.mxu0 0
        %1354 = vmatpush1.bf16.msra.mxu0 0
        %1355 = vmatprep.subr.bf16.mxu0 0
        %1356 = vmatpush1.bf16.msra.mxu0 0
        %1357 = vmatprep.subr.bf16.mxu0 0
        %1358 = vmatpush1.bf16.msra.mxu0 0
        %1359 = vmatprep.subr.bf16.mxu0 0
        %1360 = vmatpush1.bf16.msra.mxu0 0
        %1361 = vmatprep.subr.bf16.mxu0 0
        %1362 = vmatpush1.bf16.msra.mxu0 0
        %1363 = vmatprep.subr.bf16.mxu0 0
        %1364 = vmatpush1.bf16.msra.mxu0 0
        %1365 = vmatprep.subr.bf16.mxu0 0
        %1366 = vmatpush1.bf16.msra.mxu0 0
        %1367 = vmatprep.subr.bf16.mxu0 0
        %1368 = vmatpush1.bf16.msra.mxu0 0
        %1369 = vmatprep.subr.bf16.mxu0 0
        %1370 = vmatpush1.bf16.msra.mxu0 0
        %1371 = vmatprep.mubr.bf16.mxu0 0
        %1372 = vmatmul.mubr.bf16.gmra.mrb[0].mxu0 %v1337
        %v1373 = vpop.f32.mrb[0].mxu0
        %v1374 = vadd.f32 0.0, %v1373
        %v1375 = vpop.f32.mrb[0].mxu0
        %v1376 = vpop.f32.mrb[0].mxu0
        %v1377 = vpop.f32.mrb[0].mxu0
        %1378 = vdwg.mxu0
        %1380 = vrot.lane.b32.xlu0 %v1158, 32
        %v1381 = vpop.permute.xlu0 %1380
        %1384 = vrot.lane.b32.xlu0 %v1266, 64
        %v1385 = vpop.permute.xlu0 %1384
        %1388 = vrot.lane.b32.xlu0 %v1374, 96
        %v1389 = vpop.permute.xlu0 %1388
        %v1391 = vsel %vm949, %v1047, %v1381
        %vm1392 = vcmask 523264
        %v1393 = vsel %vm1392, %v1391, %v1385
        %vm1394 = vcmask 785408
        %v1395 = vsel %vm1394, %v1393, %v1389
        %v1396 = vpack.c.bf16 %v1395, %v1395
        %v1397 = vld [vmem:[#allocation10] sm:$0xf]
        %v1398 = vld [vmem:[#allocation10 + $0x4] sm:$0xf]
        %v1399 = vld [vmem:[#allocation10 + $0x8] sm:$0xf]
        %v1400 = vld [vmem:[#allocation10 + $0xc] sm:$0xf]
        %v1401 = vld [vmem:[#allocation10 + $0x10] sm:$0xf]
        %v1402 = vld [vmem:[#allocation10 + $0x14] sm:$0xf]
        %v1403 = vld [vmem:[#allocation10 + $0x18] sm:$0xf]
        %v1404 = vld [vmem:[#allocation10 + $0x1c] sm:$0xf]
        %v1405 = vld [vmem:[#allocation10 + $0x20] sm:$0xf]
        %v1406 = vld [vmem:[#allocation10 + $0x24] sm:$0xf]
        %v1407 = vld [vmem:[#allocation10 + $0x28] sm:$0xf]
        %v1408 = vld [vmem:[#allocation10 + $0x2c] sm:$0xf]
        %v1409 = vld [vmem:[#allocation10 + $0x30] sm:$0xf]
        %v1410 = vld [vmem:[#allocation10 + $0x34] sm:$0xf]
        %v1411 = vld [vmem:[#allocation10 + $0x38] sm:$0xf]
        %v1412 = vld [vmem:[#allocation10 + $0x3c] sm:$0xf]
        %v1413 = vld [vmem:[%s9] sm:$0x1]
        %v1415 = vlaneseq
        %v1416 = vshrl.u32 %v1415, 7
        %v1417 = vsub.s32 0, %v1416
        %v1418 = vrot.slane %v1413, %v1417
        %v1436 = vunpack.c.l.b16 %v1397
        %v1437 = vunpack.c.l.b16 %v1398
        %v1438 = vunpack.c.l.b16 %v1399
        %v1439 = vunpack.c.l.b16 %v1400
        %v1440 = vunpack.c.l.b16 %v1401
        %v1441 = vunpack.c.l.b16 %v1402
        %v1442 = vunpack.c.l.b16 %v1403
        %v1443 = vunpack.c.l.b16 %v1404
        %v1444 = vunpack.c.l.b16 %v1405
        %v1445 = vunpack.c.l.b16 %v1406
        %v1446 = vunpack.c.l.b16 %v1407
        %v1447 = vunpack.c.l.b16 %v1408
        %v1448 = vunpack.c.l.b16 %v1409
        %v1449 = vunpack.c.l.b16 %v1410
        %v1450 = vunpack.c.l.b16 %v1411
        %v1451 = vunpack.c.l.b16 %v1412
        %v1452 = vpack.c.b16 %v1437, %v1436
        %v1453 = vpack.c.b16 %v1439, %v1438
        %v1454 = vpack.c.b16 %v1441, %v1440
        %v1455 = vpack.c.b16 %v1443, %v1442
        %v1456 = vpack.c.b16 %v1445, %v1444
        %v1457 = vpack.c.b16 %v1447, %v1446
        %v1458 = vpack.c.b16 %v1449, %v1448
        %v1459 = vpack.c.b16 %v1451, %v1450
        %1468 = vmatprep.subr.bf16.mxu0 0
        %1469 = vmatpush1.bf16.msra.mxu0 %v1452
        %1470 = vmatprep.subr.bf16.mxu0 0
        %1471 = vmatpush1.bf16.msra.mxu0 %v1453
        %1472 = vmatprep.subr.bf16.mxu0 0
        %1473 = vmatpush1.bf16.msra.mxu0 %v1454
        %1474 = vmatprep.subr.bf16.mxu0 0
        %1475 = vmatpush1.bf16.msra.mxu0 %v1455
        %1476 = vmatprep.subr.bf16.mxu0 0
        %1477 = vmatpush1.bf16.msra.mxu0 %v1456
        %1478 = vmatprep.subr.bf16.mxu0 0
        %1479 = vmatpush1.bf16.msra.mxu0 %v1457
        %1480 = vmatprep.subr.bf16.mxu0 0
        %1481 = vmatpush1.bf16.msra.mxu0 %v1458
        %1482 = vmatprep.subr.bf16.mxu0 0
        %1483 = vmatpush1.bf16.msra.mxu0 %v1459
        %1484 = vmatprep.subr.bf16.mxu0 0
        %1485 = vmatpush1.bf16.msra.mxu0 0
        %1486 = vmatprep.subr.bf16.mxu0 0
        %1487 = vmatpush1.bf16.msra.mxu0 0
        %1488 = vmatprep.subr.bf16.mxu0 0
        %1489 = vmatpush1.bf16.msra.mxu0 0
        %1490 = vmatprep.subr.bf16.mxu0 0
        %1491 = vmatpush1.bf16.msra.mxu0 0
        %1492 = vmatprep.subr.bf16.mxu0 0
        %1493 = vmatpush1.bf16.msra.mxu0 0
        %1494 = vmatprep.subr.bf16.mxu0 0
        %1495 = vmatpush1.bf16.msra.mxu0 0
        %1496 = vmatprep.subr.bf16.mxu0 0
        %1497 = vmatpush1.bf16.msra.mxu0 0
        %1498 = vmatprep.subr.bf16.mxu0 0
        %1499 = vmatpush1.bf16.msra.mxu0 0
        %1500 = vmatprep.mubr.bf16.mxu0 0
        %1501 = vmatmul.mubr.bf16.gmra.mrb[0].mxu0 %v1396
        %v1502 = vpop.f32.mrb[0].mxu0
        %v1503 = vadd.f32 %v1418, %v1502
        %v1504 = vpop.f32.mrb[0].mxu0
        %v1505 = vpop.f32.mrb[0].mxu0
        %v1506 = vpop.f32.mrb[0].mxu0
        %1507 = vdwg.mxu0
        %v1508 = vadd.f32 %v650, %v1503
        %v1509 = vld [vmem:[%s10] sm:$0x1]
        %v1510 = vld [vmem:[%s11] sm:$0x1]
        %1511 = vadd.xlane.f32.xlu0 %v1508
        %v1512 = vpop.xlane.xlu0 %1511
        %v1513 = vmul.f32 %v1512, %v657
        %v1514 = vsub.f32 %v1508, %v1513
        %v1515 = vmul.f32 %v1514, %v1514
        %1516 = vadd.xlane.f32.xlu0 %v1515
        %v1517 = vpop.xlane.xlu0 %1516
        %v1518 = vmul.f32 %v1517, %v657
        %v1519 = vadd.f32 %v1518, 1e-05
        %v1520 = vrsqrt.pop %v1519
        %v1521 = vmul.f32 %v1514, %v1520
        %v1523 = vlaneseq
        %v1524 = vshrl.u32 %v1523, 7
        %v1525 = vsub.s32 0, %v1524
        %v1526 = vrot.slane %v1509, %v1525
        %v1528 = vmul.f32 %v1521, %v1526
        %v1530 = vlaneseq
        %v1531 = vshrl.u32 %v1530, 7
        %v1532 = vsub.s32 0, %v1531
        %v1533 = vrot.slane %v1510, %v1532
        %v1535 = vadd.f32 %v1528, %v1533
        %v1536 = vpack.c.bf16 %v1535, %v1535
        %v1537 = vld [vmem:[#allocation11] sm:$0xf]
        %v1538 = vld [vmem:[#allocation11 + $0x4] sm:$0xf]
        %v1539 = vld [vmem:[#allocation11 + $0x8] sm:$0xf]
        %v1540 = vld [vmem:[#allocation11 + $0xc] sm:$0xf]
        %v1541 = vld [vmem:[#allocation11 + $0x10] sm:$0xf]
        %v1542 = vld [vmem:[#allocation11 + $0x14] sm:$0xf]
        %v1543 = vld [vmem:[#allocation11 + $0x18] sm:$0xf]
        %v1544 = vld [vmem:[#allocation11 + $0x1c] sm:$0xf]
        %v1545 = vld [vmem:[#allocation11 + $0x20] sm:$0xf]
        %v1546 = vld [vmem:[#allocation11 + $0x24] sm:$0xf]
        %v1547 = vld [vmem:[#allocation11 + $0x28] sm:$0xf]
        %v1548 = vld [vmem:[#allocation11 + $0x2c] sm:$0xf]
        %v1549 = vld [vmem:[#allocation11 + $0x30] sm:$0xf]
        %v1550 = vld [vmem:[#allocation11 + $0x34] sm:$0xf]
        %v1551 = vld [vmem:[#allocation11 + $0x38] sm:$0xf]
        %v1552 = vld [vmem:[#allocation11 + $0x3c] sm:$0xf]
        %v1553 = vld [vmem:[%s13] sm:$0x1]
        %v1555 = vlaneseq
        %v1556 = vshrl.u32 %v1555, 7
        %v1557 = vsub.s32 0, %v1556
        %v1558 = vrot.slane %v1553, %v1557
        %v1576 = vunpack.c.l.b16 %v1537
        %v1577 = vunpack.c.l.b16 %v1538
        %v1578 = vunpack.c.l.b16 %v1539
        %v1579 = vunpack.c.l.b16 %v1540
        %v1580 = vunpack.c.l.b16 %v1541
        %v1581 = vunpack.c.l.b16 %v1542
        %v1582 = vunpack.c.l.b16 %v1543
        %v1583 = vunpack.c.l.b16 %v1544
        %v1584 = vunpack.c.l.b16 %v1545
        %v1585 = vunpack.c.l.b16 %v1546
        %v1586 = vunpack.c.l.b16 %v1547
        %v1587 = vunpack.c.l.b16 %v1548
        %v1588 = vunpack.c.l.b16 %v1549
        %v1589 = vunpack.c.l.b16 %v1550
        %v1590 = vunpack.c.l.b16 %v1551
        %v1591 = vunpack.c.l.b16 %v1552
        %v1592 = vpack.c.b16 %v1577, %v1576
        %v1593 = vpack.c.b16 %v1579, %v1578
        %v1594 = vpack.c.b16 %v1581, %v1580
        %v1595 = vpack.c.b16 %v1583, %v1582
        %v1596 = vpack.c.b16 %v1585, %v1584
        %v1597 = vpack.c.b16 %v1587, %v1586
        %v1598 = vpack.c.b16 %v1589, %v1588
        %v1599 = vpack.c.b16 %v1591, %v1590
        %1608 = vmatprep.subr.bf16.mxu0 0
        %1609 = vmatpush1.bf16.msra.mxu0 %v1592
        %1610 = vmatprep.subr.bf16.mxu0 0
        %1611 = vmatpush1.bf16.msra.mxu0 %v1593
        %1612 = vmatprep.subr.bf16.mxu0 0
        %1613 = vmatpush1.bf16.msra.mxu0 %v1594
        %1614 = vmatprep.subr.bf16.mxu0 0
        %1615 = vmatpush1.bf16.msra.mxu0 %v1595
        %1616 = vmatprep.subr.bf16.mxu0 0
        %1617 = vmatpush1.bf16.msra.mxu0 %v1596
        %1618 = vmatprep.subr.bf16.mxu0 0
        %1619 = vmatpush1.bf16.msra.mxu0 %v1597
        %1620 = vmatprep.subr.bf16.mxu0 0
        %1621 = vmatpush1.bf16.msra.mxu0 %v1598
        %1622 = vmatprep.subr.bf16.mxu0 0
        %1623 = vmatpush1.bf16.msra.mxu0 %v1599
        %1624 = vmatprep.subr.bf16.mxu0 0
        %1625 = vmatpush1.bf16.msra.mxu0 0
        %1626 = vmatprep.subr.bf16.mxu0 0
        %1627 = vmatpush1.bf16.msra.mxu0 0
        %1628 = vmatprep.subr.bf16.mxu0 0
        %1629 = vmatpush1.bf16.msra.mxu0 0
        %1630 = vmatprep.subr.bf16.mxu0 0
        %1631 = vmatpush1.bf16.msra.mxu0 0
        %1632 = vmatprep.subr.bf16.mxu0 0
        %1633 = vmatpush1.bf16.msra.mxu0 0
        %1634 = vmatprep.subr.bf16.mxu0 0
        %1635 = vmatpush1.bf16.msra.mxu0 0
        %1636 = vmatprep.subr.bf16.mxu0 0
        %1637 = vmatpush1.bf16.msra.mxu0 0
        %1638 = vmatprep.subr.bf16.mxu0 0
        %1639 = vmatpush1.bf16.msra.mxu0 0
        %1640 = vmatprep.mubr.bf16.mxu0 0
        %1641 = vmatmul.mubr.bf16.gmra.mrb[0].mxu0 %v1536
        %v1642 = vpop.f32.mrb[0].mxu0
        %v1643 = vadd.f32 %v1558, %v1642
        %v1644 = vpop.f32.mrb[0].mxu0
        %v1645 = vpop.f32.mrb[0].mxu0
        %v1646 = vpop.f32.mrb[0].mxu0
        %1647 = vdwg.mxu0
        %v1648 = vmax.f32 %v1643, 0.0
        %v1649 = vpack.c.bf16 %v1648, %v1648
        %v1650 = vld [vmem:[#allocation13] sm:$0xf]
        %v1651 = vld [vmem:[#allocation13 + $0x4] sm:$0xf]
        %v1652 = vld [vmem:[#allocation13 + $0x8] sm:$0xf]
        %v1653 = vld [vmem:[#allocation13 + $0xc] sm:$0xf]
        %v1654 = vld [vmem:[#allocation13 + $0x10] sm:$0xf]
        %v1655 = vld [vmem:[#allocation13 + $0x14] sm:$0xf]
        %v1656 = vld [vmem:[#allocation13 + $0x18] sm:$0xf]
        %v1657 = vld [vmem:[#allocation13 + $0x1c] sm:$0xf]
        %v1658 = vld [vmem:[#allocation13 + $0x20] sm:$0xf]
        %v1659 = vld [vmem:[#allocation13 + $0x24] sm:$0xf]
        %v1660 = vld [vmem:[#allocation13 + $0x28] sm:$0xf]
        %v1661 = vld [vmem:[#allocation13 + $0x2c] sm:$0xf]
        %v1662 = vld [vmem:[#allocation13 + $0x30] sm:$0xf]
        %v1663 = vld [vmem:[#allocation13 + $0x34] sm:$0xf]
        %v1664 = vld [vmem:[#allocation13 + $0x38] sm:$0xf]
        %v1665 = vld [vmem:[#allocation13 + $0x3c] sm:$0xf]
        %v1666 = vld [vmem:[%s15] sm:$0x1]
        %v1668 = vlaneseq
        %v1669 = vshrl.u32 %v1668, 7
        %v1670 = vsub.s32 0, %v1669
        %v1671 = vrot.slane %v1666, %v1670
        %v1689 = vunpack.c.l.b16 %v1650
        %v1690 = vunpack.c.l.b16 %v1651
        %v1691 = vunpack.c.l.b16 %v1652
        %v1692 = vunpack.c.l.b16 %v1653
        %v1693 = vunpack.c.l.b16 %v1654
        %v1694 = vunpack.c.l.b16 %v1655
        %v1695 = vunpack.c.l.b16 %v1656
        %v1696 = vunpack.c.l.b16 %v1657
        %v1697 = vunpack.c.l.b16 %v1658
        %v1698 = vunpack.c.l.b16 %v1659
        %v1699 = vunpack.c.l.b16 %v1660
        %v1700 = vunpack.c.l.b16 %v1661
        %v1701 = vunpack.c.l.b16 %v1662
        %v1702 = vunpack.c.l.b16 %v1663
        %v1703 = vunpack.c.l.b16 %v1664
        %v1704 = vunpack.c.l.b16 %v1665
        %v1705 = vpack.c.b16 %v1690, %v1689
        %v1706 = vpack.c.b16 %v1692, %v1691
        %v1707 = vpack.c.b16 %v1694, %v1693
        %v1708 = vpack.c.b16 %v1696, %v1695
        %v1709 = vpack.c.b16 %v1698, %v1697
        %v1710 = vpack.c.b16 %v1700, %v1699
        %v1711 = vpack.c.b16 %v1702, %v1701
        %v1712 = vpack.c.b16 %v1704, %v1703
        %1721 = vmatprep.subr.bf16.mxu0 0
        %1722 = vmatpush1.bf16.msra.mxu0 %v1705
        %1723 = vmatprep.subr.bf16.mxu0 0
        %1724 = vmatpush1.bf16.msra.mxu0 %v1706
        %1725 = vmatprep.subr.bf16.mxu0 0
        %1726 = vmatpush1.bf16.msra.mxu0 %v1707
        %1727 = vmatprep.subr.bf16.mxu0 0
        %1728 = vmatpush1.bf16.msra.mxu0 %v1708
        %1729 = vmatprep.subr.bf16.mxu0 0
        %1730 = vmatpush1.bf16.msra.mxu0 %v1709
        %1731 = vmatprep.subr.bf16.mxu0 0
        %1732 = vmatpush1.bf16.msra.mxu0 %v1710
        %1733 = vmatprep.subr.bf16.mxu0 0
        %1734 = vmatpush1.bf16.msra.mxu0 %v1711
        %1735 = vmatprep.subr.bf16.mxu0 0
        %1736 = vmatpush1.bf16.msra.mxu0 %v1712
        %1737 = vmatprep.subr.bf16.mxu0 0
        %1738 = vmatpush1.bf16.msra.mxu0 0
        %1739 = vmatprep.subr.bf16.mxu0 0
        %1740 = vmatpush1.bf16.msra.mxu0 0
        %1741 = vmatprep.subr.bf16.mxu0 0
        %1742 = vmatpush1.bf16.msra.mxu0 0
        %1743 = vmatprep.subr.bf16.mxu0 0
        %1744 = vmatpush1.bf16.msra.mxu0 0
        %1745 = vmatprep.subr.bf16.mxu0 0
        %1746 = vmatpush1.bf16.msra.mxu0 0
        %1747 = vmatprep.subr.bf16.mxu0 0
        %1748 = vmatpush1.bf16.msra.mxu0 0
        %1749 = vmatprep.subr.bf16.mxu0 0
        %1750 = vmatpush1.bf16.msra.mxu0 0
        %1751 = vmatprep.subr.bf16.mxu0 0
        %1752 = vmatpush1.bf16.msra.mxu0 0
        %1753 = vmatprep.mubr.bf16.mxu0 0
        %1754 = vmatmul.mubr.bf16.gmra.mrb[0].mxu0 %v1649
        %v1755 = vpop.f32.mrb[0].mxu0
        %v1756 = vadd.f32 %v1671, %v1755
        %v1757 = vpop.f32.mrb[0].mxu0
        %v1758 = vpop.f32.mrb[0].mxu0
        %v1759 = vpop.f32.mrb[0].mxu0
        %1760 = vdwg.mxu0
        %v1761 = vadd.f32 %v1508, %v1756
        %1762 = vst [vmem:[%s648] sm:$0xff] %v1761
        %s1763 = sand.u32 %s392, 1
        %s1764 = scalar_lea.sflag [#allocation4], %s1763
        %s1765 = sand.u32 %s392, 1
        %s1766 = smul.addr %s1765, 8
        %s1767 = scalar_lea.vmem [#allocation14], %s1766
        // Predicated region
        $region113: #{tpu_custom_call.1} parent=83 // pred_check
          %p1768 = pneg %p402
        $region114: #{tpu_custom_call.1} parent=83 // pred_check_branch
          %1770 = sbr.rel (%p1768) target = $region116
        $region115: #{tpu_custom_call.1} parent=83 // pred_region
          %s1772 = ssub.s32 128, 128
          %1773 = vsyncadd %s1764, %s1772
          %s1774 = smul.addr %s38, 128
          %s1775 = scalar_lea.hbm %s16, %s1774
          %s1777 = sshll.u32 %s1767, 4
          %s1778 = int_to_ptr.vmem [resolvable:$true] %s1777
          %1780 = dma.vmem_to_hbm [thread:$0]  %s1778, 128, %s1775, %s1764
        $region116: #{tpu_custom_call.1} parent=83 // pred_fallthru
          _
      $region84: #{tpu_custom_call.1} parent=5 // pred_fallthru
        _
      %p1781 = scmp.le.s32.totalorder 2, %s33
      // Predicated region
      $region117: #{tpu_custom_call.1} parent=5 // pred_check
        %p1782 = pneg %p1781
      $region118: #{tpu_custom_call.1} parent=5 // pred_check_branch
        %1784 = sbr.rel (%p1782) target = $region120
      $region119: #{tpu_custom_call.1} parent=5 // pred_region
        %s1785 = ssub.s32 %s33, 2
        // Predicated region
        $region121: #{tpu_custom_call.1} parent=119 // pred_check
          %p1786 = pneg %p408
        $region122: #{tpu_custom_call.1} parent=119 // pred_check_branch
          %1788 = sbr.rel (%p1786) target = $region124
        $region123: #{tpu_custom_call.1} parent=119 // pred_region
          %s1789 = sand.u32 %s393, 1
          %s1790 = scalar_lea.sflag [#allocation4], %s1789
          %s1791 = sand.u32 %s393, 1
          %s1792 = smul.addr %s1791, 8
          %s1793 = scalar_lea.vmem [#allocation14], %s1792
          %1794 = dma.done %s1790, 128
        $region124: #{tpu_custom_call.1} parent=119 // pred_fallthru
          _
      $region120: #{tpu_custom_call.1} parent=5 // pred_fallthru
        _
    $region6: #{tpu_custom_call.1} parent=1 // loop_footer
      %s37 = sadd.s32 1, %s33
    $region7: #{tpu_custom_call.1} parent=1 // loop_footer_branch
      %32 = sbr.rel target = $region3
    $region8: #{tpu_custom_call.1} parent=1 // loop_exit
      _
    %1795 = vsyncpa [#allocation3], 1
    %s1796 = scalar_lea.sflag [#allocation3], 1
    %1797 = vsyncpa %s1796, 1
    %1798 = vsyncpa [#allocation6], 1
    %s1799 = scalar_lea.sflag [#allocation6], 1
    %1800 = vsyncpa %s1799, 1
    %1801 = vsyncpa [#allocation9], 1
    %1802 = vsyncpa [#allocation12], 1
    %1803 = vsyncpa [#allocation4], 1
    %s1804 = scalar_lea.sflag [#allocation4], 1
    %1805 = vsyncpa %s1804, 1

// kernel: tpu_custom_call.1
$region0: #{tpu_custom_call.1}
  #allocation0 [shape = 'u32[]', space=smem, size = 0x4, offset = 0x4, fixed_abs, tag = 'smem constant byte address 0x4 - core index']
  #allocation1 [shape = 'u32[144,128]{1,0:T(1,128)}', space=vmem, size = 0x12000, scoped, tag = 'internal scratch']
  %s0 = inlined_call_operand.hbm [shape: f32[2,8,128], index: 0, kind: input, shape index: {}]
  %s1 = inlined_call_operand.hbm [shape: f32[2,16,128], index: 1, kind: input, shape index: {}]
  %s2 = inlined_call_operand.vmem [shape: f32[1,128], index: 2, kind: input, shape index: {}]
  %s3 = inlined_call_operand.vmem [shape: f32[1,128], index: 3, kind: input, shape index: {}]
  %s4 = inlined_call_operand.hbm [shape: bf16[128,128], index: 4, kind: input, shape index: {}]
  %s5 = inlined_call_operand.vmem [shape: f32[1,128], index: 5, kind: input, shape index: {}]
  %s6 = inlined_call_operand.hbm [shape: bf16[128,256], index: 6, kind: input, shape index: {}]
  %s7 = inlined_call_operand.vmem [shape: f32[1,256], index: 7, kind: input, shape index: {}]
  %s8 = inlined_call_operand.hbm [shape: bf16[128,128], index: 8, kind: input, shape index: {}]
  %s9 = inlined_call_operand.vmem [shape: f32[1,128], index: 9, kind: input, shape index: {}]
  %s10 = inlined_call_operand.vmem [shape: f32[1,128], index: 10, kind: input, shape index: {}]
  %s11 = inlined_call_operand.vmem [shape: f32[1,128], index: 11, kind: input, shape index: {}]
  %s12 = inlined_call_operand.hbm [shape: bf16[128,128], index: 12, kind: input, shape index: {}]
  %s13 = inlined_call_operand.vmem [shape: f32[1,128], index: 13, kind: input, shape index: {}]
  %s14 = inlined_call_operand.hbm [shape: bf16[128,128], index: 14, kind: input, shape index: {}]
  %s15 = inlined_call_operand.vmem [shape: f32[1,128], index: 15, kind: input, shape index: {}]
  %s16 = inlined_call_operand.hbm [shape: f32[2,8,128], index: 16, kind: output, shape index: {}]
  %s17 = sld [smem:[#allocation0]]
  $region125: #{tpu_custom_call.1} parent=0
    _
  %s19 = ssub.s32 1, %s17
  %s20 = scalar_select 0, %s19, %s17
  $region1: #{tpu_custom_call.1} parent=0
    #allocation2 [shape = 'u8[8192]{0}', space=vmem, size = 0x2000, scoped, tag = 'input window, operand 0']
    #allocation3 [shape = 's32[2]{0}', space=sflag, size = 0x8, scoped, tag = 'scoped memory for tpu_custom_call.1']
    #allocation4 [shape = 's32[2]{0}', space=sflag, size = 0x8, scoped, tag = 'scoped memory for tpu_custom_call.1']
    #allocation5 [shape = 'u8[16384]{0}', space=vmem, size = 0x4000, scoped, tag = 'input window, operand 1']
    #allocation6 [shape = 's32[2]{0}', space=sflag, size = 0x8, scoped, tag = 'scoped memory for tpu_custom_call.1']
    #allocation7 [shape = 'u8[32768]{0}', space=vmem, size = 0x8000, scoped, tag = 'input window, operand 4, single buffered']
    #allocation8 [shape = 'u8[65536]{0}', space=vmem, size = 0x10000, scoped, tag = 'input window, operand 6, single buffered']
    #allocation9 [shape = 's32[1]{0}', space=sflag, size = 0x4, scoped, tag = 'scoped memory for tpu_custom_call.1']
    #allocation10 [shape = 'u8[32768]{0}', space=vmem, size = 0x8000, scoped, tag = 'input window, operand 8, single buffered']
    #allocation11 [shape = 'u8[32768]{0}', space=vmem, size = 0x8000, scoped, tag = 'input window, operand 12, single buffered']
    #allocation12 [shape = 's32[1]{0}', space=sflag, size = 0x4, scoped, tag = 'scoped memory for tpu_custom_call.1']
    #allocation13 [shape = 'u8[32768]{0}', space=vmem, size = 0x8000, scoped, tag = 'input window, operand 14, single buffered']
    #allocation14 [shape = 'u8[8192]{0}', space=vmem, size = 0x2000, scoped, tag = 'output window, operand 0']
    %21 = vsyncpa [#allocation3], 0
    %s22 = scalar_lea.sflag [#allocation3], 1
    %23 = vsyncpa %s22, 0
    %24 = vsyncpa [#allocation6], 0
    %s25 = scalar_lea.sflag [#allocation6], 1
    %26 = vsyncpa %s25, 0
    %27 = vsyncpa [#allocation9], 0
    %28 = vsyncpa [#allocation12], 0
    %29 = vsyncpa [#allocation4], 0
    %s30 = scalar_lea.sflag [#allocation4], 1
    %31 = vsyncpa %s30, 0
    loop: start=0, step=1, limit=4
    $region2: #{tpu_custom_call.1} parent=1 // loop_pre_header
      _
    $region3: #{tpu_custom_call.1} parent=1 // loop_header
      %s33 = sphi 0, %s37
      %p34 = scmp.ge.s32.totalorder %s33, 4
      %s43 = sphi 0, %s45
      %s46 = sphi 0, %s43
      %s47 = sphi 0, %s46
      %s63 = sphi 0, %s47
      %s69 = sphi 0, %s71
      %s72 = sphi 0, %s69
      %s73 = sphi 0, %s72
      %s89 = sphi 0, %s73
      %s93 = sphi 0, %s93
      %s95 = sphi 0, %s93
      %s96 = sphi 0, %s95
      %s110 = sphi 0, %s96
      %s114 = sphi 0, %s114
      %s116 = sphi 0, %s114
      %s117 = sphi 0, %s116
      %s131 = sphi 0, %s117
      %s135 = sphi 0, %s135
      %s137 = sphi 0, %s135
      %s138 = sphi 0, %s137
      %s152 = sphi 0, %s138
      %s156 = sphi 0, %s156
      %s158 = sphi 0, %s156
      %s159 = sphi 0, %s158
      %s173 = sphi 0, %s159
      %s177 = sphi 0, %s177
      %s179 = sphi 0, %s177
      %s180 = sphi 0, %s179
      %s194 = sphi 0, %s180
      %s198 = sphi 0, %s198
      %s200 = sphi 0, %s198
      %s201 = sphi 0, %s200
      %s215 = sphi 0, %s201
      %s219 = sphi 0, %s219
      %s221 = sphi 0, %s219
      %s222 = sphi 0, %s221
      %s236 = sphi 0, %s222
      %s240 = sphi 0, %s240
      %s242 = sphi 0, %s240
      %s243 = sphi 0, %s242
      %s257 = sphi 0, %s243
      %s261 = sphi 0, %s261
      %s263 = sphi 0, %s261
      %s264 = sphi 0, %s263
      %s278 = sphi 0, %s264
      %s282 = sphi 0, %s282
      %s284 = sphi 0, %s282
      %s285 = sphi 0, %s284
      %s299 = sphi 0, %s285
      %s303 = sphi 0, %s303
      %s305 = sphi 0, %s303
      %s306 = sphi 0, %s305
      %s320 = sphi 0, %s306
      %s324 = sphi 0, %s324
      %s326 = sphi 0, %s324
      %s327 = sphi 0, %s326
      %s341 = sphi 0, %s327
      %s345 = sphi 0, %s345
      %s347 = sphi 0, %s345
      %s348 = sphi 0, %s347
      %s362 = sphi 0, %s348
      %s366 = sphi 0, %s366
      %s368 = sphi 0, %s366
      %s369 = sphi 0, %s368
      %s383 = sphi 0, %s369
      %s389 = sphi 0, %s391
      %s392 = sphi 0, %s389
      %s393 = sphi 0, %s392
      %s409 = sphi 0, %s393
    $region4: #{tpu_custom_call.1} parent=1 // loop_header_branch
      %36 = sbr.rel (%p34) target = $region8
    $region5: #{tpu_custom_call.1} parent=1 // loop_body
      %s38 = ssub.s32 %s33, 1
      %s39 = ssub.s32 %s33, 2
      %s40 = sadd.s32 %s33, 1
      %s41 = ssub.s32 %s33, %s40
      %p42 = scmp.eq.s32.totalorder %s41, 0
      %s44 = sadd.s32 %s43, 1
      %s45 = scalar_select %p42, %s43, %s44
      %p48 = pneg %p42
      %p49 = scmp.eq.s32.totalorder %s33, 1
      %p50 = por %p48, %p49
      %p51 = scmp.ne.s32.totalorder %s43, %s46
      %p52 = scmp.eq.s32.totalorder %s33, 0
      %p53 = por %p51, %p52
      %p54 = scmp.ne.s32.totalorder %s43, %s46
      %p55 = scmp.eq.s32.totalorder %s38, 1
      %p56 = por %p54, %p55
      %p57 = scmp.ne.s32.totalorder %s46, %s47
      %p58 = scmp.eq.s32.totalorder %s38, 0
      %p59 = por %p57, %p58
      %p60 = scmp.ne.s32.totalorder %s46, %s47
      %p61 = scmp.eq.s32.totalorder %s39, 1
      %p62 = por %p60, %p61
      %p64 = scmp.ne.s32.totalorder %s47, %s63
      %p65 = scmp.eq.s32.totalorder %s39, 0
      %p66 = por %p64, %p65
      %s67 = ssub.s32 %s33, %s40
      %p68 = scmp.eq.s32.totalorder %s67, 0
      %s70 = sadd.s32 %s69, 1
      %s71 = scalar_select %p68, %s69, %s70
      %p74 = pneg %p68
      %p75 = scmp.eq.s32.totalorder %s33, 1
      %p76 = por %p74, %p75
      %p77 = scmp.ne.s32.totalorder %s69, %s72
      %p78 = scmp.eq.s32.totalorder %s33, 0
      %p79 = por %p77, %p78
      %p80 = scmp.ne.s32.totalorder %s69, %s72
      %p81 = scmp.eq.s32.totalorder %s38, 1
      %p82 = por %p80, %p81
      %p83 = scmp.ne.s32.totalorder %s72, %s73
      %p84 = scmp.eq.s32.totalorder %s38, 0
      %p85 = por %p83, %p84
      %p86 = scmp.ne.s32.totalorder %s72, %s73
      %p87 = scmp.eq.s32.totalorder %s39, 1
      %p88 = por %p86, %p87
      %p90 = scmp.ne.s32.totalorder %s73, %s89
      %p91 = scmp.eq.s32.totalorder %s39, 0
      %p92 = por %p90, %p91
      %s94 = sadd.s32 %s93, 1
      %p97 = scmp.eq.s32.totalorder %s33, 1
      %p98 = scmp.ne.s32.totalorder %s93, %s95
      %p99 = scmp.eq.s32.totalorder %s33, 0
      %p100 = por %p98, %p99
      %p101 = scmp.ne.s32.totalorder %s93, %s95
      %p102 = scmp.eq.s32.totalorder %s38, 1
      %p103 = por %p101, %p102
      %p104 = scmp.ne.s32.totalorder %s95, %s96
      %p105 = scmp.eq.s32.totalorder %s38, 0
      %p106 = por %p104, %p105
      %p107 = scmp.ne.s32.totalorder %s95, %s96
      %p108 = scmp.eq.s32.totalorder %s39, 1
      %p109 = por %p107, %p108
      %p111 = scmp.ne.s32.totalorder %s96, %s110
      %p112 = scmp.eq.s32.totalorder %s39, 0
      %p113 = por %p111, %p112
      %s115 = sadd.s32 %s114, 1
      %p118 = scmp.eq.s32.totalorder %s33, 1
      %p119 = scmp.ne.s32.totalorder %s114, %s116
      %p120 = scmp.eq.s32.totalorder %s33, 0
      %p121 = por %p119, %p120
      %p122 = scmp.ne.s32.totalorder %s114, %s116
      %p123 = scmp.eq.s32.totalorder %s38, 1
      %p124 = por %p122, %p123
      %p125 = scmp.ne.s32.totalorder %s116, %s117
      %p126 = scmp.eq.s32.totalorder %s38, 0
      %p127 = por %p125, %p126
      %p128 = scmp.ne.s32.totalorder %s116, %s117
      %p129 = scmp.eq.s32.totalorder %s39, 1
      %p130 = por %p128, %p129
      %p132 = scmp.ne.s32.totalorder %s117, %s131
      %p133 = scmp.eq.s32.totalorder %s39, 0
      %p134 = por %p132, %p133
      %s136 = sadd.s32 %s135, 1
      %p139 = scmp.eq.s32.totalorder %s33, 1
      %p140 = scmp.ne.s32.totalorder %s135, %s137
      %p141 = scmp.eq.s32.totalorder %s33, 0
      %p142 = por %p140, %p141
      %p143 = scmp.ne.s32.totalorder %s135, %s137
      %p144 = scmp.eq.s32.totalorder %s38, 1
      %p145 = por %p143, %p144
      %p146 = scmp.ne.s32.totalorder %s137, %s138
      %p147 = scmp.eq.s32.totalorder %s38, 0
      %p148 = por %p146, %p147
      %p149 = scmp.ne.s32.totalorder %s137, %s138
      %p150 = scmp.eq.s32.totalorder %s39, 1
      %p151 = por %p149, %p150
      %p153 = scmp.ne.s32.totalorder %s138, %s152
      %p154 = scmp.eq.s32.totalorder %s39, 0
      %p155 = por %p153, %p154
      %s157 = sadd.s32 %s156, 1
      %p160 = scmp.eq.s32.totalorder %s33, 1
      %p161 = scmp.ne.s32.totalorder %s156, %s158
      %p162 = scmp.eq.s32.totalorder %s33, 0
      %p163 = por %p161, %p162
      %p164 = scmp.ne.s32.totalorder %s156, %s158
      %p165 = scmp.eq.s32.totalorder %s38, 1
      %p166 = por %p164, %p165
      %p167 = scmp.ne.s32.totalorder %s158, %s159
      %p168 = scmp.eq.s32.totalorder %s38, 0
      %p169 = por %p167, %p168
      %p170 = scmp.ne.s32.totalorder %s158, %s159
      %p171 = scmp.eq.s32.totalorder %s39, 1
      %p172 = por %p170, %p171
      %p174 = scmp.ne.s32.totalorder %s159, %s173
      %p175 = scmp.eq.s32.totalorder %s39, 0
      %p176 = por %p174, %p175
      %s178 = sadd.s32 %s177, 1
      %p181 = scmp.eq.s32.totalorder %s33, 1
      %p182 = scmp.ne.s32.totalorder %s177, %s179
      %p183 = scmp.eq.s32.totalorder %s33, 0
      %p184 = por %p182, %p183
      %p185 = scmp.ne.s32.totalorder %s177, %s179
      %p186 = scmp.eq.s32.totalorder %s38, 1
      %p187 = por %p185, %p186
      %p188 = scmp.ne.s32.totalorder %s179, %s180
      %p189 = scmp.eq.s32.totalorder %s38, 0
      %p190 = por %p188, %p189
      %p191 = scmp.ne.s32.totalorder %s179, %s180
      %p192 = scmp.eq.s32.totalorder %s39, 1
      %p193 = por %p191, %p192
      %p195 = scmp.ne.s32.totalorder %s180, %s194
      %p196 = scmp.eq.s32.totalorder %s39, 0
      %p197 = por %p195, %p196
      %s199 = sadd.s32 %s198, 1
      %p202 = scmp.eq.s32.totalorder %s33, 1
      %p203 = scmp.ne.s32.totalorder %s198, %s200
      %p204 = scmp.eq.s32.totalorder %s33, 0
      %p205 = por %p203, %p204
      %p206 = scmp.ne.s32.totalorder %s198, %s200
      %p207 = scmp.eq.s32.totalorder %s38, 1
      %p208 = por %p206, %p207
      %p209 = scmp.ne.s32.totalorder %s200, %s201
      %p210 = scmp.eq.s32.totalorder %s38, 0
      %p211 = por %p209, %p210
      %p212 = scmp.ne.s32.totalorder %s200, %s201
      %p213 = scmp.eq.s32.totalorder %s39, 1
      %p214 = por %p212, %p213
      %p216 = scmp.ne.s32.totalorder %s201, %s215
      %p217 = scmp.eq.s32.totalorder %s39, 0
      %p218 = por %p216, %p217
      %s220 = sadd.s32 %s219, 1
      %p223 = scmp.eq.s32.totalorder %s33, 1
      %p224 = scmp.ne.s32.totalorder %s219, %s221
      %p225 = scmp.eq.s32.totalorder %s33, 0
      %p226 = por %p224, %p225
      %p227 = scmp.ne.s32.totalorder %s219, %s221
      %p228 = scmp.eq.s32.totalorder %s38, 1
      %p229 = por %p227, %p228
      %p230 = scmp.ne.s32.totalorder %s221, %s222
      %p231 = scmp.eq.s32.totalorder %s38, 0
      %p232 = por %p230, %p231
      %p233 = scmp.ne.s32.totalorder %s221, %s222
      %p234 = scmp.eq.s32.totalorder %s39, 1
      %p235 = por %p233, %p234
      %p237 = scmp.ne.s32.totalorder %s222, %s236
      %p238 = scmp.eq.s32.totalorder %s39, 0
      %p239 = por %p237, %p238
      %s241 = sadd.s32 %s240, 1
      %p244 = scmp.eq.s32.totalorder %s33, 1
      %p245 = scmp.ne.s32.totalorder %s240, %s242
      %p246 = scmp.eq.s32.totalorder %s33, 0
      %p247 = por %p245, %p246
      %p248 = scmp.ne.s32.totalorder %s240, %s242
      %p249 = scmp.eq.s32.totalorder %s38, 1
      %p250 = por %p248, %p249
      %p251 = scmp.ne.s32.totalorder %s242, %s243
      %p252 = scmp.eq.s32.totalorder %s38, 0
      %p253 = por %p251, %p252
      %p254 = scmp.ne.s32.totalorder %s242, %s243
      %p255 = scmp.eq.s32.totalorder %s39, 1
      %p256 = por %p254, %p255
      %p258 = scmp.ne.s32.totalorder %s243, %s257
      %p259 = scmp.eq.s32.totalorder %s39, 0
      %p260 = por %p258, %p259
      %s262 = sadd.s32 %s261, 1
      %p265 = scmp.eq.s32.totalorder %s33, 1
      %p266 = scmp.ne.s32.totalorder %s261, %s263
      %p267 = scmp.eq.s32.totalorder %s33, 0
      %p268 = por %p266, %p267
      %p269 = scmp.ne.s32.totalorder %s261, %s263
      %p270 = scmp.eq.s32.totalorder %s38, 1
      %p271 = por %p269, %p270
      %p272 = scmp.ne.s32.totalorder %s263, %s264
      %p273 = scmp.eq.s32.totalorder %s38, 0
      %p274 = por %p272, %p273
      %p275 = scmp.ne.s32.totalorder %s263, %s264
      %p276 = scmp.eq.s32.totalorder %s39, 1
      %p277 = por %p275, %p276
      %p279 = scmp.ne.s32.totalorder %s264, %s278
      %p280 = scmp.eq.s32.totalorder %s39, 0
      %p281 = por %p279, %p280
      %s283 = sadd.s32 %s282, 1
      %p286 = scmp.eq.s32.totalorder %s33, 1
      %p287 = scmp.ne.s32.totalorder %s282, %s284
      %p288 = scmp.eq.s32.totalorder %s33, 0
      %p289 = por %p287, %p288
      %p290 = scmp.ne.s32.totalorder %s282, %s284
      %p291 = scmp.eq.s32.totalorder %s38, 1
      %p292 = por %p290, %p291
      %p293 = scmp.ne.s32.totalorder %s284, %s285
      %p294 = scmp.eq.s32.totalorder %s38, 0
      %p295 = por %p293, %p294
      %p296 = scmp.ne.s32.totalorder %s284, %s285
      %p297 = scmp.eq.s32.totalorder %s39, 1
      %p298 = por %p296, %p297
      %p300 = scmp.ne.s32.totalorder %s285, %s299
      %p301 = scmp.eq.s32.totalorder %s39, 0
      %p302 = por %p300, %p301
      %s304 = sadd.s32 %s303, 1
      %p307 = scmp.eq.s32.totalorder %s33, 1
      %p308 = scmp.ne.s32.totalorder %s303, %s305
      %p309 = scmp.eq.s32.totalorder %s33, 0
      %p310 = por %p308, %p309
      %p311 = scmp.ne.s32.totalorder %s303, %s305
      %p312 = scmp.eq.s32.totalorder %s38, 1
      %p313 = por %p311, %p312
      %p314 = scmp.ne.s32.totalorder %s305, %s306
      %p315 = scmp.eq.s32.totalorder %s38, 0
      %p316 = por %p314, %p315
      %p317 = scmp.ne.s32.totalorder %s305, %s306
      %p318 = scmp.eq.s32.totalorder %s39, 1
      %p319 = por %p317, %p318
      %p321 = scmp.ne.s32.totalorder %s306, %s320
      %p322 = scmp.eq.s32.totalorder %s39, 0
      %p323 = por %p321, %p322
      %s325 = sadd.s32 %s324, 1
      %p328 = scmp.eq.s32.totalorder %s33, 1
      %p329 = scmp.ne.s32.totalorder %s324, %s326
      %p330 = scmp.eq.s32.totalorder %s33, 0
      %p331 = por %p329, %p330
      %p332 = scmp.ne.s32.totalorder %s324, %s326
      %p333 = scmp.eq.s32.totalorder %s38, 1
      %p334 = por %p332, %p333
      %p335 = scmp.ne.s32.totalorder %s326, %s327
      %p336 = scmp.eq.s32.totalorder %s38, 0
      %p337 = por %p335, %p336
      %p338 = scmp.ne.s32.totalorder %s326, %s327
      %p339 = scmp.eq.s32.totalorder %s39, 1
      %p340 = por %p338, %p339
      %p342 = scmp.ne.s32.totalorder %s327, %s341
      %p343 = scmp.eq.s32.totalorder %s39, 0
      %p344 = por %p342, %p343
      %s346 = sadd.s32 %s345, 1
      %p349 = scmp.eq.s32.totalorder %s33, 1
      %p350 = scmp.ne.s32.totalorder %s345, %s347
      %p351 = scmp.eq.s32.totalorder %s33, 0
      %p352 = por %p350, %p351
      %p353 = scmp.ne.s32.totalorder %s345, %s347
      %p354 = scmp.eq.s32.totalorder %s38, 1
      %p355 = por %p353, %p354
      %p356 = scmp.ne.s32.totalorder %s347, %s348
      %p357 = scmp.eq.s32.totalorder %s38, 0
      %p358 = por %p356, %p357
      %p359 = scmp.ne.s32.totalorder %s347, %s348
      %p360 = scmp.eq.s32.totalorder %s39, 1
      %p361 = por %p359, %p360
      %p363 = scmp.ne.s32.totalorder %s348, %s362
      %p364 = scmp.eq.s32.totalorder %s39, 0
      %p365 = por %p363, %p364
      %s367 = sadd.s32 %s366, 1
      %p370 = scmp.eq.s32.totalorder %s33, 1
      %p371 = scmp.ne.s32.totalorder %s366, %s368
      %p372 = scmp.eq.s32.totalorder %s33, 0
      %p373 = por %p371, %p372
      %p374 = scmp.ne.s32.totalorder %s366, %s368
      %p375 = scmp.eq.s32.totalorder %s38, 1
      %p376 = por %p374, %p375
      %p377 = scmp.ne.s32.totalorder %s368, %s369
      %p378 = scmp.eq.s32.totalorder %s38, 0
      %p379 = por %p377, %p378
      %p380 = scmp.ne.s32.totalorder %s368, %s369
      %p381 = scmp.eq.s32.totalorder %s39, 1
      %p382 = por %p380, %p381
      %p384 = scmp.ne.s32.totalorder %s369, %s383
      %p385 = scmp.eq.s32.totalorder %s39, 0
      %p386 = por %p384, %p385
      %s387 = ssub.s32 %s33, %s40
      %p388 = scmp.eq.s32.totalorder %s387, 0
      %s390 = sadd.s32 %s389, 1
      %s391 = scalar_select %p388, %s389, %s390
      %p394 = pneg %p388
      %p395 = scmp.eq.s32.totalorder %s33, 1
      %p396 = por %p394, %p395
      %p397 = scmp.ne.s32.totalorder %s389, %s392
      %p398 = scmp.eq.s32.totalorder %s33, 0
      %p399 = por %p397, %p398
      %p400 = scmp.ne.s32.totalorder %s389, %s392
      %p401 = scmp.eq.s32.totalorder %s38, 1
      %p402 = por %p400, %p401
      %p403 = scmp.ne.s32.totalorder %s392, %s393
      %p404 = scmp.eq.s32.totalorder %s38, 0
      %p405 = por %p403, %p404
      %p406 = scmp.ne.s32.totalorder %s392, %s393
      %p407 = scmp.eq.s32.totalorder %s39, 1
      %p408 = por %p406, %p407
      %p410 = scmp.ne.s32.totalorder %s393, %s409
      %p411 = scmp.eq.s32.totalorder %s39, 0
      %p412 = por %p410, %p411
      %p413 = scmp.le.s32.totalorder 1, %s33
      %p414 = scmp.lt.s32.totalorder %s33, 3
      %p415 = pnand %p413, %p414
      %p416 = pneg %p415
      // Predicated region
      $region9: #{tpu_custom_call.1} parent=5 // pred_check
        _
      $region10: #{tpu_custom_call.1} parent=5 // pred_check_branch
        %418 = sbr.rel (%p415) target = $region12
      $region11: #{tpu_custom_call.1} parent=5 // pred_region
        %s419 = ssub.s32 %s33, 1
        // Predicated region
        $region13: #{tpu_custom_call.1} parent=11 // pred_check
          %p420 = pneg %p106
        $region14: #{tpu_custom_call.1} parent=11 // pred_check_branch
          %422 = sbr.rel (%p420) target = $region16
        $region15: #{tpu_custom_call.1} parent=11 // pred_region
          _
        $region16: #{tpu_custom_call.1} parent=11 // pred_fallthru
          _
        // Predicated region
        $region17: #{tpu_custom_call.1} parent=11 // pred_check
          %p423 = pneg %p127
        $region18: #{tpu_custom_call.1} parent=11 // pred_check_branch
          %425 = sbr.rel (%p423) target = $region20
        $region19: #{tpu_custom_call.1} parent=11 // pred_region
          _
        $region20: #{tpu_custom_call.1} parent=11 // pred_fallthru
          _
        // Predicated region
        $region21: #{tpu_custom_call.1} parent=11 // pred_check
          %p426 = pneg %p148
        $region22: #{tpu_custom_call.1} parent=11 // pred_check_branch
          %428 = sbr.rel (%p426) target = $region24
        $region23: #{tpu_custom_call.1} parent=11 // pred_region
          %s430 = ssub.s32 1024, 1024
          %431 = vsyncadd [#allocation6], %s430
          %s432 = sshll.u32 [#allocation7], 4
          %s433 = int_to_ptr.vmem [resolvable:$true] %s432
          %438 = dma.hbm_to_vmem [thread:$0]  %s4, 1024, %s433, [#allocation6], 64, 64, 4
        $region24: #{tpu_custom_call.1} parent=11 // pred_fallthru
          _
        // Predicated region
        $region25: #{tpu_custom_call.1} parent=11 // pred_check
          %p439 = pneg %p169
        $region26: #{tpu_custom_call.1} parent=11 // pred_check_branch
          %441 = sbr.rel (%p439) target = $region28
        $region27: #{tpu_custom_call.1} parent=11 // pred_region
          _
        $region28: #{tpu_custom_call.1} parent=11 // pred_fallthru
          _
        // Predicated region
        $region29: #{tpu_custom_call.1} parent=11 // pred_check
          %p442 = pneg %p190
        $region30: #{tpu_custom_call.1} parent=11 // pred_check_branch
          %444 = sbr.rel (%p442) target = $region32
        $region31: #{tpu_custom_call.1} parent=11 // pred_region
          %s446 = ssub.s32 2048, 2048
          %447 = vsyncadd [#allocation9], %s446
          %s448 = sshll.u32 [#allocation8], 4
          %s449 = int_to_ptr.vmem [resolvable:$true] %s448
          %454 = dma.hbm_to_vmem [thread:$0]  %s6, 2048, %s449, [#allocation9], 128, 128, 8
        $region32: #{tpu_custom_call.1} parent=11 // pred_fallthru
          _
        // Predicated region
        $region33: #{tpu_custom_call.1} parent=11 // pred_check
          %p455 = pneg %p211
        $region34: #{tpu_custom_call.1} parent=11 // pred_check_branch
          %457 = sbr.rel (%p455) target = $region36
        $region35: #{tpu_custom_call.1} parent=11 // pred_region
          _
        $region36: #{tpu_custom_call.1} parent=11 // pred_fallthru
          _
        // Predicated region
        $region37: #{tpu_custom_call.1} parent=11 // pred_check
          %p458 = pneg %p232
        $region38: #{tpu_custom_call.1} parent=11 // pred_check_branch
          %460 = sbr.rel (%p458) target = $region40
        $region39: #{tpu_custom_call.1} parent=11 // pred_region
          %s462 = ssub.s32 1024, 1024
          %463 = vsyncadd [#allocation9], %s462
          %s464 = sshll.u32 [#allocation10], 4
          %s465 = int_to_ptr.vmem [resolvable:$true] %s464
          %470 = dma.hbm_to_vmem [thread:$0]  %s8, 1024, %s465, [#allocation9], 64, 64, 4
        $region40: #{tpu_custom_call.1} parent=11 // pred_fallthru
          _
        // Predicated region
        $region41: #{tpu_custom_call.1} parent=11 // pred_check
          %p471 = pneg %p253
        $region42: #{tpu_custom_call.1} parent=11 // pred_check_branch
          %473 = sbr.rel (%p471) target = $region44
        $region43: #{tpu_custom_call.1} parent=11 // pred_region
          _
        $region44: #{tpu_custom_call.1} parent=11 // pred_fallthru
          _
        // Predicated region
        $region45: #{tpu_custom_call.1} parent=11 // pred_check
          %p474 = pneg %p274
        $region46: #{tpu_custom_call.1} parent=11 // pred_check_branch
          %476 = sbr.rel (%p474) target = $region48
        $region47: #{tpu_custom_call.1} parent=11 // pred_region
          _
        $region48: #{tpu_custom_call.1} parent=11 // pred_fallthru
          _
        // Predicated region
        $region49: #{tpu_custom_call.1} parent=11 // pred_check
          %p477 = pneg %p295
        $region50: #{tpu_custom_call.1} parent=11 // pred_check_branch
          %479 = sbr.rel (%p477) target = $region52
        $region51: #{tpu_custom_call.1} parent=11 // pred_region
          _
        $region52: #{tpu_custom_call.1} parent=11 // pred_fallthru
          _
        // Predicated region
        $region53: #{tpu_custom_call.1} parent=11 // pred_check
          %p480 = pneg %p316
        $region54: #{tpu_custom_call.1} parent=11 // pred_check_branch
          %482 = sbr.rel (%p480) target = $region56
        $region55: #{tpu_custom_call.1} parent=11 // pred_region
          %s484 = ssub.s32 1024, 1024
          %485 = vsyncadd [#allocation12], %s484
          %s486 = sshll.u32 [#allocation11], 4
          %s487 = int_to_ptr.vmem [resolvable:$true] %s486
          %492 = dma.hbm_to_vmem [thread:$0]  %s12, 1024, %s487, [#allocation12], 64, 64, 4
        $region56: #{tpu_custom_call.1} parent=11 // pred_fallthru
          _
        // Predicated region
        $region57: #{tpu_custom_call.1} parent=11 // pred_check
          %p493 = pneg %p337
        $region58: #{tpu_custom_call.1} parent=11 // pred_check_branch
          %495 = sbr.rel (%p493) target = $region60
        $region59: #{tpu_custom_call.1} parent=11 // pred_region
          _
        $region60: #{tpu_custom_call.1} parent=11 // pred_fallthru
          _
        // Predicated region
        $region61: #{tpu_custom_call.1} parent=11 // pred_check
          %p496 = pneg %p358
        $region62: #{tpu_custom_call.1} parent=11 // pred_check_branch
          %498 = sbr.rel (%p496) target = $region64
        $region63: #{tpu_custom_call.1} parent=11 // pred_region
          %s500 = ssub.s32 1024, 1024
          %501 = vsyncadd [#allocation12], %s500
          %s502 = sshll.u32 [#allocation13], 4
          %s503 = int_to_ptr.vmem [resolvable:$true] %s502
          %508 = dma.hbm_to_vmem [thread:$0]  %s14, 1024, %s503, [#allocation12], 64, 64, 4
        $region64: #{tpu_custom_call.1} parent=11 // pred_fallthru
          _
        // Predicated region
        $region65: #{tpu_custom_call.1} parent=11 // pred_check
          %p509 = pneg %p379
        $region66: #{tpu_custom_call.1} parent=11 // pred_check_branch
          %511 = sbr.rel (%p509) target = $region68
        $region67: #{tpu_custom_call.1} parent=11 // pred_region
          _
        $region68: #{tpu_custom_call.1} parent=11 // pred_fallthru
          _
      $region12: #{tpu_custom_call.1} parent=5 // pred_fallthru
        _
      %p512 = scmp.lt.s32.totalorder %s33, 2
      // Predicated region
      $region69: #{tpu_custom_call.1} parent=5 // pred_check
        %p513 = pneg %p512
      $region70: #{tpu_custom_call.1} parent=5 // pred_check_branch
        %515 = sbr.rel (%p513) target = $region72
      $region71: #{tpu_custom_call.1} parent=5 // pred_region
        // Predicated region
        $region73: #{tpu_custom_call.1} parent=71 // pred_check
          %p516 = pneg %p53
        $region74: #{tpu_custom_call.1} parent=71 // pred_check_branch
          %518 = sbr.rel (%p516) target = $region76
        $region75: #{tpu_custom_call.1} parent=71 // pred_region
          %s519 = sand.u32 %s43, 1
          %s520 = scalar_lea.sflag [#allocation3], %s519
          %s521 = sand.u32 %s43, 1
          %s522 = smul.addr %s521, 8
          %s523 = scalar_lea.vmem [#allocation2], %s522
          %s525 = ssub.s32 128, 128
          %526 = vsyncadd %s520, %s525
          %s527 = smul.addr %s33, 128
          %s528 = scalar_lea.hbm %s0, %s527
          %s530 = sshll.u32 %s523, 4
          %s531 = int_to_ptr.vmem [resolvable:$true] %s530
          %533 = dma.hbm_to_vmem [thread:$0]  %s528, 128, %s531, %s520
        $region76: #{tpu_custom_call.1} parent=71 // pred_fallthru
          _
        // Predicated region
        $region77: #{tpu_custom_call.1} parent=71 // pred_check
          %p534 = pneg %p79
        $region78: #{tpu_custom_call.1} parent=71 // pred_check_branch
          %536 = sbr.rel (%p534) target = $region80
        $region79: #{tpu_custom_call.1} parent=71 // pred_region
          %s537 = sand.u32 %s33, 1
          %s538 = scalar_lea.sflag [#allocation6], %s537
          %s539 = sand.u32 %s69, 1
          %s540 = smul.addr %s539, 16
          %s541 = scalar_lea.vmem [#allocation5], %s540
          %s543 = ssub.s32 256, 256
          %544 = vsyncadd %s538, %s543
          %s545 = smul.addr %s33, 2
          %s546 = smul.addr %s545, 128
          %s547 = scalar_lea.hbm %s1, %s546
          %s548 = sshll.u32 %s541, 4
          %s549 = int_to_ptr.vmem [resolvable:$true] %s548
          %554 = dma.hbm_to_vmem [thread:$0]  %s547, 256, %s549, %s538, 128, 128, 8
        $region80: #{tpu_custom_call.1} parent=71 // pred_fallthru
          _
      $region72: #{tpu_custom_call.1} parent=5 // pred_fallthru
        _
      %p555 = scmp.le.s32.totalorder 1, %s33
      %p556 = scmp.lt.s32.totalorder %s33, 3
      %p557 = pnand %p555, %p556
      %p558 = pneg %p557
      // Predicated region
      $region81: #{tpu_custom_call.1} parent=5 // pred_check
        _
      $region82: #{tpu_custom_call.1} parent=5 // pred_check_branch
        %560 = sbr.rel (%p557) target = $region84
      $region83: #{tpu_custom_call.1} parent=5 // pred_region
        %s561 = ssub.s32 %s33, 1
        %s562 = sand.u32 %s46, 1
        %s563 = scalar_lea.sflag [#allocation3], %s562
        %s564 = sand.u32 %s46, 1
        %s565 = smul.addr %s564, 8
        %s566 = scalar_lea.vmem [#allocation2], %s565
        // Predicated region
        $region85: #{tpu_custom_call.1} parent=83 // pred_check
          %p567 = pneg %p59
        $region86: #{tpu_custom_call.1} parent=83 // pred_check_branch
          %569 = sbr.rel (%p567) target = $region88
        $region87: #{tpu_custom_call.1} parent=83 // pred_region
          %570 = dma.done %s563, 128
        $region88: #{tpu_custom_call.1} parent=83 // pred_fallthru
          _
        %s571 = sand.u32 %s38, 1
        %s572 = scalar_lea.sflag [#allocation6], %s571
        %s573 = sand.u32 %s72, 1
        %s574 = smul.addr %s573, 16
        %s575 = scalar_lea.vmem [#allocation5], %s574
        // Predicated region
        $region89: #{tpu_custom_call.1} parent=83 // pred_check
          %p576 = pneg %p85
        $region90: #{tpu_custom_call.1} parent=83 // pred_check_branch
          %578 = sbr.rel (%p576) target = $region92
        $region91: #{tpu_custom_call.1} parent=83 // pred_region
          %579 = dma.done %s572, 256
        $region92: #{tpu_custom_call.1} parent=83 // pred_fallthru
          _
        // Predicated region
        $region93: #{tpu_custom_call.1} parent=83 // pred_check
          %p580 = pneg %p148
        $region94: #{tpu_custom_call.1} parent=83 // pred_check_branch
          %582 = sbr.rel (%p580) target = $region96
        $region95: #{tpu_custom_call.1} parent=83 // pred_region
          %583 = dma.done [#allocation6], 1024
        $region96: #{tpu_custom_call.1} parent=83 // pred_fallthru
          _
        // Predicated region
        $region97: #{tpu_custom_call.1} parent=83 // pred_check
          %p584 = pneg %p190
        $region98: #{tpu_custom_call.1} parent=83 // pred_check_branch
          %586 = sbr.rel (%p584) target = $region100
        $region99: #{tpu_custom_call.1} parent=83 // pred_region
          %587 = dma.done [#allocation9], 2048
        $region100: #{tpu_custom_call.1} parent=83 // pred_fallthru
          _
        // Predicated region
        $region101: #{tpu_custom_call.1} parent=83 // pred_check
          %p588 = pneg %p232
        $region102: #{tpu_custom_call.1} parent=83 // pred_check_branch
          %590 = sbr.rel (%p588) target = $region104
        $region103: #{tpu_custom_call.1} parent=83 // pred_region
          %591 = dma.done [#allocation9], 1024
        $region104: #{tpu_custom_call.1} parent=83 // pred_fallthru
          _
        // Predicated region
        $region105: #{tpu_custom_call.1} parent=83 // pred_check
          %p592 = pneg %p316
        $region106: #{tpu_custom_call.1} parent=83 // pred_check_branch
          %594 = sbr.rel (%p592) target = $region108
        $region107: #{tpu_custom_call.1} parent=83 // pred_region
          %595 = dma.done [#allocation12], 1024
        $region108: #{tpu_custom_call.1} parent=83 // pred_fallthru
          _
        // Predicated region
        $region109: #{tpu_custom_call.1} parent=83 // pred_check
          %p596 = pneg %p358
        $region110: #{tpu_custom_call.1} parent=83 // pred_check_branch
          %598 = sbr.rel (%p596) target = $region112
        $region111: #{tpu_custom_call.1} parent=83 // pred_region
          %599 = dma.done [#allocation12], 1024
        $region112: #{tpu_custom_call.1} parent=83 // pred_fallthru
          _
        %s600 = sand.u32 %s46, 1
        %s601 = scalar_lea.sflag [#allocation3], %s600
        %s602 = sand.u32 %s46, 1
        %s603 = smul.addr %s602, 8
        %s604 = scalar_lea.vmem [#allocation2], %s603
        %p605 = pneg %p59
        %p606 = pneg %p56
        %s607 = sand.u32 %s38, 1
        %s608 = scalar_lea.sflag [#allocation6], %s607
        %s609 = sand.u32 %s72, 1
        %s610 = smul.addr %s609, 16
        %s611 = scalar_lea.vmem [#allocation5], %s610
        %p612 = pneg %p85
        %p613 = pneg %p82
        %p614 = pneg %p106
        %p615 = pneg %p103
        %p616 = pneg %p127
        %p617 = pneg %p124
        %p618 = pneg %p148
        %p619 = pneg %p145
        %p620 = pneg %p169
        %p621 = pneg %p166
        %p622 = pneg %p190
        %p623 = pneg %p187
        %p624 = pneg %p211
        %p625 = pneg %p208
        %p626 = pneg %p232
        %p627 = pneg %p229
        %p628 = pneg %p253
        %p629 = pneg %p250
        %p630 = pneg %p274
        %p631 = pneg %p271
        %p632 = pneg %p295
        %p633 = pneg %p292
        %p634 = pneg %p316
        %p635 = pneg %p313
        %p636 = pneg %p337
        %p637 = pneg %p334
        %p638 = pneg %p358
        %p639 = pneg %p355
        %p640 = pneg %p379
        %p641 = pneg %p376
        %p642 = pneg %p405
        %p643 = pneg %p402
        %s644 = sand.u32 %s392, 1
        %s645 = scalar_lea.sflag [#allocation4], %s644
        %s646 = sand.u32 %s392, 1
        %s647 = smul.addr %s646, 8
        %s648 = scalar_lea.vmem [#allocation14], %s647
        %v650 = vld [vmem:[%s566] sm:$0xff]
        %v651 = vld [vmem:[%s575] sm:$0xff]
        %v652 = vld [vmem:[%s575 + $0x8] sm:$0xff]
        %v653 = vld [vmem:[%s2] sm:$0x1]
        %v654 = vld [vmem:[%s3] sm:$0x1]
        %655 = vadd.xlane.f32.xlu0 %v650
        %v656 = vpop.xlane.xlu0 %655
        %v657 = vrcp.pop 128.0
        %v658 = vmul.f32 %v656, %v657
        %v659 = vsub.f32 %v650, %v658
        %v660 = vmul.f32 %v659, %v659
        %661 = vadd.xlane.f32.xlu0 %v660
        %v662 = vpop.xlane.xlu0 %661
        %v663 = vmul.f32 %v662, %v657
        %v664 = vadd.f32 %v663, 1e-05
        %v665 = vrsqrt.pop %v664
        %v666 = vmul.f32 %v659, %v665
        %v668 = vlaneseq
        %v669 = vshrl.u32 %v668, 7
        %v670 = vsub.s32 0, %v669
        %v671 = vrot.slane %v653, %v670
        %v673 = vmul.f32 %v666, %v671
        %v675 = vlaneseq
        %v676 = vshrl.u32 %v675, 7
        %v677 = vsub.s32 0, %v676
        %v678 = vrot.slane %v654, %v677
        %v680 = vadd.f32 %v673, %v678
        %v681 = vpack.c.bf16 %v680, %v680
        %v682 = vld [vmem:[#allocation7] sm:$0xf]
        %v683 = vld [vmem:[#allocation7 + $0x4] sm:$0xf]
        %v684 = vld [vmem:[#allocation7 + $0x8] sm:$0xf]
        %v685 = vld [vmem:[#allocation7 + $0xc] sm:$0xf]
        %v686 = vld [vmem:[#allocation7 + $0x10] sm:$0xf]
        %v687 = vld [vmem:[#allocation7 + $0x14] sm:$0xf]
        %v688 = vld [vmem:[#allocation7 + $0x18] sm:$0xf]
        %v689 = vld [vmem:[#allocation7 + $0x1c] sm:$0xf]
        %v690 = vld [vmem:[#allocation7 + $0x20] sm:$0xf]
        %v691 = vld [vmem:[#allocation7 + $0x24] sm:$0xf]
        %v692 = vld [vmem:[#allocation7 + $0x28] sm:$0xf]
        %v693 = vld [vmem:[#allocation7 + $0x2c] sm:$0xf]
        %v694 = vld [vmem:[#allocation7 + $0x30] sm:$0xf]
        %v695 = vld [vmem:[#allocation7 + $0x34] sm:$0xf]
        %v696 = vld [vmem:[#allocation7 + $0x38] sm:$0xf]
        %v697 = vld [vmem:[#allocation7 + $0x3c] sm:$0xf]
        %v698 = vld [vmem:[%s5] sm:$0x1]
        %v700 = vlaneseq
        %v701 = vshrl.u32 %v700, 7
        %v702 = vsub.s32 0, %v701
        %v703 = vrot.slane %v698, %v702
        %v721 = vunpack.c.l.b16 %v682
        %v722 = vunpack.c.l.b16 %v683
        %v723 = vunpack.c.l.b16 %v684
        %v724 = vunpack.c.l.b16 %v685
        %v725 = vunpack.c.l.b16 %v686
        %v726 = vunpack.c.l.b16 %v687
        %v727 = vunpack.c.l.b16 %v688
        %v728 = vunpack.c.l.b16 %v689
        %v729 = vunpack.c.l.b16 %v690
        %v730 = vunpack.c.l.b16 %v691
        %v731 = vunpack.c.l.b16 %v692
        %v732 = vunpack.c.l.b16 %v693
        %v733 = vunpack.c.l.b16 %v694
        %v734 = vunpack.c.l.b16 %v695
        %v735 = vunpack.c.l.b16 %v696
        %v736 = vunpack.c.l.b16 %v697
        %v737 = vpack.c.b16 %v722, %v721
        %v738 = vpack.c.b16 %v724, %v723
        %v739 = vpack.c.b16 %v726, %v725
        %v740 = vpack.c.b16 %v728, %v727
        %v741 = vpack.c.b16 %v730, %v729
        %v742 = vpack.c.b16 %v732, %v731
        %v743 = vpack.c.b16 %v734, %v733
        %v744 = vpack.c.b16 %v736, %v735
        %753 = vmatprep.subr.bf16.mxu0 0
        %754 = vmatpush1.bf16.msra.mxu0 %v737
        %755 = vmatprep.subr.bf16.mxu0 0
        %756 = vmatpush1.bf16.msra.mxu0 %v738
        %757 = vmatprep.subr.bf16.mxu0 0
        %758 = vmatpush1.bf16.msra.mxu0 %v739
        %759 = vmatprep.subr.bf16.mxu0 0
        %760 = vmatpush1.bf16.msra.mxu0 %v740
        %761 = vmatprep.subr.bf16.mxu0 0
        %762 = vmatpush1.bf16.msra.mxu0 %v741
        %763 = vmatprep.subr.bf16.mxu0 0
        %764 = vmatpush1.bf16.msra.mxu0 %v742
        %765 = vmatprep.subr.bf16.mxu0 0
        %766 = vmatpush1.bf16.msra.mxu0 %v743
        %767 = vmatprep.subr.bf16.mxu0 0
        %768 = vmatpush1.bf16.msra.mxu0 %v744
        %769 = vmatprep.subr.bf16.mxu0 0
        %770 = vmatpush1.bf16.msra.mxu0 0
        %771 = vmatprep.subr.bf16.mxu0 0
        %772 = vmatpush1.bf16.msra.mxu0 0
        %773 = vmatprep.subr.bf16.mxu0 0
        %774 = vmatpush1.bf16.msra.mxu0 0
        %775 = vmatprep.subr.bf16.mxu0 0
        %776 = vmatpush1.bf16.msra.mxu0 0
        %777 = vmatprep.subr.bf16.mxu0 0
        %778 = vmatpush1.bf16.msra.mxu0 0
        %779 = vmatprep.subr.bf16.mxu0 0
        %780 = vmatpush1.bf16.msra.mxu0 0
        %781 = vmatprep.subr.bf16.mxu0 0
        %782 = vmatpush1.bf16.msra.mxu0 0
        %783 = vmatprep.subr.bf16.mxu0 0
        %784 = vmatpush1.bf16.msra.mxu0 0
        %785 = vmatprep.mubr.bf16.mxu0 0
        %786 = vmatmul.mubr.bf16.gmra.mrb[0].mxu0 %v681
        %v787 = vpop.f32.mrb[0].mxu0
        %v788 = vadd.f32 %v703, %v787
        %v789 = vpop.f32.mrb[0].mxu0
        %v790 = vpop.f32.mrb[0].mxu0
        %v791 = vpop.f32.mrb[0].mxu0
        %792 = vdwg.mxu0
        %v793 = vmul.f32 %v788, 0.17677669
        %v794 = vpack.c.bf16 %v652, %v651
        %v795 = vld [vmem:[#allocation8] sm:$0xff]
        %v796 = vld [vmem:[#allocation8 + $0x8] sm:$0xff]
        %v797 = vld [vmem:[#allocation8 + $0x10] sm:$0xff]
        %v798 = vld [vmem:[#allocation8 + $0x18] sm:$0xff]
        %v799 = vld [vmem:[#allocation8 + $0x20] sm:$0xff]
        %v800 = vld [vmem:[#allocation8 + $0x28] sm:$0xff]
        %v801 = vld [vmem:[#allocation8 + $0x30] sm:$0xff]
        %v802 = vld [vmem:[#allocation8 + $0x38] sm:$0xff]
        %v803 = vld [vmem:[#allocation8 + $0x40] sm:$0xff]
        %v804 = vld [vmem:[#allocation8 + $0x48] sm:$0xff]
        %v805 = vld [vmem:[#allocation8 + $0x50] sm:$0xff]
        %v806 = vld [vmem:[#allocation8 + $0x58] sm:$0xff]
        %v807 = vld [vmem:[#allocation8 + $0x60] sm:$0xff]
        %v808 = vld [vmem:[#allocation8 + $0x68] sm:$0xff]
        %v809 = vld [vmem:[#allocation8 + $0x70] sm:$0xff]
        %v810 = vld [vmem:[#allocation8 + $0x78] sm:$0xff]
        %v811 = vld [vmem:[%s7] sm:$0x3]
        %v813 = vlaneseq
        %v814 = vshrl.u32 %v813, 7
        %v815 = vsub.s32 0, %v814
        %v816 = vrot.slane %v811, %v815
        %v817 = vlaneseq
        %v818 = vshrl.u32 %v817, 7
        %v819 = vsub.s32 1, %v818
        %v820 = vrot.slane %v811, %v819
        %v839 = vunpack.c.l.b16 %v795
        %v840 = vunpack.c.h.b16 %v795
        %v841 = vunpack.c.l.b16 %v796
        %v842 = vunpack.c.h.b16 %v796
        %v843 = vunpack.c.l.b16 %v797
        %v844 = vunpack.c.h.b16 %v797
        %v845 = vunpack.c.l.b16 %v798
        %v846 = vunpack.c.h.b16 %v798
        %v847 = vunpack.c.l.b16 %v799
        %v848 = vunpack.c.h.b16 %v799
        %v849 = vunpack.c.l.b16 %v800
        %v850 = vunpack.c.h.b16 %v800
        %v851 = vunpack.c.l.b16 %v801
        %v852 = vunpack.c.h.b16 %v801
        %v853 = vunpack.c.l.b16 %v802
        %v854 = vunpack.c.h.b16 %v802
        %v855 = vunpack.c.l.b16 %v803
        %v856 = vunpack.c.h.b16 %v803
        %v857 = vunpack.c.l.b16 %v804
        %v858 = vunpack.c.h.b16 %v804
        %v859 = vunpack.c.l.b16 %v805
        %v860 = vunpack.c.h.b16 %v805
        %v861 = vunpack.c.l.b16 %v806
        %v862 = vunpack.c.h.b16 %v806
        %v863 = vunpack.c.l.b16 %v807
        %v864 = vunpack.c.h.b16 %v807
        %v865 = vunpack.c.l.b16 %v808
        %v866 = vunpack.c.h.b16 %v808
        %v867 = vunpack.c.l.b16 %v809
        %v868 = vunpack.c.h.b16 %v809
        %v869 = vunpack.c.l.b16 %v810
        %v870 = vunpack.c.h.b16 %v810
        %v871 = vpack.c.b16 %v841, %v839
        %v872 = vpack.c.b16 %v842, %v840
        %v873 = vpack.c.b16 %v845, %v843
        %v874 = vpack.c.b16 %v846, %v844
        %v875 = vpack.c.b16 %v849, %v847
        %v876 = vpack.c.b16 %v850, %v848
        %v877 = vpack.c.b16 %v853, %v851
        %v878 = vpack.c.b16 %v854, %v852
        %v879 = vpack.c.b16 %v857, %v855
        %v880 = vpack.c.b16 %v858, %v856
        %v881 = vpack.c.b16 %v861, %v859
        %v882 = vpack.c.b16 %v862, %v860
        %v883 = vpack.c.b16 %v865, %v863
        %v884 = vpack.c.b16 %v866, %v864
        %v885 = vpack.c.b16 %v869, %v867
        %v886 = vpack.c.b16 %v870, %v868
        %903 = vmatprep.subr.bf16.mxu0 %v872
        %904 = vmatpush1.bf16.msra.mxu0 %v871
        %905 = vmatprep.subr.bf16.mxu0 %v874
        %906 = vmatpush1.bf16.msra.mxu0 %v873
        %907 = vmatprep.subr.bf16.mxu0 %v876
        %908 = vmatpush1.bf16.msra.mxu0 %v875
        %909 = vmatprep.subr.bf16.mxu0 %v878
        %910 = vmatpush1.bf16.msra.mxu0 %v877
        %911 = vmatprep.subr.bf16.mxu0 %v880
        %912 = vmatpush1.bf16.msra.mxu0 %v879
        %913 = vmatprep.subr.bf16.mxu0 %v882
        %914 = vmatpush1.bf16.msra.mxu0 %v881
        %915 = vmatprep.subr.bf16.mxu0 %v884
        %916 = vmatpush1.bf16.msra.mxu0 %v883
        %917 = vmatprep.subr.bf16.mxu0 %v886
        %918 = vmatpush1.bf16.msra.mxu0 %v885
        %919 = vmatprep.subr.bf16.mxu0 0
        %920 = vmatpush1.bf16.msra.mxu0 0
        %921 = vmatprep.subr.bf16.mxu0 0
        %922 = vmatpush1.bf16.msra.mxu0 0
        %923 = vmatprep.subr.bf16.mxu0 0
        %924 = vmatpush1.bf16.msra.mxu0 0
        %925 = vmatprep.subr.bf16.mxu0 0
        %926 = vmatpush1.bf16.msra.mxu0 0
        %927 = vmatprep.subr.bf16.mxu0 0
        %928 = vmatpush1.bf16.msra.mxu0 0
        %929 = vmatprep.subr.bf16.mxu0 0
        %930 = vmatpush1.bf16.msra.mxu0 0
        %931 = vmatprep.subr.bf16.mxu0 0
        %932 = vmatpush1.bf16.msra.mxu0 0
        %933 = vmatprep.subr.bf16.mxu0 0
        %934 = vmatpush1.bf16.msra.mxu0 0
        %935 = vmatprep.mubr.bf16.mxu0 0
        %936 = vmatmul.mubr.bf16.gmra.mrb[0].mxu0 %v794
        %v937 = vpop.f32.mrb[0].mxu0
        %v938 = vadd.f32 %v816, %v937
        %v939 = vpop.f32.mrb[0].mxu0
        %v940 = vadd.f32 %v820, %v939
        %v941 = vpop.f32.mrb[0].mxu0
        %v942 = vadd.f32 %v816, %v941
        %v943 = vpop.f32.mrb[0].mxu0
        %v944 = vadd.f32 %v820, %v943
        %945 = vdwg.mxu0
        %v946 = vpack.c.bf16 %v793, %v793
        %v947 = vpack.c.bf16 %v942, %v938
        %v948 = vpack.c.bf16 %v944, %v940
        %vm949 = vcmask 261120
        %v951 = vsel %vm949, %v946, 0
        %v954 = vsel %vm949, %v947, 0
        %956 = vmatprep.subr.bf16.mxu0 0
        %957 = vmatpush1.bf16.xpose.msra.mxu0 %v954
        %958 = vmatprep.subr.bf16.mxu0 0
        %959 = vmatpush1.bf16.xpose.msra.mxu0 0
        %960 = vmatprep.subr.bf16.mxu0 0
        %961 = vmatpush1.bf16.xpose.msra.mxu0 0
        %962 = vmatprep.subr.bf16.mxu0 0
        %963 = vmatpush1.bf16.xpose.msra.mxu0 0
        %964 = vmatprep.subr.bf16.mxu0 0
        %965 = vmatpush1.bf16.xpose.msra.mxu0 0
        %966 = vmatprep.subr.bf16.mxu0 0
        %967 = vmatpush1.bf16.xpose.msra.mxu0 0
        %968 = vmatprep.subr.bf16.mxu0 0
        %969 = vmatpush1.bf16.xpose.msra.mxu0 0
        %970 = vmatprep.subr.bf16.mxu0 0
        %971 = vmatpush1.bf16.xpose.msra.mxu0 0
        %972 = vmatprep.subr.bf16.mxu0 0
        %973 = vmatpush1.bf16.xpose.msra.mxu0 0
        %974 = vmatprep.subr.bf16.mxu0 0
        %975 = vmatpush1.bf16.xpose.msra.mxu0 0
        %976 = vmatprep.subr.bf16.mxu0 0
        %977 = vmatpush1.bf16.xpose.msra.mxu0 0
        %978 = vmatprep.subr.bf16.mxu0 0
        %979 = vmatpush1.bf16.xpose.msra.mxu0 0
        %980 = vmatprep.subr.bf16.mxu0 0
        %981 = vmatpush1.bf16.xpose.msra.mxu0 0
        %982 = vmatprep.subr.bf16.mxu0 0
        %983 = vmatpush1.bf16.xpose.msra.mxu0 0
        %984 = vmatprep.subr.bf16.mxu0 0
        %985 = vmatpush1.bf16.xpose.msra.mxu0 0
        %986 = vmatprep.subr.bf16.mxu0 0
        %987 = vmatpush1.bf16.xpose.msra.mxu0 0
        %988 = vmatprep.mubr.bf16.mxu0 0
        %989 = vmatmul.mubr.bf16.gmra.mrb[0].mxu0 %v951
        %v990 = vpop.f32.mrb[0].mxu0
        %v991 = vadd.f32 0.0, %v990
        %v992 = vpop.f32.mrb[0].mxu0
        %v993 = vpop.f32.mrb[0].mxu0
        %v994 = vpop.f32.mrb[0].mxu0
        %995 = vdwg.mxu0
        %vm996 = vcmask 130048
        %v997 = vsel %vm996, %v991, -inf
        %998 = vmax.xlane.f32.xlu0 %v997
        %v999 = vpop.xlane.xlu0 %998
        %v1000 = vsub.f32 %v991, %v999
        %v1001 = vmul.f32 %v1000, 1.442695
        %v1002 = vpow.pop %v1001
        %v1003 = vsel %vm996, %v1002, 0.0
        %1004 = vadd.xlane.f32.xlu0 %v1003
        %v1005 = vpop.xlane.xlu0 %1004
        %v1006 = vrcp.pop %v1005
        %v1007 = vmul.f32 %v1002, %v1006
        %v1008 = vpack.c.bf16 %v1007, %v1007
        %v1010 = vsel %vm996, %v1008, 0
        %1012 = vmatprep.subr.bf16.mxu0 0
        %1013 = vmatpush1.bf16.msra.mxu0 %v948
        %1014 = vmatprep.subr.bf16.mxu0 0
        %1015 = vmatpush1.bf16.msra.mxu0 0
        %1016 = vmatprep.subr.bf16.mxu0 0
        %1017 = vmatpush1.bf16.msra.mxu0 0
        %1018 = vmatprep.subr.bf16.mxu0 0
        %1019 = vmatpush1.bf16.msra.mxu0 0
        %1020 = vmatprep.subr.bf16.mxu0 0
        %1021 = vmatpush1.bf16.msra.mxu0 0
        %1022 = vmatprep.subr.bf16.mxu0 0
        %1023 = vmatpush1.bf16.msra.mxu0 0
        %1024 = vmatprep.subr.bf16.mxu0 0
        %1025 = vmatpush1.bf16.msra.mxu0 0
        %1026 = vmatprep.subr.bf16.mxu0 0
        %1027 = vmatpush1.bf16.msra.mxu0 0
        %1028 = vmatprep.subr.bf16.mxu0 0
        %1029 = vmatpush1.bf16.msra.mxu0 0
        %1030 = vmatprep.subr.bf16.mxu0 0
        %1031 = vmatpush1.bf16.msra.mxu0 0
        %1032 = vmatprep.subr.bf16.mxu0 0
        %1033 = vmatpush1.bf16.msra.mxu0 0
        %1034 = vmatprep.subr.bf16.mxu0 0
        %1035 = vmatpush1.bf16.msra.mxu0 0
        %1036 = vmatprep.subr.bf16.mxu0 0
        %1037 = vmatpush1.bf16.msra.mxu0 0
        %1038 = vmatprep.subr.bf16.mxu0 0
        %1039 = vmatpush1.bf16.msra.mxu0 0
        %1040 = vmatprep.subr.bf16.mxu0 0
        %1041 = vmatpush1.bf16.msra.mxu0 0
        %1042 = vmatprep.subr.bf16.mxu0 0
        %1043 = vmatpush1.bf16.msra.mxu0 0
        %1044 = vmatprep.mubr.bf16.mxu0 0
        %1045 = vmatmul.mubr.bf16.gmra.mrb[0].mxu0 %v1010
        %v1046 = vpop.f32.mrb[0].mxu0
        %v1047 = vadd.f32 0.0, %v1046
        %v1048 = vpop.f32.mrb[0].mxu0
        %v1049 = vpop.f32.mrb[0].mxu0
        %v1050 = vpop.f32.mrb[0].mxu0
        %1051 = vdwg.mxu0
        %1053 = vrot.lane.b32.xlu0 %v946, 96
        %v1054 = vpop.permute.xlu0 %1053
        %1056 = vrot.lane.b32.xlu0 %v947, 96
        %v1057 = vpop.permute.xlu0 %1056
        %v1059 = vsel %vm949, %v1054, 0
        %v1062 = vsel %vm949, %v1057, 0
        %1064 = vmatprep.subr.bf16.mxu0 0
        %1065 = vmatpush1.bf16.xpose.msra.mxu0 %v1062
        %1066 = vmatprep.subr.bf16.mxu0 0
        %1067 = vmatpush1.bf16.xpose.msra.mxu0 0
        %1068 = vmatprep.subr.bf16.mxu0 0
        %1069 = vmatpush1.bf16.xpose.msra.mxu0 0
        %1070 = vmatprep.subr.bf16.mxu0 0
        %1071 = vmatpush1.bf16.xpose.msra.mxu0 0
        %1072 = vmatprep.subr.bf16.mxu0 0
        %1073 = vmatpush1.bf16.xpose.msra.mxu0 0
        %1074 = vmatprep.subr.bf16.mxu0 0
        %1075 = vmatpush1.bf16.xpose.msra.mxu0 0
        %1076 = vmatprep.subr.bf16.mxu0 0
        %1077 = vmatpush1.bf16.xpose.msra.mxu0 0
        %1078 = vmatprep.subr.bf16.mxu0 0
        %1079 = vmatpush1.bf16.xpose.msra.mxu0 0
        %1080 = vmatprep.subr.bf16.mxu0 0
        %1081 = vmatpush1.bf16.xpose.msra.mxu0 0
        %1082 = vmatprep.subr.bf16.mxu0 0
        %1083 = vmatpush1.bf16.xpose.msra.mxu0 0
        %1084 = vmatprep.subr.bf16.mxu0 0
        %1085 = vmatpush1.bf16.xpose.msra.mxu0 0
        %1086 = vmatprep.subr.bf16.mxu0 0
        %1087 = vmatpush1.bf16.xpose.msra.mxu0 0
        %1088 = vmatprep.subr.bf16.mxu0 0
        %1089 = vmatpush1.bf16.xpose.msra.mxu0 0
        %1090 = vmatprep.subr.bf16.mxu0 0
        %1091 = vmatpush1.bf16.xpose.msra.mxu0 0
        %1092 = vmatprep.subr.bf16.mxu0 0
        %1093 = vmatpush1.bf16.xpose.msra.mxu0 0
        %1094 = vmatprep.subr.bf16.mxu0 0
        %1095 = vmatpush1.bf16.xpose.msra.mxu0 0
        %1096 = vmatprep.mubr.bf16.mxu0 0
        %1097 = vmatmul.mubr.bf16.gmra.mrb[0].mxu0 %v1059
        %v1098 = vpop.f32.mrb[0].mxu0
        %v1099 = vadd.f32 0.0, %v1098
        %v1100 = vpop.f32.mrb[0].mxu0
        %v1101 = vpop.f32.mrb[0].mxu0
        %v1102 = vpop.f32.mrb[0].mxu0
        %1103 = vdwg.mxu0
        %v1104 = vsel %vm996, %v1099, -inf
        %1105 = vmax.xlane.f32.xlu0 %v1104
        %v1106 = vpop.xlane.xlu0 %1105
        %v1107 = vsub.f32 %v1099, %v1106
        %v1108 = vmul.f32 %v1107, 1.442695
        %v1109 = vpow.pop %v1108
        %v1110 = vsel %vm996, %v1109, 0.0
        %1111 = vadd.xlane.f32.xlu0 %v1110
        %v1112 = vpop.xlane.xlu0 %1111
        %v1113 = vrcp.pop %v1112
        %v1114 = vmul.f32 %v1109, %v1113
        %v1115 = vpack.c.bf16 %v1114, %v1114
        %1117 = vrot.lane.b32.xlu0 %v948, 96
        %v1118 = vpop.permute.xlu0 %1117
        %v1121 = vsel %vm996, %v1115, 0
        %1123 = vmatprep.subr.bf16.mxu0 0
        %1124 = vmatpush1.bf16.msra.mxu0 %v1118
        %1125 = vmatprep.subr.bf16.mxu0 0
        %1126 = vmatpush1.bf16.msra.mxu0 0
        %1127 = vmatprep.subr.bf16.mxu0 0
        %1128 = vmatpush1.bf16.msra.mxu0 0
        %1129 = vmatprep.subr.bf16.mxu0 0
        %1130 = vmatpush1.bf16.msra.mxu0 0
        %1131 = vmatprep.subr.bf16.mxu0 0
        %1132 = vmatpush1.bf16.msra.mxu0 0
        %1133 = vmatprep.subr.bf16.mxu0 0
        %1134 = vmatpush1.bf16.msra.mxu0 0
        %1135 = vmatprep.subr.bf16.mxu0 0
        %1136 = vmatpush1.bf16.msra.mxu0 0
        %1137 = vmatprep.subr.bf16.mxu0 0
        %1138 = vmatpush1.bf16.msra.mxu0 0
        %1139 = vmatprep.subr.bf16.mxu0 0
        %1140 = vmatpush1.bf16.msra.mxu0 0
        %1141 = vmatprep.subr.bf16.mxu0 0
        %1142 = vmatpush1.bf16.msra.mxu0 0
        %1143 = vmatprep.subr.bf16.mxu0 0
        %1144 = vmatpush1.bf16.msra.mxu0 0
        %1145 = vmatprep.subr.bf16.mxu0 0
        %1146 = vmatpush1.bf16.msra.mxu0 0
        %1147 = vmatprep.subr.bf16.mxu0 0
        %1148 = vmatpush1.bf16.msra.mxu0 0
        %1149 = vmatprep.subr.bf16.mxu0 0
        %1150 = vmatpush1.bf16.msra.mxu0 0
        %1151 = vmatprep.subr.bf16.mxu0 0
        %1152 = vmatpush1.bf16.msra.mxu0 0
        %1153 = vmatprep.subr.bf16.mxu0 0
        %1154 = vmatpush1.bf16.msra.mxu0 0
        %1155 = vmatprep.mubr.bf16.mxu0 0
        %1156 = vmatmul.mubr.bf16.gmra.mrb[0].mxu0 %v1121
        %v1157 = vpop.f32.mrb[0].mxu0
        %v1158 = vadd.f32 0.0, %v1157
        %v1159 = vpop.f32.mrb[0].mxu0
        %v1160 = vpop.f32.mrb[0].mxu0
        %v1161 = vpop.f32.mrb[0].mxu0
        %1162 = vdwg.mxu0
        %1163 = vrot.lane.b32.xlu0 %v946, 64
        %v1164 = vpop.permute.xlu0 %1163
        %1165 = vrot.lane.b32.xlu0 %v947, 64
        %v1166 = vpop.permute.xlu0 %1165
        %v1168 = vsel %vm949, %v1164, 0
        %v1171 = vsel %vm949, %v1166, 0
        %1173 = vmatprep.subr.bf16.mxu0 0
        %1174 = vmatpush1.bf16.xpose.msra.mxu0 %v1171
        %1175 = vmatprep.subr.bf16.mxu0 0
        %1176 = vmatpush1.bf16.xpose.msra.mxu0 0
        %1177 = vmatprep.subr.bf16.mxu0 0
        %1178 = vmatpush1.bf16.xpose.msra.mxu0 0
        %1179 = vmatprep.subr.bf16.mxu0 0
        %1180 = vmatpush1.bf16.xpose.msra.mxu0 0
        %1181 = vmatprep.subr.bf16.mxu0 0
        %1182 = vmatpush1.bf16.xpose.msra.mxu0 0
        %1183 = vmatprep.subr.bf16.mxu0 0
        %1184 = vmatpush1.bf16.xpose.msra.mxu0 0
        %1185 = vmatprep.subr.bf16.mxu0 0
        %1186 = vmatpush1.bf16.xpose.msra.mxu0 0
        %1187 = vmatprep.subr.bf16.mxu0 0
        %1188 = vmatpush1.bf16.xpose.msra.mxu0 0
        %1189 = vmatprep.subr.bf16.mxu0 0
        %1190 = vmatpush1.bf16.xpose.msra.mxu0 0
        %1191 = vmatprep.subr.bf16.mxu0 0
        %1192 = vmatpush1.bf16.xpose.msra.mxu0 0
        %1193 = vmatprep.subr.bf16.mxu0 0
        %1194 = vmatpush1.bf16.xpose.msra.mxu0 0
        %1195 = vmatprep.subr.bf16.mxu0 0
        %1196 = vmatpush1.bf16.xpose.msra.mxu0 0
        %1197 = vmatprep.subr.bf16.mxu0 0
        %1198 = vmatpush1.bf16.xpose.msra.mxu0 0
        %1199 = vmatprep.subr.bf16.mxu0 0
        %1200 = vmatpush1.bf16.xpose.msra.mxu0 0
        %1201 = vmatprep.subr.bf16.mxu0 0
        %1202 = vmatpush1.bf16.xpose.msra.mxu0 0
        %1203 = vmatprep.subr.bf16.mxu0 0
        %1204 = vmatpush1.bf16.xpose.msra.mxu0 0
        %1205 = vmatprep.mubr.bf16.mxu0 0
        %1206 = vmatmul.mubr.bf16.gmra.mrb[0].mxu0 %v1168
        %v1207 = vpop.f32.mrb[0].mxu0
        %v1208 = vadd.f32 0.0, %v1207
        %v1209 = vpop.f32.mrb[0].mxu0
        %v1210 = vpop.f32.mrb[0].mxu0
        %v1211 = vpop.f32.mrb[0].mxu0
        %1212 = vdwg.mxu0
        %v1213 = vsel %vm996, %v1208, -inf
        %1214 = vmax.xlane.f32.xlu0 %v1213
        %v1215 = vpop.xlane.xlu0 %1214
        %v1216 = vsub.f32 %v1208, %v1215
        %v1217 = vmul.f32 %v1216, 1.442695
        %v1218 = vpow.pop %v1217
        %v1219 = vsel %vm996, %v1218, 0.0
        %1220 = vadd.xlane.f32.xlu0 %v1219
        %v1221 = vpop.xlane.xlu0 %1220
        %v1222 = vrcp.pop %v1221
        %v1223 = vmul.f32 %v1218, %v1222
        %v1224 = vpack.c.bf16 %v1223, %v1223
        %1225 = vrot.lane.b32.xlu0 %v948, 64
        %v1226 = vpop.permute.xlu0 %1225
        %v1229 = vsel %vm996, %v1224, 0
        %1231 = vmatprep.subr.bf16.mxu0 0
        %1232 = vmatpush1.bf16.msra.mxu0 %v1226
        %1233 = vmatprep.subr.bf16.mxu0 0
        %1234 = vmatpush1.bf16.msra.mxu0 0
        %1235 = vmatprep.subr.bf16.mxu0 0
        %1236 = vmatpush1.bf16.msra.mxu0 0
        %1237 = vmatprep.subr.bf16.mxu0 0
        %1238 = vmatpush1.bf16.msra.mxu0 0
        %1239 = vmatprep.subr.bf16.mxu0 0
        %1240 = vmatpush1.bf16.msra.mxu0 0
        %1241 = vmatprep.subr.bf16.mxu0 0
        %1242 = vmatpush1.bf16.msra.mxu0 0
        %1243 = vmatprep.subr.bf16.mxu0 0
        %1244 = vmatpush1.bf16.msra.mxu0 0
        %1245 = vmatprep.subr.bf16.mxu0 0
        %1246 = vmatpush1.bf16.msra.mxu0 0
        %1247 = vmatprep.subr.bf16.mxu0 0
        %1248 = vmatpush1.bf16.msra.mxu0 0
        %1249 = vmatprep.subr.bf16.mxu0 0
        %1250 = vmatpush1.bf16.msra.mxu0 0
        %1251 = vmatprep.subr.bf16.mxu0 0
        %1252 = vmatpush1.bf16.msra.mxu0 0
        %1253 = vmatprep.subr.bf16.mxu0 0
        %1254 = vmatpush1.bf16.msra.mxu0 0
        %1255 = vmatprep.subr.bf16.mxu0 0
        %1256 = vmatpush1.bf16.msra.mxu0 0
        %1257 = vmatprep.subr.bf16.mxu0 0
        %1258 = vmatpush1.bf16.msra.mxu0 0
        %1259 = vmatprep.subr.bf16.mxu0 0
        %1260 = vmatpush1.bf16.msra.mxu0 0
        %1261 = vmatprep.subr.bf16.mxu0 0
        %1262 = vmatpush1.bf16.msra.mxu0 0
        %1263 = vmatprep.mubr.bf16.mxu0 0
        %1264 = vmatmul.mubr.bf16.gmra.mrb[0].mxu0 %v1229
        %v1265 = vpop.f32.mrb[0].mxu0
        %v1266 = vadd.f32 0.0, %v1265
        %v1267 = vpop.f32.mrb[0].mxu0
        %v1268 = vpop.f32.mrb[0].mxu0
        %v1269 = vpop.f32.mrb[0].mxu0
        %1270 = vdwg.mxu0
        %1271 = vrot.lane.b32.xlu0 %v946, 32
        %v1272 = vpop.permute.xlu0 %1271
        %1273 = vrot.lane.b32.xlu0 %v947, 32
        %v1274 = vpop.permute.xlu0 %1273
        %v1276 = vsel %vm949, %v1272, 0
        %v1279 = vsel %vm949, %v1274, 0
        %1281 = vmatprep.subr.bf16.mxu0 0
        %1282 = vmatpush1.bf16.xpose.msra.mxu0 %v1279
        %1283 = vmatprep.subr.bf16.mxu0 0
        %1284 = vmatpush1.bf16.xpose.msra.mxu0 0
        %1285 = vmatprep.subr.bf16.mxu0 0
        %1286 = vmatpush1.bf16.xpose.msra.mxu0 0
        %1287 = vmatprep.subr.bf16.mxu0 0
        %1288 = vmatpush1.bf16.xpose.msra.mxu0 0
        %1289 = vmatprep.subr.bf16.mxu0 0
        %1290 = vmatpush1.bf16.xpose.msra.mxu0 0
        %1291 = vmatprep.subr.bf16.mxu0 0
        %1292 = vmatpush1.bf16.xpose.msra.mxu0 0
        %1293 = vmatprep.subr.bf16.mxu0 0
        %1294 = vmatpush1.bf16.xpose.msra.mxu0 0
        %1295 = vmatprep.subr.bf16.mxu0 0
        %1296 = vmatpush1.bf16.xpose.msra.mxu0 0
        %1297 = vmatprep.subr.bf16.mxu0 0
        %1298 = vmatpush1.bf16.xpose.msra.mxu0 0
        %1299 = vmatprep.subr.bf16.mxu0 0
        %1300 = vmatpush1.bf16.xpose.msra.mxu0 0
        %1301 = vmatprep.subr.bf16.mxu0 0
        %1302 = vmatpush1.bf16.xpose.msra.mxu0 0
        %1303 = vmatprep.subr.bf16.mxu0 0
        %1304 = vmatpush1.bf16.xpose.msra.mxu0 0
        %1305 = vmatprep.subr.bf16.mxu0 0
        %1306 = vmatpush1.bf16.xpose.msra.mxu0 0
        %1307 = vmatprep.subr.bf16.mxu0 0
        %1308 = vmatpush1.bf16.xpose.msra.mxu0 0
        %1309 = vmatprep.subr.bf16.mxu0 0
        %1310 = vmatpush1.bf16.xpose.msra.mxu0 0
        %1311 = vmatprep.subr.bf16.mxu0 0
        %1312 = vmatpush1.bf16.xpose.msra.mxu0 0
        %1313 = vmatprep.mubr.bf16.mxu0 0
        %1314 = vmatmul.mubr.bf16.gmra.mrb[0].mxu0 %v1276
        %v1315 = vpop.f32.mrb[0].mxu0
        %v1316 = vadd.f32 0.0, %v1315
        %v1317 = vpop.f32.mrb[0].mxu0
        %v1318 = vpop.f32.mrb[0].mxu0
        %v1319 = vpop.f32.mrb[0].mxu0
        %1320 = vdwg.mxu0
        %v1321 = vsel %vm996, %v1316, -inf
        %1322 = vmax.xlane.f32.xlu0 %v1321
        %v1323 = vpop.xlane.xlu0 %1322
        %v1324 = vsub.f32 %v1316, %v1323
        %v1325 = vmul.f32 %v1324, 1.442695
        %v1326 = vpow.pop %v1325
        %v1327 = vsel %vm996, %v1326, 0.0
        %1328 = vadd.xlane.f32.xlu0 %v1327
        %v1329 = vpop.xlane.xlu0 %1328
        %v1330 = vrcp.pop %v1329
        %v1331 = vmul.f32 %v1326, %v1330
        %v1332 = vpack.c.bf16 %v1331, %v1331
        %1333 = vrot.lane.b32.xlu0 %v948, 32
        %v1334 = vpop.permute.xlu0 %1333
        %v1337 = vsel %vm996, %v1332, 0
        %1339 = vmatprep.subr.bf16.mxu0 0
        %1340 = vmatpush1.bf16.msra.mxu0 %v1334
        %1341 = vmatprep.subr.bf16.mxu0 0
        %1342 = vmatpush1.bf16.msra.mxu0 0
        %1343 = vmatprep.subr.bf16.mxu0 0
        %1344 = vmatpush1.bf16.msra.mxu0 0
        %1345 = vmatprep.subr.bf16.mxu0 0
        %1346 = vmatpush1.bf16.msra.mxu0 0
        %1347 = vmatprep.subr.bf16.mxu0 0
        %1348 = vmatpush1.bf16.msra.mxu0 0
        %1349 = vmatprep.subr.bf16.mxu0 0
        %1350 = vmatpush1.bf16.msra.mxu0 0
        %1351 = vmatprep.subr.bf16.mxu0 0
        %1352 = vmatpush1.bf16.msra.mxu0 0
        %1353 = vmatprep.subr.bf16.mxu0 0
        %1354 = vmatpush1.bf16.msra.mxu0 0
        %1355 = vmatprep.subr.bf16.mxu0 0
        %1356 = vmatpush1.bf16.msra.mxu0 0
        %1357 = vmatprep.subr.bf16.mxu0 0
        %1358 = vmatpush1.bf16.msra.mxu0 0
        %1359 = vmatprep.subr.bf16.mxu0 0
        %1360 = vmatpush1.bf16.msra.mxu0 0
        %1361 = vmatprep.subr.bf16.mxu0 0
        %1362 = vmatpush1.bf16.msra.mxu0 0
        %1363 = vmatprep.subr.bf16.mxu0 0
        %1364 = vmatpush1.bf16.msra.mxu0 0
        %1365 = vmatprep.subr.bf16.mxu0 0
        %1366 = vmatpush1.bf16.msra.mxu0 0
        %1367 = vmatprep.subr.bf16.mxu0 0
        %1368 = vmatpush1.bf16.msra.mxu0 0
        %1369 = vmatprep.subr.bf16.mxu0 0
        %1370 = vmatpush1.bf16.msra.mxu0 0
        %1371 = vmatprep.mubr.bf16.mxu0 0
        %1372 = vmatmul.mubr.bf16.gmra.mrb[0].mxu0 %v1337
        %v1373 = vpop.f32.mrb[0].mxu0
        %v1374 = vadd.f32 0.0, %v1373
        %v1375 = vpop.f32.mrb[0].mxu0
        %v1376 = vpop.f32.mrb[0].mxu0
        %v1377 = vpop.f32.mrb[0].mxu0
        %1378 = vdwg.mxu0
        %1380 = vrot.lane.b32.xlu0 %v1158, 32
        %v1381 = vpop.permute.xlu0 %1380
        %1384 = vrot.lane.b32.xlu0 %v1266, 64
        %v1385 = vpop.permute.xlu0 %1384
        %1388 = vrot.lane.b32.xlu0 %v1374, 96
        %v1389 = vpop.permute.xlu0 %1388
        %v1391 = vsel %vm949, %v1047, %v1381
        %vm1392 = vcmask 523264
        %v1393 = vsel %vm1392, %v1391, %v1385
        %vm1394 = vcmask 785408
        %v1395 = vsel %vm1394, %v1393, %v1389
        %v1396 = vpack.c.bf16 %v1395, %v1395
        %v1397 = vld [vmem:[#allocation10] sm:$0xf]
        %v1398 = vld [vmem:[#allocation10 + $0x4] sm:$0xf]
        %v1399 = vld [vmem:[#allocation10 + $0x8] sm:$0xf]
        %v1400 = vld [vmem:[#allocation10 + $0xc] sm:$0xf]
        %v1401 = vld [vmem:[#allocation10 + $0x10] sm:$0xf]
        %v1402 = vld [vmem:[#allocation10 + $0x14] sm:$0xf]
        %v1403 = vld [vmem:[#allocation10 + $0x18] sm:$0xf]
        %v1404 = vld [vmem:[#allocation10 + $0x1c] sm:$0xf]
        %v1405 = vld [vmem:[#allocation10 + $0x20] sm:$0xf]
        %v1406 = vld [vmem:[#allocation10 + $0x24] sm:$0xf]
        %v1407 = vld [vmem:[#allocation10 + $0x28] sm:$0xf]
        %v1408 = vld [vmem:[#allocation10 + $0x2c] sm:$0xf]
        %v1409 = vld [vmem:[#allocation10 + $0x30] sm:$0xf]
        %v1410 = vld [vmem:[#allocation10 + $0x34] sm:$0xf]
        %v1411 = vld [vmem:[#allocation10 + $0x38] sm:$0xf]
        %v1412 = vld [vmem:[#allocation10 + $0x3c] sm:$0xf]
        %v1413 = vld [vmem:[%s9] sm:$0x1]
        %v1415 = vlaneseq
        %v1416 = vshrl.u32 %v1415, 7
        %v1417 = vsub.s32 0, %v1416
        %v1418 = vrot.slane %v1413, %v1417
        %v1436 = vunpack.c.l.b16 %v1397
        %v1437 = vunpack.c.l.b16 %v1398
        %v1438 = vunpack.c.l.b16 %v1399
        %v1439 = vunpack.c.l.b16 %v1400
        %v1440 = vunpack.c.l.b16 %v1401
        %v1441 = vunpack.c.l.b16 %v1402
        %v1442 = vunpack.c.l.b16 %v1403
        %v1443 = vunpack.c.l.b16 %v1404
        %v1444 = vunpack.c.l.b16 %v1405
        %v1445 = vunpack.c.l.b16 %v1406
        %v1446 = vunpack.c.l.b16 %v1407
        %v1447 = vunpack.c.l.b16 %v1408
        %v1448 = vunpack.c.l.b16 %v1409
        %v1449 = vunpack.c.l.b16 %v1410
        %v1450 = vunpack.c.l.b16 %v1411
        %v1451 = vunpack.c.l.b16 %v1412
        %v1452 = vpack.c.b16 %v1437, %v1436
        %v1453 = vpack.c.b16 %v1439, %v1438
        %v1454 = vpack.c.b16 %v1441, %v1440
        %v1455 = vpack.c.b16 %v1443, %v1442
        %v1456 = vpack.c.b16 %v1445, %v1444
        %v1457 = vpack.c.b16 %v1447, %v1446
        %v1458 = vpack.c.b16 %v1449, %v1448
        %v1459 = vpack.c.b16 %v1451, %v1450
        %1468 = vmatprep.subr.bf16.mxu0 0
        %1469 = vmatpush1.bf16.msra.mxu0 %v1452
        %1470 = vmatprep.subr.bf16.mxu0 0
        %1471 = vmatpush1.bf16.msra.mxu0 %v1453
        %1472 = vmatprep.subr.bf16.mxu0 0
        %1473 = vmatpush1.bf16.msra.mxu0 %v1454
        %1474 = vmatprep.subr.bf16.mxu0 0
        %1475 = vmatpush1.bf16.msra.mxu0 %v1455
        %1476 = vmatprep.subr.bf16.mxu0 0
        %1477 = vmatpush1.bf16.msra.mxu0 %v1456
        %1478 = vmatprep.subr.bf16.mxu0 0
        %1479 = vmatpush1.bf16.msra.mxu0 %v1457
        %1480 = vmatprep.subr.bf16.mxu0 0
        %1481 = vmatpush1.bf16.msra.mxu0 %v1458
        %1482 = vmatprep.subr.bf16.mxu0 0
        %1483 = vmatpush1.bf16.msra.mxu0 %v1459
        %1484 = vmatprep.subr.bf16.mxu0 0
        %1485 = vmatpush1.bf16.msra.mxu0 0
        %1486 = vmatprep.subr.bf16.mxu0 0
        %1487 = vmatpush1.bf16.msra.mxu0 0
        %1488 = vmatprep.subr.bf16.mxu0 0
        %1489 = vmatpush1.bf16.msra.mxu0 0
        %1490 = vmatprep.subr.bf16.mxu0 0
        %1491 = vmatpush1.bf16.msra.mxu0 0
        %1492 = vmatprep.subr.bf16.mxu0 0
        %1493 = vmatpush1.bf16.msra.mxu0 0
        %1494 = vmatprep.subr.bf16.mxu0 0
        %1495 = vmatpush1.bf16.msra.mxu0 0
        %1496 = vmatprep.subr.bf16.mxu0 0
        %1497 = vmatpush1.bf16.msra.mxu0 0
        %1498 = vmatprep.subr.bf16.mxu0 0
        %1499 = vmatpush1.bf16.msra.mxu0 0
        %1500 = vmatprep.mubr.bf16.mxu0 0
        %1501 = vmatmul.mubr.bf16.gmra.mrb[0].mxu0 %v1396
        %v1502 = vpop.f32.mrb[0].mxu0
        %v1503 = vadd.f32 %v1418, %v1502
        %v1504 = vpop.f32.mrb[0].mxu0
        %v1505 = vpop.f32.mrb[0].mxu0
        %v1506 = vpop.f32.mrb[0].mxu0
        %1507 = vdwg.mxu0
        %v1508 = vadd.f32 %v650, %v1503
        %v1509 = vld [vmem:[%s10] sm:$0x1]
        %v1510 = vld [vmem:[%s11] sm:$0x1]
        %1511 = vadd.xlane.f32.xlu0 %v1508
        %v1512 = vpop.xlane.xlu0 %1511
        %v1513 = vmul.f32 %v1512, %v657
        %v1514 = vsub.f32 %v1508, %v1513
        %v1515 = vmul.f32 %v1514, %v1514
        %1516 = vadd.xlane.f32.xlu0 %v1515
        %v1517 = vpop.xlane.xlu0 %1516
        %v1518 = vmul.f32 %v1517, %v657
        %v1519 = vadd.f32 %v1518, 1e-05
        %v1520 = vrsqrt.pop %v1519
        %v1521 = vmul.f32 %v1514, %v1520
        %v1523 = vlaneseq
        %v1524 = vshrl.u32 %v1523, 7
        %v1525 = vsub.s32 0, %v1524
        %v1526 = vrot.slane %v1509, %v1525
        %v1528 = vmul.f32 %v1521, %v1526
        %v1530 = vlaneseq
        %v1531 = vshrl.u32 %v1530, 7
        %v1532 = vsub.s32 0, %v1531
        %v1533 = vrot.slane %v1510, %v1532
        %v1535 = vadd.f32 %v1528, %v1533
        %v1536 = vpack.c.bf16 %v1535, %v1535
        %v1537 = vld [vmem:[#allocation11] sm:$0xf]
        %v1538 = vld [vmem:[#allocation11 + $0x4] sm:$0xf]
        %v1539 = vld [vmem:[#allocation11 + $0x8] sm:$0xf]
        %v1540 = vld [vmem:[#allocation11 + $0xc] sm:$0xf]
        %v1541 = vld [vmem:[#allocation11 + $0x10] sm:$0xf]
        %v1542 = vld [vmem:[#allocation11 + $0x14] sm:$0xf]
        %v1543 = vld [vmem:[#allocation11 + $0x18] sm:$0xf]
        %v1544 = vld [vmem:[#allocation11 + $0x1c] sm:$0xf]
        %v1545 = vld [vmem:[#allocation11 + $0x20] sm:$0xf]
        %v1546 = vld [vmem:[#allocation11 + $0x24] sm:$0xf]
        %v1547 = vld [vmem:[#allocation11 + $0x28] sm:$0xf]
        %v1548 = vld [vmem:[#allocation11 + $0x2c] sm:$0xf]
        %v1549 = vld [vmem:[#allocation11 + $0x30] sm:$0xf]
        %v1550 = vld [vmem:[#allocation11 + $0x34] sm:$0xf]
        %v1551 = vld [vmem:[#allocation11 + $0x38] sm:$0xf]
        %v1552 = vld [vmem:[#allocation11 + $0x3c] sm:$0xf]
        %v1553 = vld [vmem:[%s13] sm:$0x1]
        %v1555 = vlaneseq
        %v1556 = vshrl.u32 %v1555, 7
        %v1557 = vsub.s32 0, %v1556
        %v1558 = vrot.slane %v1553, %v1557
        %v1576 = vunpack.c.l.b16 %v1537
        %v1577 = vunpack.c.l.b16 %v1538
        %v1578 = vunpack.c.l.b16 %v1539
        %v1579 = vunpack.c.l.b16 %v1540
        %v1580 = vunpack.c.l.b16 %v1541
        %v1581 = vunpack.c.l.b16 %v1542
        %v1582 = vunpack.c.l.b16 %v1543
        %v1583 = vunpack.c.l.b16 %v1544
        %v1584 = vunpack.c.l.b16 %v1545
        %v1585 = vunpack.c.l.b16 %v1546
        %v1586 = vunpack.c.l.b16 %v1547
        %v1587 = vunpack.c.l.b16 %v1548
        %v1588 = vunpack.c.l.b16 %v1549
        %v1589 = vunpack.c.l.b16 %v1550
        %v1590 = vunpack.c.l.b16 %v1551
        %v1591 = vunpack.c.l.b16 %v1552
        %v1592 = vpack.c.b16 %v1577, %v1576
        %v1593 = vpack.c.b16 %v1579, %v1578
        %v1594 = vpack.c.b16 %v1581, %v1580
        %v1595 = vpack.c.b16 %v1583, %v1582
        %v1596 = vpack.c.b16 %v1585, %v1584
        %v1597 = vpack.c.b16 %v1587, %v1586
        %v1598 = vpack.c.b16 %v1589, %v1588
        %v1599 = vpack.c.b16 %v1591, %v1590
        %1608 = vmatprep.subr.bf16.mxu0 0
        %1609 = vmatpush1.bf16.msra.mxu0 %v1592
        %1610 = vmatprep.subr.bf16.mxu0 0
        %1611 = vmatpush1.bf16.msra.mxu0 %v1593
        %1612 = vmatprep.subr.bf16.mxu0 0
        %1613 = vmatpush1.bf16.msra.mxu0 %v1594
        %1614 = vmatprep.subr.bf16.mxu0 0
        %1615 = vmatpush1.bf16.msra.mxu0 %v1595
        %1616 = vmatprep.subr.bf16.mxu0 0
        %1617 = vmatpush1.bf16.msra.mxu0 %v1596
        %1618 = vmatprep.subr.bf16.mxu0 0
        %1619 = vmatpush1.bf16.msra.mxu0 %v1597
        %1620 = vmatprep.subr.bf16.mxu0 0
        %1621 = vmatpush1.bf16.msra.mxu0 %v1598
        %1622 = vmatprep.subr.bf16.mxu0 0
        %1623 = vmatpush1.bf16.msra.mxu0 %v1599
        %1624 = vmatprep.subr.bf16.mxu0 0
        %1625 = vmatpush1.bf16.msra.mxu0 0
        %1626 = vmatprep.subr.bf16.mxu0 0
        %1627 = vmatpush1.bf16.msra.mxu0 0
        %1628 = vmatprep.subr.bf16.mxu0 0
        %1629 = vmatpush1.bf16.msra.mxu0 0
        %1630 = vmatprep.subr.bf16.mxu0 0
        %1631 = vmatpush1.bf16.msra.mxu0 0
        %1632 = vmatprep.subr.bf16.mxu0 0
        %1633 = vmatpush1.bf16.msra.mxu0 0
        %1634 = vmatprep.subr.bf16.mxu0 0
        %1635 = vmatpush1.bf16.msra.mxu0 0
        %1636 = vmatprep.subr.bf16.mxu0 0
        %1637 = vmatpush1.bf16.msra.mxu0 0
        %1638 = vmatprep.subr.bf16.mxu0 0
        %1639 = vmatpush1.bf16.msra.mxu0 0
        %1640 = vmatprep.mubr.bf16.mxu0 0
        %1641 = vmatmul.mubr.bf16.gmra.mrb[0].mxu0 %v1536
        %v1642 = vpop.f32.mrb[0].mxu0
        %v1643 = vadd.f32 %v1558, %v1642
        %v1644 = vpop.f32.mrb[0].mxu0
        %v1645 = vpop.f32.mrb[0].mxu0
        %v1646 = vpop.f32.mrb[0].mxu0
        %1647 = vdwg.mxu0
        %v1648 = vmax.f32 %v1643, 0.0
        %v1649 = vpack.c.bf16 %v1648, %v1648
        %v1650 = vld [vmem:[#allocation13] sm:$0xf]
        %v1651 = vld [vmem:[#allocation13 + $0x4] sm:$0xf]
        %v1652 = vld [vmem:[#allocation13 + $0x8] sm:$0xf]
        %v1653 = vld [vmem:[#allocation13 + $0xc] sm:$0xf]
        %v1654 = vld [vmem:[#allocation13 + $0x10] sm:$0xf]
        %v1655 = vld [vmem:[#allocation13 + $0x14] sm:$0xf]
        %v1656 = vld [vmem:[#allocation13 + $0x18] sm:$0xf]
        %v1657 = vld [vmem:[#allocation13 + $0x1c] sm:$0xf]
        %v1658 = vld [vmem:[#allocation13 + $0x20] sm:$0xf]
        %v1659 = vld [vmem:[#allocation13 + $0x24] sm:$0xf]
        %v1660 = vld [vmem:[#allocation13 + $0x28] sm:$0xf]
        %v1661 = vld [vmem:[#allocation13 + $0x2c] sm:$0xf]
        %v1662 = vld [vmem:[#allocation13 + $0x30] sm:$0xf]
        %v1663 = vld [vmem:[#allocation13 + $0x34] sm:$0xf]
        %v1664 = vld [vmem:[#allocation13 + $0x38] sm:$0xf]
        %v1665 = vld [vmem:[#allocation13 + $0x3c] sm:$0xf]
        %v1666 = vld [vmem:[%s15] sm:$0x1]
        %v1668 = vlaneseq
        %v1669 = vshrl.u32 %v1668, 7
        %v1670 = vsub.s32 0, %v1669
        %v1671 = vrot.slane %v1666, %v1670
        %v1689 = vunpack.c.l.b16 %v1650
        %v1690 = vunpack.c.l.b16 %v1651
        %v1691 = vunpack.c.l.b16 %v1652
        %v1692 = vunpack.c.l.b16 %v1653
        %v1693 = vunpack.c.l.b16 %v1654
        %v1694 = vunpack.c.l.b16 %v1655
        %v1695 = vunpack.c.l.b16 %v1656
        %v1696 = vunpack.c.l.b16 %v1657
        %v1697 = vunpack.c.l.b16 %v1658
        %v1698 = vunpack.c.l.b16 %v1659
        %v1699 = vunpack.c.l.b16 %v1660
        %v1700 = vunpack.c.l.b16 %v1661
        %v1701 = vunpack.c.l.b16 %v1662
        %v1702 = vunpack.c.l.b16 %v1663
        %v1703 = vunpack.c.l.b16 %v1664
        %v1704 = vunpack.c.l.b16 %v1665
        %v1705 = vpack.c.b16 %v1690, %v1689
        %v1706 = vpack.c.b16 %v1692, %v1691
        %v1707 = vpack.c.b16 %v1694, %v1693
        %v1708 = vpack.c.b16 %v1696, %v1695
        %v1709 = vpack.c.b16 %v1698, %v1697
        %v1710 = vpack.c.b16 %v1700, %v1699
        %v1711 = vpack.c.b16 %v1702, %v1701
        %v1712 = vpack.c.b16 %v1704, %v1703
        %1721 = vmatprep.subr.bf16.mxu0 0
        %1722 = vmatpush1.bf16.msra.mxu0 %v1705
        %1723 = vmatprep.subr.bf16.mxu0 0
        %1724 = vmatpush1.bf16.msra.mxu0 %v1706
        %1725 = vmatprep.subr.bf16.mxu0 0
        %1726 = vmatpush1.bf16.msra.mxu0 %v1707
        %1727 = vmatprep.subr.bf16.mxu0 0
        %1728 = vmatpush1.bf16.msra.mxu0 %v1708
        %1729 = vmatprep.subr.bf16.mxu0 0
        %1730 = vmatpush1.bf16.msra.mxu0 %v1709
        %1731 = vmatprep.subr.bf16.mxu0 0
        %1732 = vmatpush1.bf16.msra.mxu0 %v1710
        %1733 = vmatprep.subr.bf16.mxu0 0
        %1734 = vmatpush1.bf16.msra.mxu0 %v1711
        %1735 = vmatprep.subr.bf16.mxu0 0
        %1736 = vmatpush1.bf16.msra.mxu0 %v1712
        %1737 = vmatprep.subr.bf16.mxu0 0
        %1738 = vmatpush1.bf16.msra.mxu0 0
        %1739 = vmatprep.subr.bf16.mxu0 0
        %1740 = vmatpush1.bf16.msra.mxu0 0
        %1741 = vmatprep.subr.bf16.mxu0 0
        %1742 = vmatpush1.bf16.msra.mxu0 0
        %1743 = vmatprep.subr.bf16.mxu0 0
        %1744 = vmatpush1.bf16.msra.mxu0 0
        %1745 = vmatprep.subr.bf16.mxu0 0
        %1746 = vmatpush1.bf16.msra.mxu0 0
        %1747 = vmatprep.subr.bf16.mxu0 0
        %1748 = vmatpush1.bf16.msra.mxu0 0
        %1749 = vmatprep.subr.bf16.mxu0 0
        %1750 = vmatpush1.bf16.msra.mxu0 0
        %1751 = vmatprep.subr.bf16.mxu0 0
        %1752 = vmatpush1.bf16.msra.mxu0 0
        %1753 = vmatprep.mubr.bf16.mxu0 0
        %1754 = vmatmul.mubr.bf16.gmra.mrb[0].mxu0 %v1649
        %v1755 = vpop.f32.mrb[0].mxu0
        %v1756 = vadd.f32 %v1671, %v1755
        %v1757 = vpop.f32.mrb[0].mxu0
        %v1758 = vpop.f32.mrb[0].mxu0
        %v1759 = vpop.f32.mrb[0].mxu0
        %1760 = vdwg.mxu0
        %v1761 = vadd.f32 %v1508, %v1756
        %1762 = vst [vmem:[%s648] sm:$0xff] %v1761
        %s1763 = sand.u32 %s392, 1
        %s1764 = scalar_lea.sflag [#allocation4], %s1763
        %s1765 = sand.u32 %s392, 1
        %s1766 = smul.addr %s1765, 8
        %s1767 = scalar_lea.vmem [#allocation14], %s1766
        // Predicated region
        $region113: #{tpu_custom_call.1} parent=83 // pred_check
          %p1768 = pneg %p402
        $region114: #{tpu_custom_call.1} parent=83 // pred_check_branch
          %1770 = sbr.rel (%p1768) target = $region116
        $region115: #{tpu_custom_call.1} parent=83 // pred_region
          %s1772 = ssub.s32 128, 128
          %1773 = vsyncadd %s1764, %s1772
          %s1774 = smul.addr %s38, 128
          %s1775 = scalar_lea.hbm %s16, %s1774
          %s1777 = sshll.u32 %s1767, 4
          %s1778 = int_to_ptr.vmem [resolvable:$true] %s1777
          %1780 = dma.vmem_to_hbm [thread:$0]  %s1778, 128, %s1775, %s1764
        $region116: #{tpu_custom_call.1} parent=83 // pred_fallthru
          _
      $region84: #{tpu_custom_call.1} parent=5 // pred_fallthru
        _
      %p1781 = scmp.le.s32.totalorder 2, %s33
      // Predicated region
      $region117: #{tpu_custom_call.1} parent=5 // pred_check
        %p1782 = pneg %p1781
      $region118: #{tpu_custom_call.1} parent=5 // pred_check_branch
        %1784 = sbr.rel (%p1782) target = $region120
      $region119: #{tpu_custom_call.1} parent=5 // pred_region
        %s1785 = ssub.s32 %s33, 2
        // Predicated region
        $region121: #{tpu_custom_call.1} parent=119 // pred_check
          %p1786 = pneg %p408
        $region122: #{tpu_custom_call.1} parent=119 // pred_check_branch
          %1788 = sbr.rel (%p1786) target = $region124
        $region123: #{tpu_custom_call.1} parent=119 // pred_region
          %s1789 = sand.u32 %s393, 1
          %s1790 = scalar_lea.sflag [#allocation4], %s1789
          %s1791 = sand.u32 %s393, 1
          %s1792 = smul.addr %s1791, 8
          %s1793 = scalar_lea.vmem [#allocation14], %s1792
          %1794 = dma.done %s1790, 128
        $region124: #{tpu_custom_call.1} parent=119 // pred_fallthru
          _
      $region120: #{tpu_custom_call.1} parent=5 // pred_fallthru
        _
    $region6: #{tpu_custom_call.1} parent=1 // loop_footer
      %s37 = sadd.s32 1, %s33
    $region7: #{tpu_custom_call.1} parent=1 // loop_footer_branch
      %32 = sbr.rel target = $region3
    $region8: #{tpu_custom_call.1} parent=1 // loop_exit
      _
    %1795 = vsyncpa [#allocation3], 1
    %s1796 = scalar_lea.sflag [#allocation3], 1
    %1797 = vsyncpa %s1796, 1
    %1798 = vsyncpa [#allocation6], 1
    %s1799 = scalar_lea.sflag [#allocation6], 1
    %1800 = vsyncpa %s1799, 1
    %1801 = vsyncpa [#allocation9], 1
    %1802 = vsyncpa [#allocation12], 1
    %1803 = vsyncpa [#allocation4], 1
    %s1804 = scalar_lea.sflag [#allocation4], 1
    %1805 = vsyncpa %s1804, 1

</llo_original>
